<compile_context>
chip_gen: v6e
topology: v6e:2x2x1
jax: 0.10.0
libtpu: 0.0.40
codegen_flags: <defaults>
</compile_context>

<pallas_src>
import numpy as np
import jax
import jax.numpy as jnp
from jax.experimental import pallas as pl
from jax.experimental.pallas import tpu as pltpu

# ------------- config (mirrors cfg.mlp / cfg.pose_encoder defaults) ----------
N_FREQS        = 6            # hann-windowed positional encoding bands
D_HIDDEN       = 128          # cfg.mlp.d_hidden
DIM_IN         = 3
DIM_COND       = 64           # HierarchicalPoseEncoder.n_output_dims
DIM_OUT        = 3 + 3 + 4    # delta_xyz, delta_scale, delta_rot
KICK_IN_ITER   = 1000         # cfg.mlp.embedder.kick_in_iter
FULL_BAND_ITER = 5000         # cfg.mlp.embedder.full_band_iter
DELAY          = 0            # cfg.get('delay', 0)
N_JOINTS       = 24
D_EMB          = DIM_IN + 2 * DIM_IN * N_FREQS   # 39 (include_input + sin/cos bands)

K_IN     = 8          # xyz_norm padded to 8 lanes (lane 3 carries the constant 1.0)
K_PAD    = 128        # embedding width padded to a full lane set
OUT_PAD  = 16         # narrow output slab: 10 real outputs, 16 lanes in HBM
MAX_TILE = 2048       # upper bound on points per grid step
MIN_TILE = 256        # lower bound (keeps grid >= 2 at small N for v7x megacore)


# ------------------------------ glue helpers ---------------------------------
def hann_window(iteration):
    """Hann-window annealing weights (iteration must be a static Python int)."""
    alpha = N_FREQS * max(iteration - KICK_IN_ITER, 0) / max(FULL_BAND_ITER - KICK_IN_ITER, 1)
    j = np.arange(N_FREQS, dtype=np.float32)
    return (0.5 * (1.0 - np.cos(np.pi * np.clip(alpha - j, 0.0, 1.0)))).astype(np.float32)


def _embedding_constants(iteration):
    """Host-side constants so the in-kernel embedding is
         z    = xyz_norm_padded @ A           (offsets folded into A via the constant-1 lane)
         feat = where(trig_mask, sin(z), z)   (hann weights folded into W1 rows via `hw`)
       with column ordering identical to the reference embed_xyz()."""
    w = hann_window(iteration)
    A         = np.zeros((K_IN, K_PAD), np.float32)
    trig_mask = np.zeros((K_PAD,), np.float32)
    hw        = np.zeros((K_PAD,), np.float32)   # per-column scale folded into W1 rows
    for c in range(DIM_IN):                      # raw xyz passthrough columns
        A[c, c] = 1.0
        hw[c] = 1.0
    for c in range(DIM_IN):                      # sin/cos band columns
        for l in range(N_FREQS):
            for t in range(2):                   # t=0: sin, t=1: cos == sin(x + pi/2)
                col = DIM_IN + c * 2 * N_FREQS + 2 * l + t
                A[c, col] = 2.0 ** l
                A[DIM_IN, col] = 0.0 if t == 0 else np.pi / 2.0   # offset via constant-1 lane
                trig_mask[col] = 1.0
                hw[col] = w[l]
    return A, trig_mask, hw


def embed_xyz(xyz_norm, hann_w):
    """Reference NeRF-style frequency embedding (used only for the pure-JAX check)."""
    freqs = 2.0 ** jnp.arange(N_FREQS, dtype=jnp.float32)
    xb = xyz_norm[:, :, None] * freqs[None, None, :]
    s = jnp.sin(xb) * hann_w[None, None, :]
    c = jnp.cos(xb) * hann_w[None, None, :]
    sc = jnp.stack([s, c], axis=-1).reshape(xyz_norm.shape[0], -1)
    return jnp.concatenate([xyz_norm, sc], axis=-1)


def _choose_tile_m(n):
    """Largest tile in [MIN_TILE, MAX_TILE] that still yields >= 2 grid steps (v7x megacore)."""
    tile = MAX_TILE
    while tile > MIN_TILE and (n + tile - 1) // tile < 2:
        tile //= 2
    return max(tile, MIN_TILE)


# ------------------------------- Pallas kernel --------------------------------
def _cond_mlp_kernel(xyzn_ref, A_ref, consts_ref, w1_ref, w2_ref, w3_ref, out_ref):
    # In-kernel Hann-windowed frequency embedding, lane-dense.
    # Phase offsets live in A (lane 3 of xyzn is 1.0); hann weights are folded into W1 rows.
    z = jnp.dot(xyzn_ref[...], A_ref[...], preferred_element_type=jnp.float32)   # (tm, K_PAD)
    trig_mask = consts_ref[0:1, :]                                               # (1, K_PAD)
    feat = jnp.where(trig_mask > 0.5, jnp.sin(z), z)

    cond_bias = consts_ref[1:2, :]    # pose_feat @ W1_c + b1 (same for every point)
    b2        = consts_ref[2:3, :]

    # Layers 1 & 2: bf16 MXU operands, f32 accumulate.  Layer 3: f32 (narrow N, precision).
    h = jnp.dot(feat.astype(jnp.bfloat16), w1_ref[...], preferred_element_type=jnp.float32)
    h = jnp.maximum(h + cond_bias, 0.0)
    h = jnp.dot(h.astype(jnp.bfloat16), w2_ref[...], preferred_element_type=jnp.float32) + b2
    h = jnp.maximum(h, 0.0)
    out_ref[...] = jnp.dot(h, w3_ref[...], preferred_element_type=jnp.float32)   # b3 added in wrapper


# ------------------------------- wrapper --------------------------------------
def hannw_mlp_forward(params, xyz, scaling, rotation, rots, Jtrs, iteration,
                      aabb_min, aabb_max, compute_loss=True):
    N = xyz.shape[0]

    # `iteration < delay` -> identity deform, no losses (static Python branch).
    if iteration < DELAY:
        return (xyz, scaling, rotation), {}

    # Before kick-in the deltas are gated to exactly zero: skip the kernel entirely.
    if iteration < KICK_IN_ITER:
        zero = jnp.zeros((), jnp.float32)
        loss_reg = {'nr_xyz': zero, 'nr_scale': zero, 'nr_rot': zero} if compute_loss else {}
        return (xyz, scaling, rotation), loss_reg

    # TODO(synk): HierarchicalPoseEncoder source was not provided; approximated
    # deterministically by a single dense layer + tanh producing DIM_COND feats.
    pose_in = jnp.concatenate([rots.reshape(-1), Jtrs.reshape(-1)])
    pose_feat = jnp.tanh(pose_in @ params['w_pe'] + params['b_pe'])          # (DIM_COND,)

    # aabb.normalize(xyz, sym=True) -> map to [-1, 1]
    xyz_norm = 2.0 * (xyz - aabb_min) / (aabb_max - aabb_min) - 1.0

    # tiling: biggest tile that keeps >= 2 grid steps; pad points to a multiple of it
    tile_m = _choose_tile_m(N)
    n_pad = pl.cdiv(N, tile_m) * tile_m
    xyzn_pad = jnp.zeros((n_pad, K_IN), jnp.float32)
    xyzn_pad = xyzn_pad.at[:N, :DIM_IN].set(xyz_norm)
    xyzn_pad = xyzn_pad.at[:, DIM_IN].set(1.0)                 # constant-1 lane for phase offsets

    A_np, mask_np, hw_np = _embedding_constants(iteration)
    A = jnp.asarray(A_np)

    # cond part of layer 1 is identical for every point -> fold into a bias row;
    # pack the small row constants into a single (8, K_PAD) block.
    cond_bias = pose_feat @ params['w1_c'] + params['b1']                    # (D_HIDDEN,)
    consts = jnp.zeros((8, K_PAD), jnp.float32)
    consts = consts.at[0, :].set(jnp.asarray(mask_np))
    consts = consts.at[1, :].set(cond_bias)
    consts = consts.at[2, :].set(params['b2'].reshape(-1))

    # W1 with hann/passthrough weights folded into its rows, zero-padded to K_PAD, bf16.
    w1 = (jnp.zeros((K_PAD, D_HIDDEN), jnp.float32)
          .at[:D_EMB, :].set(params['w1_x'] * jnp.asarray(hw_np[:D_EMB])[:, None])
          ).astype(jnp.bfloat16)
    w2 = params['w2'].astype(jnp.bfloat16)
    # W3 stays f32 (narrow output, precision-sensitive), zero-padded to OUT_PAD cols.
    w3 = jnp.zeros((D_HIDDEN, OUT_PAD), jnp.float32).at[:, :DIM_OUT].set(params['w3'])

    tiled = lambda c: pl.BlockSpec((tile_m, c), lambda i: (i, 0))
    whole = lambda r, c: pl.BlockSpec((r, c), lambda i: (0, 0))

    cost = pl.CostEstimate(
        flops=int(2 * n_pad * (K_IN * K_PAD + K_PAD * D_HIDDEN
                               + D_HIDDEN * D_HIDDEN + D_HIDDEN * OUT_PAD)),
        transcendentals=int(n_pad * 2 * DIM_IN * N_FREQS),
        bytes_accessed=int(4 * n_pad * (K_IN + OUT_PAD)
                           + 4 * (K_IN * K_PAD + 8 * K_PAD + D_HIDDEN * OUT_PAD)
                           + 2 * (K_PAD * D_HIDDEN + D_HIDDEN * D_HIDDEN)),
    )

    deltas_pad = pl.pallas_call(
        _cond_mlp_kernel,
        out_shape=jax.ShapeDtypeStruct((n_pad, OUT_PAD), jnp.float32),
        grid=(n_pad // tile_m,),
        in_specs=[
            tiled(K_IN),                  # xyz_norm (padded, constant-1 lane)
            whole(K_IN, K_PAD),           # A (embedding phases + cos offsets)
            whole(8, K_PAD),              # packed row constants: mask / cond bias / b2
            whole(K_PAD, D_HIDDEN),       # W1 (bf16, hann-folded, padded K)
            whole(D_HIDDEN, D_HIDDEN),    # W2 (bf16)
            whole(D_HIDDEN, OUT_PAD),     # W3 (f32, narrow N)
        ],
        out_specs=tiled(OUT_PAD),
        compiler_params=pltpu.CompilerParams(dimension_semantics=("parallel",)),
        cost_estimate=cost,
    )(xyzn_pad, A, consts, w1, w2, w3)

    # b3 added here (plain XLA) -> kernel output is a pure matmul store
    deltas = deltas_pad[:N, :DIM_OUT] + params['b3'].reshape(1, DIM_OUT)

    d_xyz, d_scl, d_rot = deltas[:, 0:3], deltas[:, 3:6], deltas[:, 6:10]
    new_xyz = xyz + d_xyz                 # _xyz + delta_xyz
    new_scl = scaling + d_scl             # scale_offset == 'logit'
    new_rot = rotation + d_rot            # rot_offset == 'add'

    if compute_loss:
        loss_reg = {
            'nr_xyz':   jnp.mean(jnp.sqrt(jnp.sum(d_xyz * d_xyz, axis=1))),
            'nr_scale': jnp.mean(jnp.sum(jnp.abs(d_scl), axis=1)),
            'nr_rot':   jnp.mean(jnp.sum(jnp.abs(d_rot), axis=1)),
        }
    else:
        loss_reg = {}
    return (new_xyz, new_scl, new_rot), loss_reg


# ------------------------- deterministic parameter init -----------------------
def init_params(key):
    pose_in_dim = N_JOINTS * 9 + N_JOINTS * 3
    ks = jax.random.split(key, 6)

    def lin(k, fan_in, fan_out, scale=1.0):
        return (jax.random.normal(k, (fan_in, fan_out), jnp.float32)
                * (scale / np.sqrt(fan_in))).astype(jnp.float32)

    return {
        'w_pe': lin(ks[0], pose_in_dim, DIM_COND),
        'b_pe': jnp.zeros((DIM_COND,), jnp.float32),
        'w1_x': lin(ks[1], D_EMB, D_HIDDEN),
        'w1_c': lin(ks[2], DIM_COND, D_HIDDEN),
        'b1':   jnp.zeros((D_HIDDEN,), jnp.float32),
        'w2':   lin(ks[3], D_HIDDEN, D_HIDDEN),
        'b2':   jnp.zeros((1, D_HIDDEN), jnp.float32),
        'w3':   lin(ks[4], D_HIDDEN, DIM_OUT, scale=1e-2),  # small last-layer init
        'b3':   jnp.zeros((1, DIM_OUT), jnp.float32),
    }


# ----------------------------------- main --------------------------------------
if __name__ == "__main__":
    key = jax.random.PRNGKey(0)
    kp, kx, ks, kr, krot, kj = jax.random.split(key, 6)
    params = init_params(kp)

    N = 512
    xyz      = jax.random.uniform(kx, (N, 3), jnp.float32, -1.0, 1.0)   # gaussians._xyz
    scaling  = jax.random.normal(ks, (N, 3), jnp.float32) * 0.1         # gaussians._scaling
    rotation = jax.random.normal(kr, (N, 4), jnp.float32)               # gaussians._rotation
    rots     = jax.random.normal(krot, (N_JOINTS, 9), jnp.float32)      # camera.rots
    Jtrs     = jax.random.normal(kj, (N_JOINTS, 3), jnp.float32) * 0.5  # camera.Jtrs
    aabb_min = jnp.array([-1.2, -1.2, -1.2], jnp.float32)
    aabb_max = jnp.array([ 1.2,  1.2,  1.2], jnp.float32)
    iteration = 3000

    (new_xyz, new_scl, new_rot), losses = hannw_mlp_forward(
        params, xyz, scaling, rotation, rots, Jtrs, iteration, aabb_min, aabb_max)
    jax.block_until_ready((new_xyz, new_scl, new_rot, losses))

    # ---- pure-JAX f32 reference (same math, no Pallas) for a sanity check ----
    pose_in = jnp.concatenate([rots.reshape(-1), Jtrs.reshape(-1)])
    pose_feat = jnp.tanh(pose_in @ params['w_pe'] + params['b_pe'])
    xyz_norm = 2.0 * (xyz - aabb_min) / (aabb_max - aabb_min) - 1.0
    feat = embed_xyz(xyz_norm, jnp.asarray(hann_window(iteration)))
    h = jnp.maximum(feat @ params['w1_x'] + pose_feat @ params['w1_c'] + params['b1'], 0.0)
    h = jnp.maximum(h @ params['w2'] + params['b2'], 0.0)
    deltas = h @ params['w3'] + params['b3']
    deltas = deltas * (0.0 if iteration < KICK_IN_ITER else 1.0)
    d_xyz, d_scl, d_rot = deltas[:, :3], deltas[:, 3:6], deltas[:, 6:10]
    ref_xyz, ref_scl, ref_rot = xyz + d_xyz, scaling + d_scl, rotation + d_rot
    ref_lxyz = jnp.mean(jnp.linalg.norm(d_xyz, axis=1))
    ref_lscl = jnp.mean(jnp.sum(jnp.abs(d_scl), axis=1))
    ref_lrot = jnp.mean(jnp.sum(jnp.abs(d_rot), axis=1))

    # bf16 matmul operands (layers 1-2) vs f32 reference -> slightly looser tolerances
    np.testing.assert_allclose(np.asarray(new_xyz), np.asarray(ref_xyz), rtol=2e-2, atol=2e-3)
    np.testing.assert_allclose(np.asarray(new_scl), np.asarray(ref_scl), rtol=2e-2, atol=2e-3)
    np.testing.assert_allclose(np.asarray(new_rot), np.asarray(ref_rot), rtol=2e-2, atol=2e-3)
    np.testing.assert_allclose(float(losses['nr_xyz']),   float(ref_lxyz), rtol=2e-2, atol=2e-3)
    np.testing.assert_allclose(float(losses['nr_scale']), float(ref_lscl), rtol=2e-2, atol=2e-3)
    np.testing.assert_allclose(float(losses['nr_rot']),   float(ref_lrot), rtol=2e-2, atol=2e-3)

    print("KERNEL_OK")
</pallas_src>

<mosaic_0001>
module attributes {stable_mosaic.version = 11 : i64} {
  func.func @_cond_mlp_kernel(%arg0: i32, %arg1: memref<256x8xf32, #tpu.memory_space<vmem>>, %arg2: memref<8x128xf32, #tpu.memory_space<vmem>>, %arg3: memref<8x128xf32, #tpu.memory_space<vmem>>, %arg4: memref<128x128xbf16, #tpu.memory_space<vmem>>, %arg5: memref<128x128xbf16, #tpu.memory_space<vmem>>, %arg6: memref<128x16xf32, #tpu.memory_space<vmem>>, %arg7: memref<256x16xf32, #tpu.memory_space<vmem>>) attributes {dimension_semantics = [#tpu.dimension_semantics<parallel>], iteration_bounds = array<i64: 2>, scalar_prefetch = 0 : i64, scratch_operands = 0 : i64, tpu.core_type = #tpu.core_type<tc>, window_params = [{transform_indices = @transform_0, window_bounds = array<i64: 256, 8>}, {pipeline_mode = #tpu.pipeline_mode<synchronous>, transform_indices = @transform_1, window_bounds = array<i64: 8, 128>}, {pipeline_mode = #tpu.pipeline_mode<synchronous>, transform_indices = @transform_2, window_bounds = array<i64: 8, 128>}, {pipeline_mode = #tpu.pipeline_mode<synchronous>, transform_indices = @transform_3, window_bounds = array<i64: 128, 128>}, {pipeline_mode = #tpu.pipeline_mode<synchronous>, transform_indices = @transform_4, window_bounds = array<i64: 128, 128>}, {pipeline_mode = #tpu.pipeline_mode<synchronous>, transform_indices = @transform_5, window_bounds = array<i64: 128, 16>}, {transform_indices = @transform_6, window_bounds = array<i64: 256, 16>}]} {
    %c0 = arith.constant 0 : index
    %c0_0 = arith.constant 0 : index
    %0 = vector.load %arg1[%c0, %c0_0] : memref<256x8xf32, #tpu.memory_space<vmem>>, vector<256x8xf32>
    %c0_1 = arith.constant 0 : index
    %c0_2 = arith.constant 0 : index
    %1 = vector.load %arg2[%c0_1, %c0_2] : memref<8x128xf32, #tpu.memory_space<vmem>>, vector<8x128xf32>
    %cst = arith.constant dense<0.000000e+00> : vector<256x128xf32>
    %2 = tpu.matmul %0, %1, %cst {dimension_numbers = #tpu.dot_dimension_numbers<[1], [0], [0], [1], [0, 0, 1, 1], [], []>} : vector<256x8xf32>, vector<8x128xf32>, vector<256x128xf32> -> vector<256x128xf32>
    %c0_3 = arith.constant 0 : index
    %c0_4 = arith.constant 0 : index
    %3 = vector.load %arg3[%c0_3, %c0_4] : memref<8x128xf32, #tpu.memory_space<vmem>>, vector<1x128xf32>
    %cst_5 = arith.constant 5.000000e-01 : f32
    %4 = vector.broadcast %cst_5 : f32 to vector<1x128xf32>
    %5 = arith.cmpf ogt, %3, %4 : vector<1x128xf32>
    %6 = math.sin %2 : vector<256x128xf32>
    %7 = vector.shape_cast %5 : vector<1x128xi1> to vector<1x128xi1>
    %8 = vector.broadcast %7 : vector<1x128xi1> to vector<256x128xi1>
    %9 = arith.select %8, %6, %2 : vector<256x128xi1>, vector<256x128xf32>
    %c1 = arith.constant 1 : index
    %c0_6 = arith.constant 0 : index
    %10 = vector.load %arg3[%c1, %c0_6] : memref<8x128xf32, #tpu.memory_space<vmem>>, vector<1x128xf32>
    %c2 = arith.constant 2 : index
    %c0_7 = arith.constant 0 : index
    %11 = vector.load %arg3[%c2, %c0_7] : memref<8x128xf32, #tpu.memory_space<vmem>>, vector<1x128xf32>
    %12 = arith.truncf %9 : vector<256x128xf32> to vector<256x128xbf16>
    %c0_8 = arith.constant 0 : index
    %c0_9 = arith.constant 0 : index
    %13 = vector.load %arg4[%c0_8, %c0_9] : memref<128x128xbf16, #tpu.memory_space<vmem>>, vector<128x128xbf16>
    %cst_10 = arith.constant dense<0.000000e+00> : vector<256x128xf32>
    %14 = tpu.matmul %12, %13, %cst_10 {dimension_numbers = #tpu.dot_dimension_numbers<[1], [0], [0], [1], [0, 0, 1, 1], [], []>} : vector<256x128xbf16>, vector<128x128xbf16>, vector<256x128xf32> -> vector<256x128xf32>
    %15 = vector.broadcast %10 : vector<1x128xf32> to vector<256x128xf32>
    %16 = arith.addf %14, %15 : vector<256x128xf32>
    %cst_11 = arith.constant 0.000000e+00 : f32
    %17 = vector.broadcast %cst_11 : f32 to vector<256x128xf32>
    %18 = arith.maximumf %16, %17 : vector<256x128xf32>
    %19 = arith.truncf %18 : vector<256x128xf32> to vector<256x128xbf16>
    %c0_12 = arith.constant 0 : index
    %c0_13 = arith.constant 0 : index
    %20 = vector.load %arg5[%c0_12, %c0_13] : memref<128x128xbf16, #tpu.memory_space<vmem>>, vector<128x128xbf16>
    %cst_14 = arith.constant dense<0.000000e+00> : vector<256x128xf32>
    %21 = tpu.matmul %19, %20, %cst_14 {dimension_numbers = #tpu.dot_dimension_numbers<[1], [0], [0], [1], [0, 0, 1, 1], [], []>} : vector<256x128xbf16>, vector<128x128xbf16>, vector<256x128xf32> -> vector<256x128xf32>
    %22 = vector.broadcast %11 : vector<1x128xf32> to vector<256x128xf32>
    %23 = arith.addf %21, %22 : vector<256x128xf32>
    %cst_15 = arith.constant 0.000000e+00 : f32
    %24 = vector.broadcast %cst_15 : f32 to vector<256x128xf32>
    %25 = arith.maximumf %23, %24 : vector<256x128xf32>
    %c0_16 = arith.constant 0 : index
    %c0_17 = arith.constant 0 : index
    %26 = vector.load %arg6[%c0_16, %c0_17] : memref<128x16xf32, #tpu.memory_space<vmem>>, vector<128x16xf32>
    %cst_18 = arith.constant dense<0.000000e+00> : vector<256x16xf32>
    %27 = tpu.matmul %25, %26, %cst_18 {dimension_numbers = #tpu.dot_dimension_numbers<[1], [0], [0], [1], [0, 0, 1, 1], [], []>} : vector<256x128xf32>, vector<128x16xf32>, vector<256x16xf32> -> vector<256x16xf32>
    %c0_19 = arith.constant 0 : index
    %c0_20 = arith.constant 0 : index
    %28 = vector.load %arg7[%c0_19, %c0_20] : memref<256x16xf32, #tpu.memory_space<vmem>>, vector<256x16xf32>
    tpu.vector_store %arg7[%c0_19, %c0_20], %27 {strides = array<i32>} : memref<256x16xf32, #tpu.memory_space<vmem>>, vector<256x16xf32>,
    return
  }
  func.func @transform_0(%arg0: i32) -> (i32, i32) {
    %c0_i32 = arith.constant 0 : i32
    %c0_i32_0 = arith.constant 0 : i32
    return %arg0, %c0_i32 : i32, i32
  }
  func.func @transform_1(%arg0: i32) -> (i32, i32) {
    %c0_i32 = arith.constant 0 : i32
    %c0_i32_0 = arith.constant 0 : i32
    %c0_i32_1 = arith.constant 0 : i32
    return %c0_i32, %c0_i32_0 : i32, i32
  }
  func.func @transform_2(%arg0: i32) -> (i32, i32) {
    %c0_i32 = arith.constant 0 : i32
    %c0_i32_0 = arith.constant 0 : i32
    %c0_i32_1 = arith.constant 0 : i32
    return %c0_i32, %c0_i32_0 : i32, i32
  }
  func.func @transform_3(%arg0: i32) -> (i32, i32) {
    %c0_i32 = arith.constant 0 : i32
    %c0_i32_0 = arith.constant 0 : i32
    %c0_i32_1 = arith.constant 0 : i32
    return %c0_i32, %c0_i32_0 : i32, i32
  }
  func.func @transform_4(%arg0: i32) -> (i32, i32) {
    %c0_i32 = arith.constant 0 : i32
    %c0_i32_0 = arith.constant 0 : i32
    %c0_i32_1 = arith.constant 0 : i32
    return %c0_i32, %c0_i32_0 : i32, i32
  }
  func.func @transform_5(%arg0: i32) -> (i32, i32) {
    %c0_i32 = arith.constant 0 : i32
    %c0_i32_0 = arith.constant 0 : i32
    %c0_i32_1 = arith.constant 0 : i32
    return %c0_i32, %c0_i32_0 : i32, i32
  }
  func.func @transform_6(%arg0: i32) -> (i32, i32) {
    %c0_i32 = arith.constant 0 : i32
    %c0_i32_0 = arith.constant 0 : i32
    return %arg0, %c0_i32 : i32, i32
  }
}

</mosaic_0001>

<llo_original>
// kernel: tpu_custom_call.1
$region0: #{tpu_custom_call.1}
  #allocation0 [shape = 'u32[]', space=smem, size = 0x4, offset = 0x4, fixed_abs, tag = 'smem constant byte address 0x4 - core index']
  #allocation1 [shape = 'u32[144,128]{1,0:T(1,128)}', space=vmem, size = 0x12000, scoped, tag = 'internal scratch']
  %s0 = inlined_call_operand.vmem [shape: f32[512,8], index: 0, kind: input, shape index: {}]
  %s1 = inlined_call_operand.vmem [shape: f32[8,128], index: 1, kind: input, shape index: {}]
  %s2 = inlined_call_operand.vmem [shape: f32[8,128], index: 2, kind: input, shape index: {}]
  %s3 = inlined_call_operand.vmem [shape: bf16[128,128], index: 3, kind: input, shape index: {}]
  %s4 = inlined_call_operand.vmem [shape: bf16[128,128], index: 4, kind: input, shape index: {}]
  %s5 = inlined_call_operand.vmem [shape: f32[128,16], index: 5, kind: input, shape index: {}]
  %s6 = inlined_call_operand.vmem [shape: f32[512,16], index: 6, kind: output, shape index: {}]
  %s7 = sld [smem:[#allocation0]]
  $region57: #{tpu_custom_call.1} parent=0
    _
  %s9 = ssub.s32 1, %s7
  %s10 = scalar_select 0, %s9, %s7
  loop: start=0, step=1, limit=4
  $region2: #{tpu_custom_call.1} parent=0 // loop_pre_header
    _
  $region3: #{tpu_custom_call.1} parent=0 // loop_header
    %s12 = sphi 0, %s16
    %p13 = scmp.ge.s32.totalorder %s12, 4
    %s22 = sphi 0, %s24
    %s25 = sphi 0, %s22
    %s26 = sphi 0, %s25
    %s42 = sphi 0, %s26
    %s46 = sphi 0, %s46
    %s48 = sphi 0, %s46
    %s49 = sphi 0, %s48
    %s63 = sphi 0, %s49
    %s67 = sphi 0, %s67
    %s69 = sphi 0, %s67
    %s70 = sphi 0, %s69
    %s84 = sphi 0, %s70
    %s88 = sphi 0, %s88
    %s90 = sphi 0, %s88
    %s91 = sphi 0, %s90
    %s105 = sphi 0, %s91
    %s109 = sphi 0, %s109
    %s111 = sphi 0, %s109
    %s112 = sphi 0, %s111
    %s126 = sphi 0, %s112
    %s130 = sphi 0, %s130
    %s132 = sphi 0, %s130
    %s133 = sphi 0, %s132
    %s147 = sphi 0, %s133
    %s153 = sphi 0, %s155
    %s156 = sphi 0, %s153
    %s157 = sphi 0, %s156
    %s173 = sphi 0, %s157
  $region4: #{tpu_custom_call.1} parent=0 // loop_header_branch
    %15 = sbr.rel (%p13) target = $region8
  $region5: #{tpu_custom_call.1} parent=0 // loop_body
    %s17 = ssub.s32 %s12, 1
    %s18 = ssub.s32 %s12, 2
    %s19 = sadd.s32 %s12, 1
    %s20 = ssub.s32 %s12, %s19
    %p21 = scmp.eq.s32.totalorder %s20, 0
    %s23 = sadd.s32 %s22, 1
    %s24 = scalar_select %p21, %s22, %s23
    %p27 = pneg %p21
    %p28 = scmp.eq.s32.totalorder %s12, 1
    %p29 = por %p27, %p28
    %p30 = scmp.ne.s32.totalorder %s22, %s25
    %p31 = scmp.eq.s32.totalorder %s12, 0
    %p32 = por %p30, %p31
    %p33 = scmp.ne.s32.totalorder %s22, %s25
    %p34 = scmp.eq.s32.totalorder %s17, 1
    %p35 = por %p33, %p34
    %p36 = scmp.ne.s32.totalorder %s25, %s26
    %p37 = scmp.eq.s32.totalorder %s17, 0
    %p38 = por %p36, %p37
    %p39 = scmp.ne.s32.totalorder %s25, %s26
    %p40 = scmp.eq.s32.totalorder %s18, 1
    %p41 = por %p39, %p40
    %p43 = scmp.ne.s32.totalorder %s26, %s42
    %p44 = scmp.eq.s32.totalorder %s18, 0
    %p45 = por %p43, %p44
    %s47 = sadd.s32 %s46, 1
    %p50 = scmp.eq.s32.totalorder %s12, 1
    %p51 = scmp.ne.s32.totalorder %s46, %s48
    %p52 = scmp.eq.s32.totalorder %s12, 0
    %p53 = por %p51, %p52
    %p54 = scmp.ne.s32.totalorder %s46, %s48
    %p55 = scmp.eq.s32.totalorder %s17, 1
    %p56 = por %p54, %p55
    %p57 = scmp.ne.s32.totalorder %s48, %s49
    %p58 = scmp.eq.s32.totalorder %s17, 0
    %p59 = por %p57, %p58
    %p60 = scmp.ne.s32.totalorder %s48, %s49
    %p61 = scmp.eq.s32.totalorder %s18, 1
    %p62 = por %p60, %p61
    %p64 = scmp.ne.s32.totalorder %s49, %s63
    %p65 = scmp.eq.s32.totalorder %s18, 0
    %p66 = por %p64, %p65
    %s68 = sadd.s32 %s67, 1
    %p71 = scmp.eq.s32.totalorder %s12, 1
    %p72 = scmp.ne.s32.totalorder %s67, %s69
    %p73 = scmp.eq.s32.totalorder %s12, 0
    %p74 = por %p72, %p73
    %p75 = scmp.ne.s32.totalorder %s67, %s69
    %p76 = scmp.eq.s32.totalorder %s17, 1
    %p77 = por %p75, %p76
    %p78 = scmp.ne.s32.totalorder %s69, %s70
    %p79 = scmp.eq.s32.totalorder %s17, 0
    %p80 = por %p78, %p79
    %p81 = scmp.ne.s32.totalorder %s69, %s70
    %p82 = scmp.eq.s32.totalorder %s18, 1
    %p83 = por %p81, %p82
    %p85 = scmp.ne.s32.totalorder %s70, %s84
    %p86 = scmp.eq.s32.totalorder %s18, 0
    %p87 = por %p85, %p86
    %s89 = sadd.s32 %s88, 1
    %p92 = scmp.eq.s32.totalorder %s12, 1
    %p93 = scmp.ne.s32.totalorder %s88, %s90
    %p94 = scmp.eq.s32.totalorder %s12, 0
    %p95 = por %p93, %p94
    %p96 = scmp.ne.s32.totalorder %s88, %s90
    %p97 = scmp.eq.s32.totalorder %s17, 1
    %p98 = por %p96, %p97
    %p99 = scmp.ne.s32.totalorder %s90, %s91
    %p100 = scmp.eq.s32.totalorder %s17, 0
    %p101 = por %p99, %p100
    %p102 = scmp.ne.s32.totalorder %s90, %s91
    %p103 = scmp.eq.s32.totalorder %s18, 1
    %p104 = por %p102, %p103
    %p106 = scmp.ne.s32.totalorder %s91, %s105
    %p107 = scmp.eq.s32.totalorder %s18, 0
    %p108 = por %p106, %p107
    %s110 = sadd.s32 %s109, 1
    %p113 = scmp.eq.s32.totalorder %s12, 1
    %p114 = scmp.ne.s32.totalorder %s109, %s111
    %p115 = scmp.eq.s32.totalorder %s12, 0
    %p116 = por %p114, %p115
    %p117 = scmp.ne.s32.totalorder %s109, %s111
    %p118 = scmp.eq.s32.totalorder %s17, 1
    %p119 = por %p117, %p118
    %p120 = scmp.ne.s32.totalorder %s111, %s112
    %p121 = scmp.eq.s32.totalorder %s17, 0
    %p122 = por %p120, %p121
    %p123 = scmp.ne.s32.totalorder %s111, %s112
    %p124 = scmp.eq.s32.totalorder %s18, 1
    %p125 = por %p123, %p124
    %p127 = scmp.ne.s32.totalorder %s112, %s126
    %p128 = scmp.eq.s32.totalorder %s18, 0
    %p129 = por %p127, %p128
    %s131 = sadd.s32 %s130, 1
    %p134 = scmp.eq.s32.totalorder %s12, 1
    %p135 = scmp.ne.s32.totalorder %s130, %s132
    %p136 = scmp.eq.s32.totalorder %s12, 0
    %p137 = por %p135, %p136
    %p138 = scmp.ne.s32.totalorder %s130, %s132
    %p139 = scmp.eq.s32.totalorder %s17, 1
    %p140 = por %p138, %p139
    %p141 = scmp.ne.s32.totalorder %s132, %s133
    %p142 = scmp.eq.s32.totalorder %s17, 0
    %p143 = por %p141, %p142
    %p144 = scmp.ne.s32.totalorder %s132, %s133
    %p145 = scmp.eq.s32.totalorder %s18, 1
    %p146 = por %p144, %p145
    %p148 = scmp.ne.s32.totalorder %s133, %s147
    %p149 = scmp.eq.s32.totalorder %s18, 0
    %p150 = por %p148, %p149
    %s151 = ssub.s32 %s12, %s19
    %p152 = scmp.eq.s32.totalorder %s151, 0
    %s154 = sadd.s32 %s153, 1
    %s155 = scalar_select %p152, %s153, %s154
    %p158 = pneg %p152
    %p159 = scmp.eq.s32.totalorder %s12, 1
    %p160 = por %p158, %p159
    %p161 = scmp.ne.s32.totalorder %s153, %s156
    %p162 = scmp.eq.s32.totalorder %s12, 0
    %p163 = por %p161, %p162
    %p164 = scmp.ne.s32.totalorder %s153, %s156
    %p165 = scmp.eq.s32.totalorder %s17, 1
    %p166 = por %p164, %p165
    %p167 = scmp.ne.s32.totalorder %s156, %s157
    %p168 = scmp.eq.s32.totalorder %s17, 0
    %p169 = por %p167, %p168
    %p170 = scmp.ne.s32.totalorder %s156, %s157
    %p171 = scmp.eq.s32.totalorder %s18, 1
    %p172 = por %p170, %p171
    %p174 = scmp.ne.s32.totalorder %s157, %s173
    %p175 = scmp.eq.s32.totalorder %s18, 0
    %p176 = por %p174, %p175
    %p177 = scmp.le.s32.totalorder 1, %s12
    %p178 = scmp.lt.s32.totalorder %s12, 3
    %p179 = pnand %p177, %p178
    %p180 = pneg %p179
    // Predicated region
    $region9: #{tpu_custom_call.1} parent=5 // pred_check
      _
    $region10: #{tpu_custom_call.1} parent=5 // pred_check_branch
      %182 = sbr.rel (%p179) target = $region12
    $region11: #{tpu_custom_call.1} parent=5 // pred_region
      %s183 = ssub.s32 %s12, 1
      // Predicated region
      $region13: #{tpu_custom_call.1} parent=11 // pred_check
        %p184 = pneg %p59
      $region14: #{tpu_custom_call.1} parent=11 // pred_check_branch
        %186 = sbr.rel (%p184) target = $region16
      $region15: #{tpu_custom_call.1} parent=11 // pred_region
        _
      $region16: #{tpu_custom_call.1} parent=11 // pred_fallthru
        _
      // Predicated region
      $region17: #{tpu_custom_call.1} parent=11 // pred_check
        %p187 = pneg %p80
      $region18: #{tpu_custom_call.1} parent=11 // pred_check_branch
        %189 = sbr.rel (%p187) target = $region20
      $region19: #{tpu_custom_call.1} parent=11 // pred_region
        _
      $region20: #{tpu_custom_call.1} parent=11 // pred_fallthru
        _
      // Predicated region
      $region21: #{tpu_custom_call.1} parent=11 // pred_check
        %p190 = pneg %p101
      $region22: #{tpu_custom_call.1} parent=11 // pred_check_branch
        %192 = sbr.rel (%p190) target = $region24
      $region23: #{tpu_custom_call.1} parent=11 // pred_region
        _
      $region24: #{tpu_custom_call.1} parent=11 // pred_fallthru
        _
      // Predicated region
      $region25: #{tpu_custom_call.1} parent=11 // pred_check
        %p193 = pneg %p122
      $region26: #{tpu_custom_call.1} parent=11 // pred_check_branch
        %195 = sbr.rel (%p193) target = $region28
      $region27: #{tpu_custom_call.1} parent=11 // pred_region
        _
      $region28: #{tpu_custom_call.1} parent=11 // pred_fallthru
        _
      // Predicated region
      $region29: #{tpu_custom_call.1} parent=11 // pred_check
        %p196 = pneg %p143
      $region30: #{tpu_custom_call.1} parent=11 // pred_check_branch
        %198 = sbr.rel (%p196) target = $region32
      $region31: #{tpu_custom_call.1} parent=11 // pred_region
        _
      $region32: #{tpu_custom_call.1} parent=11 // pred_fallthru
        _
    $region12: #{tpu_custom_call.1} parent=5 // pred_fallthru
      _
    %p199 = scmp.lt.s32.totalorder %s12, 2
    // Predicated region
    $region33: #{tpu_custom_call.1} parent=5 // pred_check
      %p200 = pneg %p199
    $region34: #{tpu_custom_call.1} parent=5 // pred_check_branch
      %202 = sbr.rel (%p200) target = $region36
    $region35: #{tpu_custom_call.1} parent=5 // pred_region
      // Predicated region
      $region37: #{tpu_custom_call.1} parent=35 // pred_check
        %p203 = pneg %p32
      $region38: #{tpu_custom_call.1} parent=35 // pred_check_branch
        %205 = sbr.rel (%p203) target = $region40
      $region39: #{tpu_custom_call.1} parent=35 // pred_region
        %s206 = smul.u32 32, %s12
        %p207 = scmp.lt.s32.totalorder %s206, 63
        %s208 = scalar_select %p207, %s206, 63
        %s209 = smul.addr %s208, 8
        %s210 = scalar_lea.vmem %s0, %s209
        %s211 = smul.u32 32, %s12
      $region40: #{tpu_custom_call.1} parent=35 // pred_fallthru
        _
    $region36: #{tpu_custom_call.1} parent=5 // pred_fallthru
      _
    %p212 = scmp.le.s32.totalorder 1, %s12
    %p213 = scmp.lt.s32.totalorder %s12, 3
    %p214 = pnand %p212, %p213
    %p215 = pneg %p214
    // Predicated region
    $region41: #{tpu_custom_call.1} parent=5 // pred_check
      _
    $region42: #{tpu_custom_call.1} parent=5 // pred_check_branch
      %217 = sbr.rel (%p214) target = $region44
    $region43: #{tpu_custom_call.1} parent=5 // pred_region
      %s218 = ssub.s32 %s12, 1
      %s219 = smul.u32 32, %s17
      %p220 = scmp.lt.s32.totalorder %s219, 63
      %s221 = scalar_select %p220, %s219, 63
      %s222 = smul.addr %s221, 8
      %s223 = scalar_lea.vmem %s0, %s222
      %p224 = pneg %p38
      %p225 = pneg %p35
      %p226 = pneg %p59
      %p227 = pneg %p56
      %p228 = pneg %p80
      %p229 = pneg %p77
      %p230 = pneg %p101
      %p231 = pneg %p98
      %p232 = pneg %p122
      %p233 = pneg %p119
      %p234 = pneg %p143
      %p235 = pneg %p140
      %p236 = pneg %p169
      %p237 = pneg %p166
      %s238 = smul.u32 32, %s17
      %p239 = scmp.lt.s32.totalorder %s238, 63
      %s240 = scalar_select %p239, %s238, 63
      %s241 = smul.addr %s240, 8
      %s242 = scalar_lea.vmem %s6, %s241
      %s243 = smul.u32 32, %s17
      %p244 = scmp.lt.s32.totalorder %s243, 63
      %s245 = scalar_select %p244, %s243, 63
      %s246 = smul.addr %s245, 8
      %s247 = scalar_lea.vmem %s0, %s246
      %s248 = smul.u32 32, %s17
      %s249 = smul.u32 32, %s17
      %p250 = scmp.lt.s32.totalorder %s249, 63
      %s251 = scalar_select %p250, %s249, 63
      %s252 = smul.addr %s251, 8
      %s253 = scalar_lea.vmem %s6, %s252
      %s254 = smul.u32 32, %s17
      %v256 = vld [vmem:[%s247] sm:$0xff]
      %v257 = vld [vmem:[%s247 + $0x8] sm:$0xff]
      %v258 = vld [vmem:[%s247 + $0x10] sm:$0xff]
      %v259 = vld [vmem:[%s247 + $0x18] sm:$0xff]
      %v260 = vld [vmem:[%s247 + $0x20] sm:$0xff]
      %v261 = vld [vmem:[%s247 + $0x28] sm:$0xff]
      %v262 = vld [vmem:[%s247 + $0x30] sm:$0xff]
      %v263 = vld [vmem:[%s247 + $0x38] sm:$0xff]
      %v264 = vld [vmem:[%s247 + $0x40] sm:$0xff]
      %v265 = vld [vmem:[%s247 + $0x48] sm:$0xff]
      %v266 = vld [vmem:[%s247 + $0x50] sm:$0xff]
      %v267 = vld [vmem:[%s247 + $0x58] sm:$0xff]
      %v268 = vld [vmem:[%s247 + $0x60] sm:$0xff]
      %v269 = vld [vmem:[%s247 + $0x68] sm:$0xff]
      %v270 = vld [vmem:[%s247 + $0x70] sm:$0xff]
      %v271 = vld [vmem:[%s247 + $0x78] sm:$0xff]
      %v272 = vld [vmem:[%s247 + $0x80] sm:$0xff]
      %v273 = vld [vmem:[%s247 + $0x88] sm:$0xff]
      %v274 = vld [vmem:[%s247 + $0x90] sm:$0xff]
      %v275 = vld [vmem:[%s247 + $0x98] sm:$0xff]
      %v276 = vld [vmem:[%s247 + $0xa0] sm:$0xff]
      %v277 = vld [vmem:[%s247 + $0xa8] sm:$0xff]
      %v278 = vld [vmem:[%s247 + $0xb0] sm:$0xff]
      %v279 = vld [vmem:[%s247 + $0xb8] sm:$0xff]
      %v280 = vld [vmem:[%s247 + $0xc0] sm:$0xff]
      %v281 = vld [vmem:[%s247 + $0xc8] sm:$0xff]
      %v282 = vld [vmem:[%s247 + $0xd0] sm:$0xff]
      %v283 = vld [vmem:[%s247 + $0xd8] sm:$0xff]
      %v284 = vld [vmem:[%s247 + $0xe0] sm:$0xff]
      %v285 = vld [vmem:[%s247 + $0xe8] sm:$0xff]
      %v286 = vld [vmem:[%s247 + $0xf0] sm:$0xff]
      %v287 = vld [vmem:[%s247 + $0xf8] sm:$0xff]
      %v288 = vld [vmem:[%s1] sm:$0xff]
      %vm289 = vcmask 64512
      %v291 = vsel %vm289, %v256, 0
      %v294 = vsel %vm289, %v257, 0
      %v297 = vsel %vm289, %v258, 0
      %v300 = vsel %vm289, %v259, 0
      %v303 = vsel %vm289, %v260, 0
      %v306 = vsel %vm289, %v261, 0
      %v309 = vsel %vm289, %v262, 0
      %v312 = vsel %vm289, %v263, 0
      %v315 = vsel %vm289, %v264, 0
      %v318 = vsel %vm289, %v265, 0
      %v321 = vsel %vm289, %v266, 0
      %v324 = vsel %vm289, %v267, 0
      %v327 = vsel %vm289, %v268, 0
      %v330 = vsel %vm289, %v269, 0
      %v333 = vsel %vm289, %v270, 0
      %v336 = vsel %vm289, %v271, 0
      %v339 = vsel %vm289, %v272, 0
      %v342 = vsel %vm289, %v273, 0
      %v345 = vsel %vm289, %v274, 0
      %v348 = vsel %vm289, %v275, 0
      %v351 = vsel %vm289, %v276, 0
      %v354 = vsel %vm289, %v277, 0
      %v357 = vsel %vm289, %v278, 0
      %v360 = vsel %vm289, %v279, 0
      %v363 = vsel %vm289, %v280, 0
      %v366 = vsel %vm289, %v281, 0
      %v369 = vsel %vm289, %v282, 0
      %v372 = vsel %vm289, %v283, 0
      %v375 = vsel %vm289, %v284, 0
      %v378 = vsel %vm289, %v285, 0
      %v381 = vsel %vm289, %v286, 0
      %v384 = vsel %vm289, %v287, 0
      %386 = vmatprep.subr.mxu0 0.0
      %387 = vmatpush1.msra.mxu0 0.0
      %388 = vmatprep.subr.mxu0 0.0
      %389 = vmatpush1.msra.mxu0 0.0
      %390 = vmatprep.subr.mxu0 0.0
      %391 = vmatpush1.msra.mxu0 0.0
      %392 = vmatprep.subr.mxu0 0.0
      %393 = vmatpush1.msra.mxu0 0.0
      %394 = vmatprep.subr.mxu0 0.0
      %395 = vmatpush1.msra.mxu0 0.0
      %396 = vmatprep.subr.mxu0 0.0
      %397 = vmatpush1.msra.mxu0 0.0
      %398 = vmatprep.subr.mxu0 0.0
      %399 = vmatpush1.msra.mxu0 0.0
      %400 = vmatprep.subr.mxu0 0.0
      %401 = vmatpush1.msra.mxu0 0.0
      %402 = vmatprep.subr.mxu0 0.0
      %403 = vmatpush1.msra.mxu0 0.0
      %404 = vmatprep.subr.mxu0 0.0
      %405 = vmatpush1.msra.mxu0 0.0
      %406 = vmatprep.subr.mxu0 0.0
      %407 = vmatpush1.msra.mxu0 0.0
      %408 = vmatprep.subr.mxu0 0.0
      %409 = vmatpush1.msra.mxu0 0.0
      %410 = vmatprep.subr.mxu0 0.0
      %411 = vmatpush1.msra.mxu0 0.0
      %412 = vmatprep.subr.mxu0 0.0
      %413 = vmatpush1.msra.mxu0 0.0
      %414 = vmatprep.subr.mxu0 0.0
      %415 = vmatpush1.msra.mxu0 0.0
      %416 = vmatprep.subr.mxu0 0.0
      %417 = vmatpush1.msra.mxu0 %v288
      %418 = vmatprep.subr.mxu0 0.0
      %419 = vmatpush2.msra.mxu0 0.0
      %420 = vmatprep.subr.mxu0 0.0
      %421 = vmatpush2.msra.mxu0 0.0
      %422 = vmatprep.subr.mxu0 0.0
      %423 = vmatpush2.msra.mxu0 0.0
      %424 = vmatprep.subr.mxu0 0.0
      %425 = vmatpush2.msra.mxu0 0.0
      %426 = vmatprep.subr.mxu0 0.0
      %427 = vmatpush2.msra.mxu0 0.0
      %428 = vmatprep.subr.mxu0 0.0
      %429 = vmatpush2.msra.mxu0 0.0
      %430 = vmatprep.subr.mxu0 0.0
      %431 = vmatpush2.msra.mxu0 0.0
      %432 = vmatprep.subr.mxu0 0.0
      %433 = vmatpush2.msra.mxu0 0.0
      %434 = vmatprep.subr.mxu0 0.0
      %435 = vmatpush2.msra.mxu0 0.0
      %436 = vmatprep.subr.mxu0 0.0
      %437 = vmatpush2.msra.mxu0 0.0
      %438 = vmatprep.subr.mxu0 0.0
      %439 = vmatpush2.msra.mxu0 0.0
      %440 = vmatprep.subr.mxu0 0.0
      %441 = vmatpush2.msra.mxu0 0.0
      %442 = vmatprep.subr.mxu0 0.0
      %443 = vmatpush2.msra.mxu0 0.0
      %444 = vmatprep.subr.mxu0 0.0
      %445 = vmatpush2.msra.mxu0 0.0
      %446 = vmatprep.subr.mxu0 0.0
      %447 = vmatpush2.msra.mxu0 0.0
      %448 = vmatprep.subr.mxu0 0.0
      %449 = vmatpush2.msra.mxu0 0.0
      %450 = vmatprep.mubr.f32.mxu0 0.0
      %451 = vmatmul.mubr.f32.gmra.mxu0 %v291
      %v452 = vpop.f32.mrf.mxu0
      %v453 = vadd.f32 0.0, %v452
      %v454 = vpop.f32.mrf.mxu0
      %455 = vmatprep.mubr.f32.mxu0 0.0
      %456 = vmatmul.mubr.f32.gmra.mxu0 %v294
      %v457 = vpop.f32.mrf.mxu0
      %v458 = vadd.f32 0.0, %v457
      %v459 = vpop.f32.mrf.mxu0
      %460 = vmatprep.mubr.f32.mxu0 0.0
      %461 = vmatmul.mubr.f32.gmra.mxu0 %v297
      %v462 = vpop.f32.mrf.mxu0
      %v463 = vadd.f32 0.0, %v462
      %v464 = vpop.f32.mrf.mxu0
      %465 = vmatprep.mubr.f32.mxu0 0.0
      %466 = vmatmul.mubr.f32.gmra.mxu0 %v300
      %v467 = vpop.f32.mrf.mxu0
      %v468 = vadd.f32 0.0, %v467
      %v469 = vpop.f32.mrf.mxu0
      %470 = vmatprep.mubr.f32.mxu0 0.0
      %471 = vmatmul.mubr.f32.gmra.mxu0 %v303
      %v472 = vpop.f32.mrf.mxu0
      %v473 = vadd.f32 0.0, %v472
      %v474 = vpop.f32.mrf.mxu0
      %475 = vmatprep.mubr.f32.mxu0 0.0
      %476 = vmatmul.mubr.f32.gmra.mxu0 %v306
      %v477 = vpop.f32.mrf.mxu0
      %v478 = vadd.f32 0.0, %v477
      %v479 = vpop.f32.mrf.mxu0
      %480 = vmatprep.mubr.f32.mxu0 0.0
      %481 = vmatmul.mubr.f32.gmra.mxu0 %v309
      %v482 = vpop.f32.mrf.mxu0
      %v483 = vadd.f32 0.0, %v482
      %v484 = vpop.f32.mrf.mxu0
      %485 = vmatprep.mubr.f32.mxu0 0.0
      %486 = vmatmul.mubr.f32.gmra.mxu0 %v312
      %v487 = vpop.f32.mrf.mxu0
      %v488 = vadd.f32 0.0, %v487
      %v489 = vpop.f32.mrf.mxu0
      %490 = vmatprep.mubr.f32.mxu0 0.0
      %491 = vmatmul.mubr.f32.gmra.mxu0 %v315
      %v492 = vpop.f32.mrf.mxu0
      %v493 = vadd.f32 0.0, %v492
      %v494 = vpop.f32.mrf.mxu0
      %495 = vmatprep.mubr.f32.mxu0 0.0
      %496 = vmatmul.mubr.f32.gmra.mxu0 %v318
      %v497 = vpop.f32.mrf.mxu0
      %v498 = vadd.f32 0.0, %v497
      %v499 = vpop.f32.mrf.mxu0
      %500 = vmatprep.mubr.f32.mxu0 0.0
      %501 = vmatmul.mubr.f32.gmra.mxu0 %v321
      %v502 = vpop.f32.mrf.mxu0
      %v503 = vadd.f32 0.0, %v502
      %v504 = vpop.f32.mrf.mxu0
      %505 = vmatprep.mubr.f32.mxu0 0.0
      %506 = vmatmul.mubr.f32.gmra.mxu0 %v324
      %v507 = vpop.f32.mrf.mxu0
      %v508 = vadd.f32 0.0, %v507
      %v509 = vpop.f32.mrf.mxu0
      %510 = vmatprep.mubr.f32.mxu0 0.0
      %511 = vmatmul.mubr.f32.gmra.mxu0 %v327
      %v512 = vpop.f32.mrf.mxu0
      %v513 = vadd.f32 0.0, %v512
      %v514 = vpop.f32.mrf.mxu0
      %515 = vmatprep.mubr.f32.mxu0 0.0
      %516 = vmatmul.mubr.f32.gmra.mxu0 %v330
      %v517 = vpop.f32.mrf.mxu0
      %v518 = vadd.f32 0.0, %v517
      %v519 = vpop.f32.mrf.mxu0
      %520 = vmatprep.mubr.f32.mxu0 0.0
      %521 = vmatmul.mubr.f32.gmra.mxu0 %v333
      %v522 = vpop.f32.mrf.mxu0
      %v523 = vadd.f32 0.0, %v522
      %v524 = vpop.f32.mrf.mxu0
      %525 = vmatprep.mubr.f32.mxu0 0.0
      %526 = vmatmul.mubr.f32.gmra.mxu0 %v336
      %v527 = vpop.f32.mrf.mxu0
      %v528 = vadd.f32 0.0, %v527
      %v529 = vpop.f32.mrf.mxu0
      %530 = vmatprep.mubr.f32.mxu0 0.0
      %531 = vmatmul.mubr.f32.gmra.mxu0 %v339
      %v532 = vpop.f32.mrf.mxu0
      %v533 = vadd.f32 0.0, %v532
      %v534 = vpop.f32.mrf.mxu0
      %535 = vmatprep.mubr.f32.mxu0 0.0
      %536 = vmatmul.mubr.f32.gmra.mxu0 %v342
      %v537 = vpop.f32.mrf.mxu0
      %v538 = vadd.f32 0.0, %v537
      %v539 = vpop.f32.mrf.mxu0
      %540 = vmatprep.mubr.f32.mxu0 0.0
      %541 = vmatmul.mubr.f32.gmra.mxu0 %v345
      %v542 = vpop.f32.mrf.mxu0
      %v543 = vadd.f32 0.0, %v542
      %v544 = vpop.f32.mrf.mxu0
      %545 = vmatprep.mubr.f32.mxu0 0.0
      %546 = vmatmul.mubr.f32.gmra.mxu0 %v348
      %v547 = vpop.f32.mrf.mxu0
      %v548 = vadd.f32 0.0, %v547
      %v549 = vpop.f32.mrf.mxu0
      %550 = vmatprep.mubr.f32.mxu0 0.0
      %551 = vmatmul.mubr.f32.gmra.mxu0 %v351
      %v552 = vpop.f32.mrf.mxu0
      %v553 = vadd.f32 0.0, %v552
      %v554 = vpop.f32.mrf.mxu0
      %555 = vmatprep.mubr.f32.mxu0 0.0
      %556 = vmatmul.mubr.f32.gmra.mxu0 %v354
      %v557 = vpop.f32.mrf.mxu0
      %v558 = vadd.f32 0.0, %v557
      %v559 = vpop.f32.mrf.mxu0
      %560 = vmatprep.mubr.f32.mxu0 0.0
      %561 = vmatmul.mubr.f32.gmra.mxu0 %v357
      %v562 = vpop.f32.mrf.mxu0
      %v563 = vadd.f32 0.0, %v562
      %v564 = vpop.f32.mrf.mxu0
      %565 = vmatprep.mubr.f32.mxu0 0.0
      %566 = vmatmul.mubr.f32.gmra.mxu0 %v360
      %v567 = vpop.f32.mrf.mxu0
      %v568 = vadd.f32 0.0, %v567
      %v569 = vpop.f32.mrf.mxu0
      %570 = vmatprep.mubr.f32.mxu0 0.0
      %571 = vmatmul.mubr.f32.gmra.mxu0 %v363
      %v572 = vpop.f32.mrf.mxu0
      %v573 = vadd.f32 0.0, %v572
      %v574 = vpop.f32.mrf.mxu0
      %575 = vmatprep.mubr.f32.mxu0 0.0
      %576 = vmatmul.mubr.f32.gmra.mxu0 %v366
      %v577 = vpop.f32.mrf.mxu0
      %v578 = vadd.f32 0.0, %v577
      %v579 = vpop.f32.mrf.mxu0
      %580 = vmatprep.mubr.f32.mxu0 0.0
      %581 = vmatmul.mubr.f32.gmra.mxu0 %v369
      %v582 = vpop.f32.mrf.mxu0
      %v583 = vadd.f32 0.0, %v582
      %v584 = vpop.f32.mrf.mxu0
      %585 = vmatprep.mubr.f32.mxu0 0.0
      %586 = vmatmul.mubr.f32.gmra.mxu0 %v372
      %v587 = vpop.f32.mrf.mxu0
      %v588 = vadd.f32 0.0, %v587
      %v589 = vpop.f32.mrf.mxu0
      %590 = vmatprep.mubr.f32.mxu0 0.0
      %591 = vmatmul.mubr.f32.gmra.mxu0 %v375
      %v592 = vpop.f32.mrf.mxu0
      %v593 = vadd.f32 0.0, %v592
      %v594 = vpop.f32.mrf.mxu0
      %595 = vmatprep.mubr.f32.mxu0 0.0
      %596 = vmatmul.mubr.f32.gmra.mxu0 %v378
      %v597 = vpop.f32.mrf.mxu0
      %v598 = vadd.f32 0.0, %v597
      %v599 = vpop.f32.mrf.mxu0
      %600 = vmatprep.mubr.f32.mxu0 0.0
      %601 = vmatmul.mubr.f32.gmra.mxu0 %v381
      %v602 = vpop.f32.mrf.mxu0
      %v603 = vadd.f32 0.0, %v602
      %v604 = vpop.f32.mrf.mxu0
      %605 = vmatprep.mubr.f32.mxu0 0.0
      %606 = vmatmul.mubr.f32.gmra.mxu0 %v384
      %v607 = vpop.f32.mrf.mxu0
      %v608 = vadd.f32 0.0, %v607
      %v609 = vpop.f32.mrf.mxu0
      %610 = vdwg.mxu0
      %v611 = vld [vmem:[%s2] sm:$0x1]
      %vm612 = vcmp.gt.f32.partialorder %v611, 0.5
      %v613 = vand.u32 2147483647, %v453
      %vm614 = vcmp.le.f32.partialorder %v613, 0.7853982
      %vm615 = vcmp.lt.s32.totalorder %v453, 0
      %v616 = vand.u32 %v453, 2139095040
      %v617 = vshrl.u32 %v616, 23
      %v618 = vsub.s32 %v617, 127
      %v619 = vand.u32 2147483647, %v453
      %v620 = vand.u32 %v619, 8388607
      %v621 = vor.u32 %v620, 8388608
      %v622 = vsub.s32 0, %v621
      %v623 = vadd.s32 %v618, 1
      %vm624 = vcmp.gt.s32.totalorder %v623, 0
      %v625 = vsel %vm624, %v623, 0
      %v626 = vshrl.u32 %v625, 5
      %v627 = vand.u32 %v625, 31
      %v628 = vsub.s32 32, %v627
      %v629 = vshrl.u32 683565275, %v628
      %v630 = vshll.u32 683565275, %v627
      %v631 = vshrl.u32 2475754826, %v628
      %v632 = vor.u32 %v630, %v631
      %v633 = vshll.u32 2475754826, %v627
      %v634 = vshrl.u32 2131351028, %v628
      %v635 = vor.u32 %v633, %v634
      %v636 = vshll.u32 2131351028, %v627
      %v637 = vshrl.u32 2102212464, %v628
      %v638 = vor.u32 %v636, %v637
      %v639 = vshll.u32 2102212464, %v627
      %v640 = vshrl.u32 920167782, %v628
      %v641 = vor.u32 %v639, %v640
      %v642 = vshll.u32 920167782, %v627
      %v643 = vshrl.u32 1326507024, %v628
      %v644 = vor.u32 %v642, %v643
      %vm645 = vcmp.lt.s32.totalorder %v626, 1
      %vm646 = vcmp.lt.s32.totalorder %v626, 2
      %vm647 = vcmp.lt.s32.totalorder %v626, 3
      %vm648 = vcmp.lt.s32.totalorder %v626, 4
      %v649 = vsel %vm645, %v629, %v632
      %v650 = vsel %vm648, %v638, 2102212464
      %v651 = vsel %vm647, %v635, %v650
      %v652 = vsel %vm646, %v649, %v651
      %v653 = vsel %vm645, %v632, %v635
      %v654 = vsel %vm648, %v641, 920167782
      %v655 = vsel %vm647, %v638, %v654
      %v656 = vsel %vm646, %v653, %v655
      %v657 = vsel %vm645, %v635, %v638
      %v658 = vsel %vm648, %v644, 1326507024
      %v659 = vsel %vm647, %v641, %v658
      %v660 = vsel %vm646, %v657, %v659
      %v661 = vshll.u32 %v621, 8
      %v662 = vmul.u32.u64.compose %v661, %v660
      %v663 = vextract.low.u32 %v662
      %v664 = vextract.high.u32 %v662
      %v665 = vmul.u32.u64.compose %v661, %v656
      %v666 = vextract.low.u32 %v665
      %v667 = vextract.high.u32 %v665
      %v668 = vmul.u32 %v661, %v652
      %v669 = vadd.s32 %v664, %v666
      %vm670 = vc.u32 %v664, %v666
      %v671 = vadd.s32 %v667, 1
      %v672 = vsel %vm670, %v671, %v667
      %v673 = vadd.s32 %v668, %v672
      %v674 = vadd.s32 %v673, 536870912
      %v675 = vshrl.u32 %v674, 30
      %v676 = vshll.u32 %v675, 30
      %v677 = vsub.s32 %v673, %v676
      %vm678 = vcmp.lt.s32.totalorder %v677, 0
      %v679 = vsub.s32 0, %v677
      %v680 = vsel %vm678, %v679, %v677
      %v681 = vclz %v680
      %v682 = vsub.s32 %v681, 2
      %vm683 = vcmp.gt.s32.totalorder 0, %v682
      %v684 = vsel %vm683, 0, %v682
      %v685 = vsub.s32 32, %v684
      %v686 = vshll.u32 %v677, %v684
      %v687 = vshrl.u32 %v669, %v685
      %v688 = vor.u32 %v686, %v687
      %v689 = vsub.s32 4294967266, %v684
      %v690 = vadd.s32 %v689, 127
      %v691 = vshll.u32 %v690, 23
      %v692 = vor.u32 4788187, %v691
      %v693 = vand.u32 2147483647, %v692
      %v695 = vcvt.s32.f32 %v688
      %v696 = vmul.f32 %v695, %v693
      %v697 = vxor.u32 %v696, 2147483648
      %v698 = vsel %vm615, %v697, %v696
      %v699 = vsub.s32 4, %v675
      %v700 = vsel %vm615, %v699, %v675
      %v701 = vsel %vm614, %v453, %v698
      %v702 = vsel %vm614, 0, %v700
      %v703 = vcosq.f32.pop %v701
      %v704 = vsinq.f32.pop %v701
      %vm705 = vweird.f32 %v453
      %v706 = vadd.s32 %v702, 3
      %v707 = vand.u32 %v706, 3
      %vm708 = vcmp.lt.s32.totalorder %v707, 2
      %vm709 = vcmp.eq.s32.totalorder %v707, 0
      %v710 = vxor.u32 %v704, 2147483648
      %v711 = vsel %vm709, %v703, %v710
      %vm712 = vcmp.eq.s32.totalorder %v707, 2
      %v713 = vxor.u32 %v703, 2147483648
      %v714 = vsel %vm712, %v713, %v704
      %v715 = vsel %vm708, %v711, %v714
      %v716 = vsel %vm705, nan, %v715
      %v717 = vand.u32 2147483647, %v458
      %vm718 = vcmp.le.f32.partialorder %v717, 0.7853982
      %vm719 = vcmp.lt.s32.totalorder %v458, 0
      %v720 = vand.u32 %v458, 2139095040
      %v721 = vshrl.u32 %v720, 23
      %v722 = vsub.s32 %v721, 127
      %v723 = vand.u32 2147483647, %v458
      %v724 = vand.u32 %v723, 8388607
      %v725 = vor.u32 %v724, 8388608
      %v726 = vsub.s32 0, %v725
      %v727 = vadd.s32 %v722, 1
      %vm728 = vcmp.gt.s32.totalorder %v727, 0
      %v729 = vsel %vm728, %v727, 0
      %v730 = vshrl.u32 %v729, 5
      %v731 = vand.u32 %v729, 31
      %v732 = vsub.s32 32, %v731
      %v733 = vshrl.u32 683565275, %v732
      %v734 = vshll.u32 683565275, %v731
      %v735 = vshrl.u32 2475754826, %v732
      %v736 = vor.u32 %v734, %v735
      %v737 = vshll.u32 2475754826, %v731
      %v738 = vshrl.u32 2131351028, %v732
      %v739 = vor.u32 %v737, %v738
      %v740 = vshll.u32 2131351028, %v731
      %v741 = vshrl.u32 2102212464, %v732
      %v742 = vor.u32 %v740, %v741
      %v743 = vshll.u32 2102212464, %v731
      %v744 = vshrl.u32 920167782, %v732
      %v745 = vor.u32 %v743, %v744
      %v746 = vshll.u32 920167782, %v731
      %v747 = vshrl.u32 1326507024, %v732
      %v748 = vor.u32 %v746, %v747
      %vm749 = vcmp.lt.s32.totalorder %v730, 1
      %vm750 = vcmp.lt.s32.totalorder %v730, 2
      %vm751 = vcmp.lt.s32.totalorder %v730, 3
      %vm752 = vcmp.lt.s32.totalorder %v730, 4
      %v753 = vsel %vm749, %v733, %v736
      %v754 = vsel %vm752, %v742, 2102212464
      %v755 = vsel %vm751, %v739, %v754
      %v756 = vsel %vm750, %v753, %v755
      %v757 = vsel %vm749, %v736, %v739
      %v758 = vsel %vm752, %v745, 920167782
      %v759 = vsel %vm751, %v742, %v758
      %v760 = vsel %vm750, %v757, %v759
      %v761 = vsel %vm749, %v739, %v742
      %v762 = vsel %vm752, %v748, 1326507024
      %v763 = vsel %vm751, %v745, %v762
      %v764 = vsel %vm750, %v761, %v763
      %v765 = vshll.u32 %v725, 8
      %v766 = vmul.u32.u64.compose %v765, %v764
      %v767 = vextract.low.u32 %v766
      %v768 = vextract.high.u32 %v766
      %v769 = vmul.u32.u64.compose %v765, %v760
      %v770 = vextract.low.u32 %v769
      %v771 = vextract.high.u32 %v769
      %v772 = vmul.u32 %v765, %v756
      %v773 = vadd.s32 %v768, %v770
      %vm774 = vc.u32 %v768, %v770
      %v775 = vadd.s32 %v771, 1
      %v776 = vsel %vm774, %v775, %v771
      %v777 = vadd.s32 %v772, %v776
      %v778 = vadd.s32 %v777, 536870912
      %v779 = vshrl.u32 %v778, 30
      %v780 = vshll.u32 %v779, 30
      %v781 = vsub.s32 %v777, %v780
      %vm782 = vcmp.lt.s32.totalorder %v781, 0
      %v783 = vsub.s32 0, %v781
      %v784 = vsel %vm782, %v783, %v781
      %v785 = vclz %v784
      %v786 = vsub.s32 %v785, 2
      %vm787 = vcmp.gt.s32.totalorder 0, %v786
      %v788 = vsel %vm787, 0, %v786
      %v789 = vsub.s32 32, %v788
      %v790 = vshll.u32 %v781, %v788
      %v791 = vshrl.u32 %v773, %v789
      %v792 = vor.u32 %v790, %v791
      %v793 = vsub.s32 4294967266, %v788
      %v794 = vadd.s32 %v793, 127
      %v795 = vshll.u32 %v794, 23
      %v796 = vor.u32 4788187, %v795
      %v797 = vand.u32 2147483647, %v796
      %v799 = vcvt.s32.f32 %v792
      %v800 = vmul.f32 %v799, %v797
      %v801 = vxor.u32 %v800, 2147483648
      %v802 = vsel %vm719, %v801, %v800
      %v803 = vsub.s32 4, %v779
      %v804 = vsel %vm719, %v803, %v779
      %v805 = vsel %vm718, %v458, %v802
      %v806 = vsel %vm718, 0, %v804
      %v807 = vcosq.f32.pop %v805
      %v808 = vsinq.f32.pop %v805
      %vm809 = vweird.f32 %v458
      %v810 = vadd.s32 %v806, 3
      %v811 = vand.u32 %v810, 3
      %vm812 = vcmp.lt.s32.totalorder %v811, 2
      %vm813 = vcmp.eq.s32.totalorder %v811, 0
      %v814 = vxor.u32 %v808, 2147483648
      %v815 = vsel %vm813, %v807, %v814
      %vm816 = vcmp.eq.s32.totalorder %v811, 2
      %v817 = vxor.u32 %v807, 2147483648
      %v818 = vsel %vm816, %v817, %v808
      %v819 = vsel %vm812, %v815, %v818
      %v820 = vsel %vm809, nan, %v819
      %v821 = vand.u32 2147483647, %v463
      %vm822 = vcmp.le.f32.partialorder %v821, 0.7853982
      %vm823 = vcmp.lt.s32.totalorder %v463, 0
      %v824 = vand.u32 %v463, 2139095040
      %v825 = vshrl.u32 %v824, 23
      %v826 = vsub.s32 %v825, 127
      %v827 = vand.u32 2147483647, %v463
      %v828 = vand.u32 %v827, 8388607
      %v829 = vor.u32 %v828, 8388608
      %v830 = vsub.s32 0, %v829
      %v831 = vadd.s32 %v826, 1
      %vm832 = vcmp.gt.s32.totalorder %v831, 0
      %v833 = vsel %vm832, %v831, 0
      %v834 = vshrl.u32 %v833, 5
      %v835 = vand.u32 %v833, 31
      %v836 = vsub.s32 32, %v835
      %v837 = vshrl.u32 683565275, %v836
      %v838 = vshll.u32 683565275, %v835
      %v839 = vshrl.u32 2475754826, %v836
      %v840 = vor.u32 %v838, %v839
      %v841 = vshll.u32 2475754826, %v835
      %v842 = vshrl.u32 2131351028, %v836
      %v843 = vor.u32 %v841, %v842
      %v844 = vshll.u32 2131351028, %v835
      %v845 = vshrl.u32 2102212464, %v836
      %v846 = vor.u32 %v844, %v845
      %v847 = vshll.u32 2102212464, %v835
      %v848 = vshrl.u32 920167782, %v836
      %v849 = vor.u32 %v847, %v848
      %v850 = vshll.u32 920167782, %v835
      %v851 = vshrl.u32 1326507024, %v836
      %v852 = vor.u32 %v850, %v851
      %vm853 = vcmp.lt.s32.totalorder %v834, 1
      %vm854 = vcmp.lt.s32.totalorder %v834, 2
      %vm855 = vcmp.lt.s32.totalorder %v834, 3
      %vm856 = vcmp.lt.s32.totalorder %v834, 4
      %v857 = vsel %vm853, %v837, %v840
      %v858 = vsel %vm856, %v846, 2102212464
      %v859 = vsel %vm855, %v843, %v858
      %v860 = vsel %vm854, %v857, %v859
      %v861 = vsel %vm853, %v840, %v843
      %v862 = vsel %vm856, %v849, 920167782
      %v863 = vsel %vm855, %v846, %v862
      %v864 = vsel %vm854, %v861, %v863
      %v865 = vsel %vm853, %v843, %v846
      %v866 = vsel %vm856, %v852, 1326507024
      %v867 = vsel %vm855, %v849, %v866
      %v868 = vsel %vm854, %v865, %v867
      %v869 = vshll.u32 %v829, 8
      %v870 = vmul.u32.u64.compose %v869, %v868
      %v871 = vextract.low.u32 %v870
      %v872 = vextract.high.u32 %v870
      %v873 = vmul.u32.u64.compose %v869, %v864
      %v874 = vextract.low.u32 %v873
      %v875 = vextract.high.u32 %v873
      %v876 = vmul.u32 %v869, %v860
      %v877 = vadd.s32 %v872, %v874
      %vm878 = vc.u32 %v872, %v874
      %v879 = vadd.s32 %v875, 1
      %v880 = vsel %vm878, %v879, %v875
      %v881 = vadd.s32 %v876, %v880
      %v882 = vadd.s32 %v881, 536870912
      %v883 = vshrl.u32 %v882, 30
      %v884 = vshll.u32 %v883, 30
      %v885 = vsub.s32 %v881, %v884
      %vm886 = vcmp.lt.s32.totalorder %v885, 0
      %v887 = vsub.s32 0, %v885
      %v888 = vsel %vm886, %v887, %v885
      %v889 = vclz %v888
      %v890 = vsub.s32 %v889, 2
      %vm891 = vcmp.gt.s32.totalorder 0, %v890
      %v892 = vsel %vm891, 0, %v890
      %v893 = vsub.s32 32, %v892
      %v894 = vshll.u32 %v885, %v892
      %v895 = vshrl.u32 %v877, %v893
      %v896 = vor.u32 %v894, %v895
      %v897 = vsub.s32 4294967266, %v892
      %v898 = vadd.s32 %v897, 127
      %v899 = vshll.u32 %v898, 23
      %v900 = vor.u32 4788187, %v899
      %v901 = vand.u32 2147483647, %v900
      %v903 = vcvt.s32.f32 %v896
      %v904 = vmul.f32 %v903, %v901
      %v905 = vxor.u32 %v904, 2147483648
      %v906 = vsel %vm823, %v905, %v904
      %v907 = vsub.s32 4, %v883
      %v908 = vsel %vm823, %v907, %v883
      %v909 = vsel %vm822, %v463, %v906
      %v910 = vsel %vm822, 0, %v908
      %v911 = vcosq.f32.pop %v909
      %v912 = vsinq.f32.pop %v909
      %vm913 = vweird.f32 %v463
      %v914 = vadd.s32 %v910, 3
      %v915 = vand.u32 %v914, 3
      %vm916 = vcmp.lt.s32.totalorder %v915, 2
      %vm917 = vcmp.eq.s32.totalorder %v915, 0
      %v918 = vxor.u32 %v912, 2147483648
      %v919 = vsel %vm917, %v911, %v918
      %vm920 = vcmp.eq.s32.totalorder %v915, 2
      %v921 = vxor.u32 %v911, 2147483648
      %v922 = vsel %vm920, %v921, %v912
      %v923 = vsel %vm916, %v919, %v922
      %v924 = vsel %vm913, nan, %v923
      %v925 = vand.u32 2147483647, %v468
      %vm926 = vcmp.le.f32.partialorder %v925, 0.7853982
      %vm927 = vcmp.lt.s32.totalorder %v468, 0
      %v928 = vand.u32 %v468, 2139095040
      %v929 = vshrl.u32 %v928, 23
      %v930 = vsub.s32 %v929, 127
      %v931 = vand.u32 2147483647, %v468
      %v932 = vand.u32 %v931, 8388607
      %v933 = vor.u32 %v932, 8388608
      %v934 = vsub.s32 0, %v933
      %v935 = vadd.s32 %v930, 1
      %vm936 = vcmp.gt.s32.totalorder %v935, 0
      %v937 = vsel %vm936, %v935, 0
      %v938 = vshrl.u32 %v937, 5
      %v939 = vand.u32 %v937, 31
      %v940 = vsub.s32 32, %v939
      %v941 = vshrl.u32 683565275, %v940
      %v942 = vshll.u32 683565275, %v939
      %v943 = vshrl.u32 2475754826, %v940
      %v944 = vor.u32 %v942, %v943
      %v945 = vshll.u32 2475754826, %v939
      %v946 = vshrl.u32 2131351028, %v940
      %v947 = vor.u32 %v945, %v946
      %v948 = vshll.u32 2131351028, %v939
      %v949 = vshrl.u32 2102212464, %v940
      %v950 = vor.u32 %v948, %v949
      %v951 = vshll.u32 2102212464, %v939
      %v952 = vshrl.u32 920167782, %v940
      %v953 = vor.u32 %v951, %v952
      %v954 = vshll.u32 920167782, %v939
      %v955 = vshrl.u32 1326507024, %v940
      %v956 = vor.u32 %v954, %v955
      %vm957 = vcmp.lt.s32.totalorder %v938, 1
      %vm958 = vcmp.lt.s32.totalorder %v938, 2
      %vm959 = vcmp.lt.s32.totalorder %v938, 3
      %vm960 = vcmp.lt.s32.totalorder %v938, 4
      %v961 = vsel %vm957, %v941, %v944
      %v962 = vsel %vm960, %v950, 2102212464
      %v963 = vsel %vm959, %v947, %v962
      %v964 = vsel %vm958, %v961, %v963
      %v965 = vsel %vm957, %v944, %v947
      %v966 = vsel %vm960, %v953, 920167782
      %v967 = vsel %vm959, %v950, %v966
      %v968 = vsel %vm958, %v965, %v967
      %v969 = vsel %vm957, %v947, %v950
      %v970 = vsel %vm960, %v956, 1326507024
      %v971 = vsel %vm959, %v953, %v970
      %v972 = vsel %vm958, %v969, %v971
      %v973 = vshll.u32 %v933, 8
      %v974 = vmul.u32.u64.compose %v973, %v972
      %v975 = vextract.low.u32 %v974
      %v976 = vextract.high.u32 %v974
      %v977 = vmul.u32.u64.compose %v973, %v968
      %v978 = vextract.low.u32 %v977
      %v979 = vextract.high.u32 %v977
      %v980 = vmul.u32 %v973, %v964
      %v981 = vadd.s32 %v976, %v978
      %vm982 = vc.u32 %v976, %v978
      %v983 = vadd.s32 %v979, 1
      %v984 = vsel %vm982, %v983, %v979
      %v985 = vadd.s32 %v980, %v984
      %v986 = vadd.s32 %v985, 536870912
      %v987 = vshrl.u32 %v986, 30
      %v988 = vshll.u32 %v987, 30
      %v989 = vsub.s32 %v985, %v988
      %vm990 = vcmp.lt.s32.totalorder %v989, 0
      %v991 = vsub.s32 0, %v989
      %v992 = vsel %vm990, %v991, %v989
      %v993 = vclz %v992
      %v994 = vsub.s32 %v993, 2
      %vm995 = vcmp.gt.s32.totalorder 0, %v994
      %v996 = vsel %vm995, 0, %v994
      %v997 = vsub.s32 32, %v996
      %v998 = vshll.u32 %v989, %v996
      %v999 = vshrl.u32 %v981, %v997
      %v1000 = vor.u32 %v998, %v999
      %v1001 = vsub.s32 4294967266, %v996
      %v1002 = vadd.s32 %v1001, 127
      %v1003 = vshll.u32 %v1002, 23
      %v1004 = vor.u32 4788187, %v1003
      %v1005 = vand.u32 2147483647, %v1004
      %v1007 = vcvt.s32.f32 %v1000
      %v1008 = vmul.f32 %v1007, %v1005
      %v1009 = vxor.u32 %v1008, 2147483648
      %v1010 = vsel %vm927, %v1009, %v1008
      %v1011 = vsub.s32 4, %v987
      %v1012 = vsel %vm927, %v1011, %v987
      %v1013 = vsel %vm926, %v468, %v1010
      %v1014 = vsel %vm926, 0, %v1012
      %v1015 = vcosq.f32.pop %v1013
      %v1016 = vsinq.f32.pop %v1013
      %vm1017 = vweird.f32 %v468
      %v1018 = vadd.s32 %v1014, 3
      %v1019 = vand.u32 %v1018, 3
      %vm1020 = vcmp.lt.s32.totalorder %v1019, 2
      %vm1021 = vcmp.eq.s32.totalorder %v1019, 0
      %v1022 = vxor.u32 %v1016, 2147483648
      %v1023 = vsel %vm1021, %v1015, %v1022
      %vm1024 = vcmp.eq.s32.totalorder %v1019, 2
      %v1025 = vxor.u32 %v1015, 2147483648
      %v1026 = vsel %vm1024, %v1025, %v1016
      %v1027 = vsel %vm1020, %v1023, %v1026
      %v1028 = vsel %vm1017, nan, %v1027
      %v1029 = vand.u32 2147483647, %v473
      %vm1030 = vcmp.le.f32.partialorder %v1029, 0.7853982
      %vm1031 = vcmp.lt.s32.totalorder %v473, 0
      %v1032 = vand.u32 %v473, 2139095040
      %v1033 = vshrl.u32 %v1032, 23
      %v1034 = vsub.s32 %v1033, 127
      %v1035 = vand.u32 2147483647, %v473
      %v1036 = vand.u32 %v1035, 8388607
      %v1037 = vor.u32 %v1036, 8388608
      %v1038 = vsub.s32 0, %v1037
      %v1039 = vadd.s32 %v1034, 1
      %vm1040 = vcmp.gt.s32.totalorder %v1039, 0
      %v1041 = vsel %vm1040, %v1039, 0
      %v1042 = vshrl.u32 %v1041, 5
      %v1043 = vand.u32 %v1041, 31
      %v1044 = vsub.s32 32, %v1043
      %v1045 = vshrl.u32 683565275, %v1044
      %v1046 = vshll.u32 683565275, %v1043
      %v1047 = vshrl.u32 2475754826, %v1044
      %v1048 = vor.u32 %v1046, %v1047
      %v1049 = vshll.u32 2475754826, %v1043
      %v1050 = vshrl.u32 2131351028, %v1044
      %v1051 = vor.u32 %v1049, %v1050
      %v1052 = vshll.u32 2131351028, %v1043
      %v1053 = vshrl.u32 2102212464, %v1044
      %v1054 = vor.u32 %v1052, %v1053
      %v1055 = vshll.u32 2102212464, %v1043
      %v1056 = vshrl.u32 920167782, %v1044
      %v1057 = vor.u32 %v1055, %v1056
      %v1058 = vshll.u32 920167782, %v1043
      %v1059 = vshrl.u32 1326507024, %v1044
      %v1060 = vor.u32 %v1058, %v1059
      %vm1061 = vcmp.lt.s32.totalorder %v1042, 1
      %vm1062 = vcmp.lt.s32.totalorder %v1042, 2
      %vm1063 = vcmp.lt.s32.totalorder %v1042, 3
      %vm1064 = vcmp.lt.s32.totalorder %v1042, 4
      %v1065 = vsel %vm1061, %v1045, %v1048
      %v1066 = vsel %vm1064, %v1054, 2102212464
      %v1067 = vsel %vm1063, %v1051, %v1066
      %v1068 = vsel %vm1062, %v1065, %v1067
      %v1069 = vsel %vm1061, %v1048, %v1051
      %v1070 = vsel %vm1064, %v1057, 920167782
      %v1071 = vsel %vm1063, %v1054, %v1070
      %v1072 = vsel %vm1062, %v1069, %v1071
      %v1073 = vsel %vm1061, %v1051, %v1054
      %v1074 = vsel %vm1064, %v1060, 1326507024
      %v1075 = vsel %vm1063, %v1057, %v1074
      %v1076 = vsel %vm1062, %v1073, %v1075
      %v1077 = vshll.u32 %v1037, 8
      %v1078 = vmul.u32.u64.compose %v1077, %v1076
      %v1079 = vextract.low.u32 %v1078
      %v1080 = vextract.high.u32 %v1078
      %v1081 = vmul.u32.u64.compose %v1077, %v1072
      %v1082 = vextract.low.u32 %v1081
      %v1083 = vextract.high.u32 %v1081
      %v1084 = vmul.u32 %v1077, %v1068
      %v1085 = vadd.s32 %v1080, %v1082
      %vm1086 = vc.u32 %v1080, %v1082
      %v1087 = vadd.s32 %v1083, 1
      %v1088 = vsel %vm1086, %v1087, %v1083
      %v1089 = vadd.s32 %v1084, %v1088
      %v1090 = vadd.s32 %v1089, 536870912
      %v1091 = vshrl.u32 %v1090, 30
      %v1092 = vshll.u32 %v1091, 30
      %v1093 = vsub.s32 %v1089, %v1092
      %vm1094 = vcmp.lt.s32.totalorder %v1093, 0
      %v1095 = vsub.s32 0, %v1093
      %v1096 = vsel %vm1094, %v1095, %v1093
      %v1097 = vclz %v1096
      %v1098 = vsub.s32 %v1097, 2
      %vm1099 = vcmp.gt.s32.totalorder 0, %v1098
      %v1100 = vsel %vm1099, 0, %v1098
      %v1101 = vsub.s32 32, %v1100
      %v1102 = vshll.u32 %v1093, %v1100
      %v1103 = vshrl.u32 %v1085, %v1101
      %v1104 = vor.u32 %v1102, %v1103
      %v1105 = vsub.s32 4294967266, %v1100
      %v1106 = vadd.s32 %v1105, 127
      %v1107 = vshll.u32 %v1106, 23
      %v1108 = vor.u32 4788187, %v1107
      %v1109 = vand.u32 2147483647, %v1108
      %v1111 = vcvt.s32.f32 %v1104
      %v1112 = vmul.f32 %v1111, %v1109
      %v1113 = vxor.u32 %v1112, 2147483648
      %v1114 = vsel %vm1031, %v1113, %v1112
      %v1115 = vsub.s32 4, %v1091
      %v1116 = vsel %vm1031, %v1115, %v1091
      %v1117 = vsel %vm1030, %v473, %v1114
      %v1118 = vsel %vm1030, 0, %v1116
      %v1119 = vcosq.f32.pop %v1117
      %v1120 = vsinq.f32.pop %v1117
      %vm1121 = vweird.f32 %v473
      %v1122 = vadd.s32 %v1118, 3
      %v1123 = vand.u32 %v1122, 3
      %vm1124 = vcmp.lt.s32.totalorder %v1123, 2
      %vm1125 = vcmp.eq.s32.totalorder %v1123, 0
      %v1126 = vxor.u32 %v1120, 2147483648
      %v1127 = vsel %vm1125, %v1119, %v1126
      %vm1128 = vcmp.eq.s32.totalorder %v1123, 2
      %v1129 = vxor.u32 %v1119, 2147483648
      %v1130 = vsel %vm1128, %v1129, %v1120
      %v1131 = vsel %vm1124, %v1127, %v1130
      %v1132 = vsel %vm1121, nan, %v1131
      %v1133 = vand.u32 2147483647, %v478
      %vm1134 = vcmp.le.f32.partialorder %v1133, 0.7853982
      %vm1135 = vcmp.lt.s32.totalorder %v478, 0
      %v1136 = vand.u32 %v478, 2139095040
      %v1137 = vshrl.u32 %v1136, 23
      %v1138 = vsub.s32 %v1137, 127
      %v1139 = vand.u32 2147483647, %v478
      %v1140 = vand.u32 %v1139, 8388607
      %v1141 = vor.u32 %v1140, 8388608
      %v1142 = vsub.s32 0, %v1141
      %v1143 = vadd.s32 %v1138, 1
      %vm1144 = vcmp.gt.s32.totalorder %v1143, 0
      %v1145 = vsel %vm1144, %v1143, 0
      %v1146 = vshrl.u32 %v1145, 5
      %v1147 = vand.u32 %v1145, 31
      %v1148 = vsub.s32 32, %v1147
      %v1149 = vshrl.u32 683565275, %v1148
      %v1150 = vshll.u32 683565275, %v1147
      %v1151 = vshrl.u32 2475754826, %v1148
      %v1152 = vor.u32 %v1150, %v1151
      %v1153 = vshll.u32 2475754826, %v1147
      %v1154 = vshrl.u32 2131351028, %v1148
      %v1155 = vor.u32 %v1153, %v1154
      %v1156 = vshll.u32 2131351028, %v1147
      %v1157 = vshrl.u32 2102212464, %v1148
      %v1158 = vor.u32 %v1156, %v1157
      %v1159 = vshll.u32 2102212464, %v1147
      %v1160 = vshrl.u32 920167782, %v1148
      %v1161 = vor.u32 %v1159, %v1160
      %v1162 = vshll.u32 920167782, %v1147
      %v1163 = vshrl.u32 1326507024, %v1148
      %v1164 = vor.u32 %v1162, %v1163
      %vm1165 = vcmp.lt.s32.totalorder %v1146, 1
      %vm1166 = vcmp.lt.s32.totalorder %v1146, 2
      %vm1167 = vcmp.lt.s32.totalorder %v1146, 3
      %vm1168 = vcmp.lt.s32.totalorder %v1146, 4
      %v1169 = vsel %vm1165, %v1149, %v1152
      %v1170 = vsel %vm1168, %v1158, 2102212464
      %v1171 = vsel %vm1167, %v1155, %v1170
      %v1172 = vsel %vm1166, %v1169, %v1171
      %v1173 = vsel %vm1165, %v1152, %v1155
      %v1174 = vsel %vm1168, %v1161, 920167782
      %v1175 = vsel %vm1167, %v1158, %v1174
      %v1176 = vsel %vm1166, %v1173, %v1175
      %v1177 = vsel %vm1165, %v1155, %v1158
      %v1178 = vsel %vm1168, %v1164, 1326507024
      %v1179 = vsel %vm1167, %v1161, %v1178
      %v1180 = vsel %vm1166, %v1177, %v1179
      %v1181 = vshll.u32 %v1141, 8
      %v1182 = vmul.u32.u64.compose %v1181, %v1180
      %v1183 = vextract.low.u32 %v1182
      %v1184 = vextract.high.u32 %v1182
      %v1185 = vmul.u32.u64.compose %v1181, %v1176
      %v1186 = vextract.low.u32 %v1185
      %v1187 = vextract.high.u32 %v1185
      %v1188 = vmul.u32 %v1181, %v1172
      %v1189 = vadd.s32 %v1184, %v1186
      %vm1190 = vc.u32 %v1184, %v1186
      %v1191 = vadd.s32 %v1187, 1
      %v1192 = vsel %vm1190, %v1191, %v1187
      %v1193 = vadd.s32 %v1188, %v1192
      %v1194 = vadd.s32 %v1193, 536870912
      %v1195 = vshrl.u32 %v1194, 30
      %v1196 = vshll.u32 %v1195, 30
      %v1197 = vsub.s32 %v1193, %v1196
      %vm1198 = vcmp.lt.s32.totalorder %v1197, 0
      %v1199 = vsub.s32 0, %v1197
      %v1200 = vsel %vm1198, %v1199, %v1197
      %v1201 = vclz %v1200
      %v1202 = vsub.s32 %v1201, 2
      %vm1203 = vcmp.gt.s32.totalorder 0, %v1202
      %v1204 = vsel %vm1203, 0, %v1202
      %v1205 = vsub.s32 32, %v1204
      %v1206 = vshll.u32 %v1197, %v1204
      %v1207 = vshrl.u32 %v1189, %v1205
      %v1208 = vor.u32 %v1206, %v1207
      %v1209 = vsub.s32 4294967266, %v1204
      %v1210 = vadd.s32 %v1209, 127
      %v1211 = vshll.u32 %v1210, 23
      %v1212 = vor.u32 4788187, %v1211
      %v1213 = vand.u32 2147483647, %v1212
      %v1215 = vcvt.s32.f32 %v1208
      %v1216 = vmul.f32 %v1215, %v1213
      %v1217 = vxor.u32 %v1216, 2147483648
      %v1218 = vsel %vm1135, %v1217, %v1216
      %v1219 = vsub.s32 4, %v1195
      %v1220 = vsel %vm1135, %v1219, %v1195
      %v1221 = vsel %vm1134, %v478, %v1218
      %v1222 = vsel %vm1134, 0, %v1220
      %v1223 = vcosq.f32.pop %v1221
      %v1224 = vsinq.f32.pop %v1221
      %vm1225 = vweird.f32 %v478
      %v1226 = vadd.s32 %v1222, 3
      %v1227 = vand.u32 %v1226, 3
      %vm1228 = vcmp.lt.s32.totalorder %v1227, 2
      %vm1229 = vcmp.eq.s32.totalorder %v1227, 0
      %v1230 = vxor.u32 %v1224, 2147483648
      %v1231 = vsel %vm1229, %v1223, %v1230
      %vm1232 = vcmp.eq.s32.totalorder %v1227, 2
      %v1233 = vxor.u32 %v1223, 2147483648
      %v1234 = vsel %vm1232, %v1233, %v1224
      %v1235 = vsel %vm1228, %v1231, %v1234
      %v1236 = vsel %vm1225, nan, %v1235
      %v1237 = vand.u32 2147483647, %v483
      %vm1238 = vcmp.le.f32.partialorder %v1237, 0.7853982
      %vm1239 = vcmp.lt.s32.totalorder %v483, 0
      %v1240 = vand.u32 %v483, 2139095040
      %v1241 = vshrl.u32 %v1240, 23
      %v1242 = vsub.s32 %v1241, 127
      %v1243 = vand.u32 2147483647, %v483
      %v1244 = vand.u32 %v1243, 8388607
      %v1245 = vor.u32 %v1244, 8388608
      %v1246 = vsub.s32 0, %v1245
      %v1247 = vadd.s32 %v1242, 1
      %vm1248 = vcmp.gt.s32.totalorder %v1247, 0
      %v1249 = vsel %vm1248, %v1247, 0
      %v1250 = vshrl.u32 %v1249, 5
      %v1251 = vand.u32 %v1249, 31
      %v1252 = vsub.s32 32, %v1251
      %v1253 = vshrl.u32 683565275, %v1252
      %v1254 = vshll.u32 683565275, %v1251
      %v1255 = vshrl.u32 2475754826, %v1252
      %v1256 = vor.u32 %v1254, %v1255
      %v1257 = vshll.u32 2475754826, %v1251
      %v1258 = vshrl.u32 2131351028, %v1252
      %v1259 = vor.u32 %v1257, %v1258
      %v1260 = vshll.u32 2131351028, %v1251
      %v1261 = vshrl.u32 2102212464, %v1252
      %v1262 = vor.u32 %v1260, %v1261
      %v1263 = vshll.u32 2102212464, %v1251
      %v1264 = vshrl.u32 920167782, %v1252
      %v1265 = vor.u32 %v1263, %v1264
      %v1266 = vshll.u32 920167782, %v1251
      %v1267 = vshrl.u32 1326507024, %v1252
      %v1268 = vor.u32 %v1266, %v1267
      %vm1269 = vcmp.lt.s32.totalorder %v1250, 1
      %vm1270 = vcmp.lt.s32.totalorder %v1250, 2
      %vm1271 = vcmp.lt.s32.totalorder %v1250, 3
      %vm1272 = vcmp.lt.s32.totalorder %v1250, 4
      %v1273 = vsel %vm1269, %v1253, %v1256
      %v1274 = vsel %vm1272, %v1262, 2102212464
      %v1275 = vsel %vm1271, %v1259, %v1274
      %v1276 = vsel %vm1270, %v1273, %v1275
      %v1277 = vsel %vm1269, %v1256, %v1259
      %v1278 = vsel %vm1272, %v1265, 920167782
      %v1279 = vsel %vm1271, %v1262, %v1278
      %v1280 = vsel %vm1270, %v1277, %v1279
      %v1281 = vsel %vm1269, %v1259, %v1262
      %v1282 = vsel %vm1272, %v1268, 1326507024
      %v1283 = vsel %vm1271, %v1265, %v1282
      %v1284 = vsel %vm1270, %v1281, %v1283
      %v1285 = vshll.u32 %v1245, 8
      %v1286 = vmul.u32.u64.compose %v1285, %v1284
      %v1287 = vextract.low.u32 %v1286
      %v1288 = vextract.high.u32 %v1286
      %v1289 = vmul.u32.u64.compose %v1285, %v1280
      %v1290 = vextract.low.u32 %v1289
      %v1291 = vextract.high.u32 %v1289
      %v1292 = vmul.u32 %v1285, %v1276
      %v1293 = vadd.s32 %v1288, %v1290
      %vm1294 = vc.u32 %v1288, %v1290
      %v1295 = vadd.s32 %v1291, 1
      %v1296 = vsel %vm1294, %v1295, %v1291
      %v1297 = vadd.s32 %v1292, %v1296
      %v1298 = vadd.s32 %v1297, 536870912
      %v1299 = vshrl.u32 %v1298, 30
      %v1300 = vshll.u32 %v1299, 30
      %v1301 = vsub.s32 %v1297, %v1300
      %vm1302 = vcmp.lt.s32.totalorder %v1301, 0
      %v1303 = vsub.s32 0, %v1301
      %v1304 = vsel %vm1302, %v1303, %v1301
      %v1305 = vclz %v1304
      %v1306 = vsub.s32 %v1305, 2
      %vm1307 = vcmp.gt.s32.totalorder 0, %v1306
      %v1308 = vsel %vm1307, 0, %v1306
      %v1309 = vsub.s32 32, %v1308
      %v1310 = vshll.u32 %v1301, %v1308
      %v1311 = vshrl.u32 %v1293, %v1309
      %v1312 = vor.u32 %v1310, %v1311
      %v1313 = vsub.s32 4294967266, %v1308
      %v1314 = vadd.s32 %v1313, 127
      %v1315 = vshll.u32 %v1314, 23
      %v1316 = vor.u32 4788187, %v1315
      %v1317 = vand.u32 2147483647, %v1316
      %v1319 = vcvt.s32.f32 %v1312
      %v1320 = vmul.f32 %v1319, %v1317
      %v1321 = vxor.u32 %v1320, 2147483648
      %v1322 = vsel %vm1239, %v1321, %v1320
      %v1323 = vsub.s32 4, %v1299
      %v1324 = vsel %vm1239, %v1323, %v1299
      %v1325 = vsel %vm1238, %v483, %v1322
      %v1326 = vsel %vm1238, 0, %v1324
      %v1327 = vcosq.f32.pop %v1325
      %v1328 = vsinq.f32.pop %v1325
      %vm1329 = vweird.f32 %v483
      %v1330 = vadd.s32 %v1326, 3
      %v1331 = vand.u32 %v1330, 3
      %vm1332 = vcmp.lt.s32.totalorder %v1331, 2
      %vm1333 = vcmp.eq.s32.totalorder %v1331, 0
      %v1334 = vxor.u32 %v1328, 2147483648
      %v1335 = vsel %vm1333, %v1327, %v1334
      %vm1336 = vcmp.eq.s32.totalorder %v1331, 2
      %v1337 = vxor.u32 %v1327, 2147483648
      %v1338 = vsel %vm1336, %v1337, %v1328
      %v1339 = vsel %vm1332, %v1335, %v1338
      %v1340 = vsel %vm1329, nan, %v1339
      %v1341 = vand.u32 2147483647, %v488
      %vm1342 = vcmp.le.f32.partialorder %v1341, 0.7853982
      %vm1343 = vcmp.lt.s32.totalorder %v488, 0
      %v1344 = vand.u32 %v488, 2139095040
      %v1345 = vshrl.u32 %v1344, 23
      %v1346 = vsub.s32 %v1345, 127
      %v1347 = vand.u32 2147483647, %v488
      %v1348 = vand.u32 %v1347, 8388607
      %v1349 = vor.u32 %v1348, 8388608
      %v1350 = vsub.s32 0, %v1349
      %v1351 = vadd.s32 %v1346, 1
      %vm1352 = vcmp.gt.s32.totalorder %v1351, 0
      %v1353 = vsel %vm1352, %v1351, 0
      %v1354 = vshrl.u32 %v1353, 5
      %v1355 = vand.u32 %v1353, 31
      %v1356 = vsub.s32 32, %v1355
      %v1357 = vshrl.u32 683565275, %v1356
      %v1358 = vshll.u32 683565275, %v1355
      %v1359 = vshrl.u32 2475754826, %v1356
      %v1360 = vor.u32 %v1358, %v1359
      %v1361 = vshll.u32 2475754826, %v1355
      %v1362 = vshrl.u32 2131351028, %v1356
      %v1363 = vor.u32 %v1361, %v1362
      %v1364 = vshll.u32 2131351028, %v1355
      %v1365 = vshrl.u32 2102212464, %v1356
      %v1366 = vor.u32 %v1364, %v1365
      %v1367 = vshll.u32 2102212464, %v1355
      %v1368 = vshrl.u32 920167782, %v1356
      %v1369 = vor.u32 %v1367, %v1368
      %v1370 = vshll.u32 920167782, %v1355
      %v1371 = vshrl.u32 1326507024, %v1356
      %v1372 = vor.u32 %v1370, %v1371
      %vm1373 = vcmp.lt.s32.totalorder %v1354, 1
      %vm1374 = vcmp.lt.s32.totalorder %v1354, 2
      %vm1375 = vcmp.lt.s32.totalorder %v1354, 3
      %vm1376 = vcmp.lt.s32.totalorder %v1354, 4
      %v1377 = vsel %vm1373, %v1357, %v1360
      %v1378 = vsel %vm1376, %v1366, 2102212464
      %v1379 = vsel %vm1375, %v1363, %v1378
      %v1380 = vsel %vm1374, %v1377, %v1379
      %v1381 = vsel %vm1373, %v1360, %v1363
      %v1382 = vsel %vm1376, %v1369, 920167782
      %v1383 = vsel %vm1375, %v1366, %v1382
      %v1384 = vsel %vm1374, %v1381, %v1383
      %v1385 = vsel %vm1373, %v1363, %v1366
      %v1386 = vsel %vm1376, %v1372, 1326507024
      %v1387 = vsel %vm1375, %v1369, %v1386
      %v1388 = vsel %vm1374, %v1385, %v1387
      %v1389 = vshll.u32 %v1349, 8
      %v1390 = vmul.u32.u64.compose %v1389, %v1388
      %v1391 = vextract.low.u32 %v1390
      %v1392 = vextract.high.u32 %v1390
      %v1393 = vmul.u32.u64.compose %v1389, %v1384
      %v1394 = vextract.low.u32 %v1393
      %v1395 = vextract.high.u32 %v1393
      %v1396 = vmul.u32 %v1389, %v1380
      %v1397 = vadd.s32 %v1392, %v1394
      %vm1398 = vc.u32 %v1392, %v1394
      %v1399 = vadd.s32 %v1395, 1
      %v1400 = vsel %vm1398, %v1399, %v1395
      %v1401 = vadd.s32 %v1396, %v1400
      %v1402 = vadd.s32 %v1401, 536870912
      %v1403 = vshrl.u32 %v1402, 30
      %v1404 = vshll.u32 %v1403, 30
      %v1405 = vsub.s32 %v1401, %v1404
      %vm1406 = vcmp.lt.s32.totalorder %v1405, 0
      %v1407 = vsub.s32 0, %v1405
      %v1408 = vsel %vm1406, %v1407, %v1405
      %v1409 = vclz %v1408
      %v1410 = vsub.s32 %v1409, 2
      %vm1411 = vcmp.gt.s32.totalorder 0, %v1410
      %v1412 = vsel %vm1411, 0, %v1410
      %v1413 = vsub.s32 32, %v1412
      %v1414 = vshll.u32 %v1405, %v1412
      %v1415 = vshrl.u32 %v1397, %v1413
      %v1416 = vor.u32 %v1414, %v1415
      %v1417 = vsub.s32 4294967266, %v1412
      %v1418 = vadd.s32 %v1417, 127
      %v1419 = vshll.u32 %v1418, 23
      %v1420 = vor.u32 4788187, %v1419
      %v1421 = vand.u32 2147483647, %v1420
      %v1423 = vcvt.s32.f32 %v1416
      %v1424 = vmul.f32 %v1423, %v1421
      %v1425 = vxor.u32 %v1424, 2147483648
      %v1426 = vsel %vm1343, %v1425, %v1424
      %v1427 = vsub.s32 4, %v1403
      %v1428 = vsel %vm1343, %v1427, %v1403
      %v1429 = vsel %vm1342, %v488, %v1426
      %v1430 = vsel %vm1342, 0, %v1428
      %v1431 = vcosq.f32.pop %v1429
      %v1432 = vsinq.f32.pop %v1429
      %vm1433 = vweird.f32 %v488
      %v1434 = vadd.s32 %v1430, 3
      %v1435 = vand.u32 %v1434, 3
      %vm1436 = vcmp.lt.s32.totalorder %v1435, 2
      %vm1437 = vcmp.eq.s32.totalorder %v1435, 0
      %v1438 = vxor.u32 %v1432, 2147483648
      %v1439 = vsel %vm1437, %v1431, %v1438
      %vm1440 = vcmp.eq.s32.totalorder %v1435, 2
      %v1441 = vxor.u32 %v1431, 2147483648
      %v1442 = vsel %vm1440, %v1441, %v1432
      %v1443 = vsel %vm1436, %v1439, %v1442
      %v1444 = vsel %vm1433, nan, %v1443
      %v1445 = vand.u32 2147483647, %v493
      %vm1446 = vcmp.le.f32.partialorder %v1445, 0.7853982
      %vm1447 = vcmp.lt.s32.totalorder %v493, 0
      %v1448 = vand.u32 %v493, 2139095040
      %v1449 = vshrl.u32 %v1448, 23
      %v1450 = vsub.s32 %v1449, 127
      %v1451 = vand.u32 2147483647, %v493
      %v1452 = vand.u32 %v1451, 8388607
      %v1453 = vor.u32 %v1452, 8388608
      %v1454 = vsub.s32 0, %v1453
      %v1455 = vadd.s32 %v1450, 1
      %vm1456 = vcmp.gt.s32.totalorder %v1455, 0
      %v1457 = vsel %vm1456, %v1455, 0
      %v1458 = vshrl.u32 %v1457, 5
      %v1459 = vand.u32 %v1457, 31
      %v1460 = vsub.s32 32, %v1459
      %v1461 = vshrl.u32 683565275, %v1460
      %v1462 = vshll.u32 683565275, %v1459
      %v1463 = vshrl.u32 2475754826, %v1460
      %v1464 = vor.u32 %v1462, %v1463
      %v1465 = vshll.u32 2475754826, %v1459
      %v1466 = vshrl.u32 2131351028, %v1460
      %v1467 = vor.u32 %v1465, %v1466
      %v1468 = vshll.u32 2131351028, %v1459
      %v1469 = vshrl.u32 2102212464, %v1460
      %v1470 = vor.u32 %v1468, %v1469
      %v1471 = vshll.u32 2102212464, %v1459
      %v1472 = vshrl.u32 920167782, %v1460
      %v1473 = vor.u32 %v1471, %v1472
      %v1474 = vshll.u32 920167782, %v1459
      %v1475 = vshrl.u32 1326507024, %v1460
      %v1476 = vor.u32 %v1474, %v1475
      %vm1477 = vcmp.lt.s32.totalorder %v1458, 1
      %vm1478 = vcmp.lt.s32.totalorder %v1458, 2
      %vm1479 = vcmp.lt.s32.totalorder %v1458, 3
      %vm1480 = vcmp.lt.s32.totalorder %v1458, 4
      %v1481 = vsel %vm1477, %v1461, %v1464
      %v1482 = vsel %vm1480, %v1470, 2102212464
      %v1483 = vsel %vm1479, %v1467, %v1482
      %v1484 = vsel %vm1478, %v1481, %v1483
      %v1485 = vsel %vm1477, %v1464, %v1467
      %v1486 = vsel %vm1480, %v1473, 920167782
      %v1487 = vsel %vm1479, %v1470, %v1486
      %v1488 = vsel %vm1478, %v1485, %v1487
      %v1489 = vsel %vm1477, %v1467, %v1470
      %v1490 = vsel %vm1480, %v1476, 1326507024
      %v1491 = vsel %vm1479, %v1473, %v1490
      %v1492 = vsel %vm1478, %v1489, %v1491
      %v1493 = vshll.u32 %v1453, 8
      %v1494 = vmul.u32.u64.compose %v1493, %v1492
      %v1495 = vextract.low.u32 %v1494
      %v1496 = vextract.high.u32 %v1494
      %v1497 = vmul.u32.u64.compose %v1493, %v1488
      %v1498 = vextract.low.u32 %v1497
      %v1499 = vextract.high.u32 %v1497
      %v1500 = vmul.u32 %v1493, %v1484
      %v1501 = vadd.s32 %v1496, %v1498
      %vm1502 = vc.u32 %v1496, %v1498
      %v1503 = vadd.s32 %v1499, 1
      %v1504 = vsel %vm1502, %v1503, %v1499
      %v1505 = vadd.s32 %v1500, %v1504
      %v1506 = vadd.s32 %v1505, 536870912
      %v1507 = vshrl.u32 %v1506, 30
      %v1508 = vshll.u32 %v1507, 30
      %v1509 = vsub.s32 %v1505, %v1508
      %vm1510 = vcmp.lt.s32.totalorder %v1509, 0
      %v1511 = vsub.s32 0, %v1509
      %v1512 = vsel %vm1510, %v1511, %v1509
      %v1513 = vclz %v1512
      %v1514 = vsub.s32 %v1513, 2
      %vm1515 = vcmp.gt.s32.totalorder 0, %v1514
      %v1516 = vsel %vm1515, 0, %v1514
      %v1517 = vsub.s32 32, %v1516
      %v1518 = vshll.u32 %v1509, %v1516
      %v1519 = vshrl.u32 %v1501, %v1517
      %v1520 = vor.u32 %v1518, %v1519
      %v1521 = vsub.s32 4294967266, %v1516
      %v1522 = vadd.s32 %v1521, 127
      %v1523 = vshll.u32 %v1522, 23
      %v1524 = vor.u32 4788187, %v1523
      %v1525 = vand.u32 2147483647, %v1524
      %v1527 = vcvt.s32.f32 %v1520
      %v1528 = vmul.f32 %v1527, %v1525
      %v1529 = vxor.u32 %v1528, 2147483648
      %v1530 = vsel %vm1447, %v1529, %v1528
      %v1531 = vsub.s32 4, %v1507
      %v1532 = vsel %vm1447, %v1531, %v1507
      %v1533 = vsel %vm1446, %v493, %v1530
      %v1534 = vsel %vm1446, 0, %v1532
      %v1535 = vcosq.f32.pop %v1533
      %v1536 = vsinq.f32.pop %v1533
      %vm1537 = vweird.f32 %v493
      %v1538 = vadd.s32 %v1534, 3
      %v1539 = vand.u32 %v1538, 3
      %vm1540 = vcmp.lt.s32.totalorder %v1539, 2
      %vm1541 = vcmp.eq.s32.totalorder %v1539, 0
      %v1542 = vxor.u32 %v1536, 2147483648
      %v1543 = vsel %vm1541, %v1535, %v1542
      %vm1544 = vcmp.eq.s32.totalorder %v1539, 2
      %v1545 = vxor.u32 %v1535, 2147483648
      %v1546 = vsel %vm1544, %v1545, %v1536
      %v1547 = vsel %vm1540, %v1543, %v1546
      %v1548 = vsel %vm1537, nan, %v1547
      %v1549 = vand.u32 2147483647, %v498
      %vm1550 = vcmp.le.f32.partialorder %v1549, 0.7853982
      %vm1551 = vcmp.lt.s32.totalorder %v498, 0
      %v1552 = vand.u32 %v498, 2139095040
      %v1553 = vshrl.u32 %v1552, 23
      %v1554 = vsub.s32 %v1553, 127
      %v1555 = vand.u32 2147483647, %v498
      %v1556 = vand.u32 %v1555, 8388607
      %v1557 = vor.u32 %v1556, 8388608
      %v1558 = vsub.s32 0, %v1557
      %v1559 = vadd.s32 %v1554, 1
      %vm1560 = vcmp.gt.s32.totalorder %v1559, 0
      %v1561 = vsel %vm1560, %v1559, 0
      %v1562 = vshrl.u32 %v1561, 5
      %v1563 = vand.u32 %v1561, 31
      %v1564 = vsub.s32 32, %v1563
      %v1565 = vshrl.u32 683565275, %v1564
      %v1566 = vshll.u32 683565275, %v1563
      %v1567 = vshrl.u32 2475754826, %v1564
      %v1568 = vor.u32 %v1566, %v1567
      %v1569 = vshll.u32 2475754826, %v1563
      %v1570 = vshrl.u32 2131351028, %v1564
      %v1571 = vor.u32 %v1569, %v1570
      %v1572 = vshll.u32 2131351028, %v1563
      %v1573 = vshrl.u32 2102212464, %v1564
      %v1574 = vor.u32 %v1572, %v1573
      %v1575 = vshll.u32 2102212464, %v1563
      %v1576 = vshrl.u32 920167782, %v1564
      %v1577 = vor.u32 %v1575, %v1576
      %v1578 = vshll.u32 920167782, %v1563
      %v1579 = vshrl.u32 1326507024, %v1564
      %v1580 = vor.u32 %v1578, %v1579
      %vm1581 = vcmp.lt.s32.totalorder %v1562, 1
      %vm1582 = vcmp.lt.s32.totalorder %v1562, 2
      %vm1583 = vcmp.lt.s32.totalorder %v1562, 3
      %vm1584 = vcmp.lt.s32.totalorder %v1562, 4
      %v1585 = vsel %vm1581, %v1565, %v1568
      %v1586 = vsel %vm1584, %v1574, 2102212464
      %v1587 = vsel %vm1583, %v1571, %v1586
      %v1588 = vsel %vm1582, %v1585, %v1587
      %v1589 = vsel %vm1581, %v1568, %v1571
      %v1590 = vsel %vm1584, %v1577, 920167782
      %v1591 = vsel %vm1583, %v1574, %v1590
      %v1592 = vsel %vm1582, %v1589, %v1591
      %v1593 = vsel %vm1581, %v1571, %v1574
      %v1594 = vsel %vm1584, %v1580, 1326507024
      %v1595 = vsel %vm1583, %v1577, %v1594
      %v1596 = vsel %vm1582, %v1593, %v1595
      %v1597 = vshll.u32 %v1557, 8
      %v1598 = vmul.u32.u64.compose %v1597, %v1596
      %v1599 = vextract.low.u32 %v1598
      %v1600 = vextract.high.u32 %v1598
      %v1601 = vmul.u32.u64.compose %v1597, %v1592
      %v1602 = vextract.low.u32 %v1601
      %v1603 = vextract.high.u32 %v1601
      %v1604 = vmul.u32 %v1597, %v1588
      %v1605 = vadd.s32 %v1600, %v1602
      %vm1606 = vc.u32 %v1600, %v1602
      %v1607 = vadd.s32 %v1603, 1
      %v1608 = vsel %vm1606, %v1607, %v1603
      %v1609 = vadd.s32 %v1604, %v1608
      %v1610 = vadd.s32 %v1609, 536870912
      %v1611 = vshrl.u32 %v1610, 30
      %v1612 = vshll.u32 %v1611, 30
      %v1613 = vsub.s32 %v1609, %v1612
      %vm1614 = vcmp.lt.s32.totalorder %v1613, 0
      %v1615 = vsub.s32 0, %v1613
      %v1616 = vsel %vm1614, %v1615, %v1613
      %v1617 = vclz %v1616
      %v1618 = vsub.s32 %v1617, 2
      %vm1619 = vcmp.gt.s32.totalorder 0, %v1618
      %v1620 = vsel %vm1619, 0, %v1618
      %v1621 = vsub.s32 32, %v1620
      %v1622 = vshll.u32 %v1613, %v1620
      %v1623 = vshrl.u32 %v1605, %v1621
      %v1624 = vor.u32 %v1622, %v1623
      %v1625 = vsub.s32 4294967266, %v1620
      %v1626 = vadd.s32 %v1625, 127
      %v1627 = vshll.u32 %v1626, 23
      %v1628 = vor.u32 4788187, %v1627
      %v1629 = vand.u32 2147483647, %v1628
      %v1631 = vcvt.s32.f32 %v1624
      %v1632 = vmul.f32 %v1631, %v1629
      %v1633 = vxor.u32 %v1632, 2147483648
      %v1634 = vsel %vm1551, %v1633, %v1632
      %v1635 = vsub.s32 4, %v1611
      %v1636 = vsel %vm1551, %v1635, %v1611
      %v1637 = vsel %vm1550, %v498, %v1634
      %v1638 = vsel %vm1550, 0, %v1636
      %v1639 = vcosq.f32.pop %v1637
      %v1640 = vsinq.f32.pop %v1637
      %vm1641 = vweird.f32 %v498
      %v1642 = vadd.s32 %v1638, 3
      %v1643 = vand.u32 %v1642, 3
      %vm1644 = vcmp.lt.s32.totalorder %v1643, 2
      %vm1645 = vcmp.eq.s32.totalorder %v1643, 0
      %v1646 = vxor.u32 %v1640, 2147483648
      %v1647 = vsel %vm1645, %v1639, %v1646
      %vm1648 = vcmp.eq.s32.totalorder %v1643, 2
      %v1649 = vxor.u32 %v1639, 2147483648
      %v1650 = vsel %vm1648, %v1649, %v1640
      %v1651 = vsel %vm1644, %v1647, %v1650
      %v1652 = vsel %vm1641, nan, %v1651
      %v1653 = vand.u32 2147483647, %v503
      %vm1654 = vcmp.le.f32.partialorder %v1653, 0.7853982
      %vm1655 = vcmp.lt.s32.totalorder %v503, 0
      %v1656 = vand.u32 %v503, 2139095040
      %v1657 = vshrl.u32 %v1656, 23
      %v1658 = vsub.s32 %v1657, 127
      %v1659 = vand.u32 2147483647, %v503
      %v1660 = vand.u32 %v1659, 8388607
      %v1661 = vor.u32 %v1660, 8388608
      %v1662 = vsub.s32 0, %v1661
      %v1663 = vadd.s32 %v1658, 1
      %vm1664 = vcmp.gt.s32.totalorder %v1663, 0
      %v1665 = vsel %vm1664, %v1663, 0
      %v1666 = vshrl.u32 %v1665, 5
      %v1667 = vand.u32 %v1665, 31
      %v1668 = vsub.s32 32, %v1667
      %v1669 = vshrl.u32 683565275, %v1668
      %v1670 = vshll.u32 683565275, %v1667
      %v1671 = vshrl.u32 2475754826, %v1668
      %v1672 = vor.u32 %v1670, %v1671
      %v1673 = vshll.u32 2475754826, %v1667
      %v1674 = vshrl.u32 2131351028, %v1668
      %v1675 = vor.u32 %v1673, %v1674
      %v1676 = vshll.u32 2131351028, %v1667
      %v1677 = vshrl.u32 2102212464, %v1668
      %v1678 = vor.u32 %v1676, %v1677
      %v1679 = vshll.u32 2102212464, %v1667
      %v1680 = vshrl.u32 920167782, %v1668
      %v1681 = vor.u32 %v1679, %v1680
      %v1682 = vshll.u32 920167782, %v1667
      %v1683 = vshrl.u32 1326507024, %v1668
      %v1684 = vor.u32 %v1682, %v1683
      %vm1685 = vcmp.lt.s32.totalorder %v1666, 1
      %vm1686 = vcmp.lt.s32.totalorder %v1666, 2
      %vm1687 = vcmp.lt.s32.totalorder %v1666, 3
      %vm1688 = vcmp.lt.s32.totalorder %v1666, 4
      %v1689 = vsel %vm1685, %v1669, %v1672
      %v1690 = vsel %vm1688, %v1678, 2102212464
      %v1691 = vsel %vm1687, %v1675, %v1690
      %v1692 = vsel %vm1686, %v1689, %v1691
      %v1693 = vsel %vm1685, %v1672, %v1675
      %v1694 = vsel %vm1688, %v1681, 920167782
      %v1695 = vsel %vm1687, %v1678, %v1694
      %v1696 = vsel %vm1686, %v1693, %v1695
      %v1697 = vsel %vm1685, %v1675, %v1678
      %v1698 = vsel %vm1688, %v1684, 1326507024
      %v1699 = vsel %vm1687, %v1681, %v1698
      %v1700 = vsel %vm1686, %v1697, %v1699
      %v1701 = vshll.u32 %v1661, 8
      %v1702 = vmul.u32.u64.compose %v1701, %v1700
      %v1703 = vextract.low.u32 %v1702
      %v1704 = vextract.high.u32 %v1702
      %v1705 = vmul.u32.u64.compose %v1701, %v1696
      %v1706 = vextract.low.u32 %v1705
      %v1707 = vextract.high.u32 %v1705
      %v1708 = vmul.u32 %v1701, %v1692
      %v1709 = vadd.s32 %v1704, %v1706
      %vm1710 = vc.u32 %v1704, %v1706
      %v1711 = vadd.s32 %v1707, 1
      %v1712 = vsel %vm1710, %v1711, %v1707
      %v1713 = vadd.s32 %v1708, %v1712
      %v1714 = vadd.s32 %v1713, 536870912
      %v1715 = vshrl.u32 %v1714, 30
      %v1716 = vshll.u32 %v1715, 30
      %v1717 = vsub.s32 %v1713, %v1716
      %vm1718 = vcmp.lt.s32.totalorder %v1717, 0
      %v1719 = vsub.s32 0, %v1717
      %v1720 = vsel %vm1718, %v1719, %v1717
      %v1721 = vclz %v1720
      %v1722 = vsub.s32 %v1721, 2
      %vm1723 = vcmp.gt.s32.totalorder 0, %v1722
      %v1724 = vsel %vm1723, 0, %v1722
      %v1725 = vsub.s32 32, %v1724
      %v1726 = vshll.u32 %v1717, %v1724
      %v1727 = vshrl.u32 %v1709, %v1725
      %v1728 = vor.u32 %v1726, %v1727
      %v1729 = vsub.s32 4294967266, %v1724
      %v1730 = vadd.s32 %v1729, 127
      %v1731 = vshll.u32 %v1730, 23
      %v1732 = vor.u32 4788187, %v1731
      %v1733 = vand.u32 2147483647, %v1732
      %v1735 = vcvt.s32.f32 %v1728
      %v1736 = vmul.f32 %v1735, %v1733
      %v1737 = vxor.u32 %v1736, 2147483648
      %v1738 = vsel %vm1655, %v1737, %v1736
      %v1739 = vsub.s32 4, %v1715
      %v1740 = vsel %vm1655, %v1739, %v1715
      %v1741 = vsel %vm1654, %v503, %v1738
      %v1742 = vsel %vm1654, 0, %v1740
      %v1743 = vcosq.f32.pop %v1741
      %v1744 = vsinq.f32.pop %v1741
      %vm1745 = vweird.f32 %v503
      %v1746 = vadd.s32 %v1742, 3
      %v1747 = vand.u32 %v1746, 3
      %vm1748 = vcmp.lt.s32.totalorder %v1747, 2
      %vm1749 = vcmp.eq.s32.totalorder %v1747, 0
      %v1750 = vxor.u32 %v1744, 2147483648
      %v1751 = vsel %vm1749, %v1743, %v1750
      %vm1752 = vcmp.eq.s32.totalorder %v1747, 2
      %v1753 = vxor.u32 %v1743, 2147483648
      %v1754 = vsel %vm1752, %v1753, %v1744
      %v1755 = vsel %vm1748, %v1751, %v1754
      %v1756 = vsel %vm1745, nan, %v1755
      %v1757 = vand.u32 2147483647, %v508
      %vm1758 = vcmp.le.f32.partialorder %v1757, 0.7853982
      %vm1759 = vcmp.lt.s32.totalorder %v508, 0
      %v1760 = vand.u32 %v508, 2139095040
      %v1761 = vshrl.u32 %v1760, 23
      %v1762 = vsub.s32 %v1761, 127
      %v1763 = vand.u32 2147483647, %v508
      %v1764 = vand.u32 %v1763, 8388607
      %v1765 = vor.u32 %v1764, 8388608
      %v1766 = vsub.s32 0, %v1765
      %v1767 = vadd.s32 %v1762, 1
      %vm1768 = vcmp.gt.s32.totalorder %v1767, 0
      %v1769 = vsel %vm1768, %v1767, 0
      %v1770 = vshrl.u32 %v1769, 5
      %v1771 = vand.u32 %v1769, 31
      %v1772 = vsub.s32 32, %v1771
      %v1773 = vshrl.u32 683565275, %v1772
      %v1774 = vshll.u32 683565275, %v1771
      %v1775 = vshrl.u32 2475754826, %v1772
      %v1776 = vor.u32 %v1774, %v1775
      %v1777 = vshll.u32 2475754826, %v1771
      %v1778 = vshrl.u32 2131351028, %v1772
      %v1779 = vor.u32 %v1777, %v1778
      %v1780 = vshll.u32 2131351028, %v1771
      %v1781 = vshrl.u32 2102212464, %v1772
      %v1782 = vor.u32 %v1780, %v1781
      %v1783 = vshll.u32 2102212464, %v1771
      %v1784 = vshrl.u32 920167782, %v1772
      %v1785 = vor.u32 %v1783, %v1784
      %v1786 = vshll.u32 920167782, %v1771
      %v1787 = vshrl.u32 1326507024, %v1772
      %v1788 = vor.u32 %v1786, %v1787
      %vm1789 = vcmp.lt.s32.totalorder %v1770, 1
      %vm1790 = vcmp.lt.s32.totalorder %v1770, 2
      %vm1791 = vcmp.lt.s32.totalorder %v1770, 3
      %vm1792 = vcmp.lt.s32.totalorder %v1770, 4
      %v1793 = vsel %vm1789, %v1773, %v1776
      %v1794 = vsel %vm1792, %v1782, 2102212464
      %v1795 = vsel %vm1791, %v1779, %v1794
      %v1796 = vsel %vm1790, %v1793, %v1795
      %v1797 = vsel %vm1789, %v1776, %v1779
      %v1798 = vsel %vm1792, %v1785, 920167782
      %v1799 = vsel %vm1791, %v1782, %v1798
      %v1800 = vsel %vm1790, %v1797, %v1799
      %v1801 = vsel %vm1789, %v1779, %v1782
      %v1802 = vsel %vm1792, %v1788, 1326507024
      %v1803 = vsel %vm1791, %v1785, %v1802
      %v1804 = vsel %vm1790, %v1801, %v1803
      %v1805 = vshll.u32 %v1765, 8
      %v1806 = vmul.u32.u64.compose %v1805, %v1804
      %v1807 = vextract.low.u32 %v1806
      %v1808 = vextract.high.u32 %v1806
      %v1809 = vmul.u32.u64.compose %v1805, %v1800
      %v1810 = vextract.low.u32 %v1809
      %v1811 = vextract.high.u32 %v1809
      %v1812 = vmul.u32 %v1805, %v1796
      %v1813 = vadd.s32 %v1808, %v1810
      %vm1814 = vc.u32 %v1808, %v1810
      %v1815 = vadd.s32 %v1811, 1
      %v1816 = vsel %vm1814, %v1815, %v1811
      %v1817 = vadd.s32 %v1812, %v1816
      %v1818 = vadd.s32 %v1817, 536870912
      %v1819 = vshrl.u32 %v1818, 30
      %v1820 = vshll.u32 %v1819, 30
      %v1821 = vsub.s32 %v1817, %v1820
      %vm1822 = vcmp.lt.s32.totalorder %v1821, 0
      %v1823 = vsub.s32 0, %v1821
      %v1824 = vsel %vm1822, %v1823, %v1821
      %v1825 = vclz %v1824
      %v1826 = vsub.s32 %v1825, 2
      %vm1827 = vcmp.gt.s32.totalorder 0, %v1826
      %v1828 = vsel %vm1827, 0, %v1826
      %v1829 = vsub.s32 32, %v1828
      %v1830 = vshll.u32 %v1821, %v1828
      %v1831 = vshrl.u32 %v1813, %v1829
      %v1832 = vor.u32 %v1830, %v1831
      %v1833 = vsub.s32 4294967266, %v1828
      %v1834 = vadd.s32 %v1833, 127
      %v1835 = vshll.u32 %v1834, 23
      %v1836 = vor.u32 4788187, %v1835
      %v1837 = vand.u32 2147483647, %v1836
      %v1839 = vcvt.s32.f32 %v1832
      %v1840 = vmul.f32 %v1839, %v1837
      %v1841 = vxor.u32 %v1840, 2147483648
      %v1842 = vsel %vm1759, %v1841, %v1840
      %v1843 = vsub.s32 4, %v1819
      %v1844 = vsel %vm1759, %v1843, %v1819
      %v1845 = vsel %vm1758, %v508, %v1842
      %v1846 = vsel %vm1758, 0, %v1844
      %v1847 = vcosq.f32.pop %v1845
      %v1848 = vsinq.f32.pop %v1845
      %vm1849 = vweird.f32 %v508
      %v1850 = vadd.s32 %v1846, 3
      %v1851 = vand.u32 %v1850, 3
      %vm1852 = vcmp.lt.s32.totalorder %v1851, 2
      %vm1853 = vcmp.eq.s32.totalorder %v1851, 0
      %v1854 = vxor.u32 %v1848, 2147483648
      %v1855 = vsel %vm1853, %v1847, %v1854
      %vm1856 = vcmp.eq.s32.totalorder %v1851, 2
      %v1857 = vxor.u32 %v1847, 2147483648
      %v1858 = vsel %vm1856, %v1857, %v1848
      %v1859 = vsel %vm1852, %v1855, %v1858
      %v1860 = vsel %vm1849, nan, %v1859
      %v1861 = vand.u32 2147483647, %v513
      %vm1862 = vcmp.le.f32.partialorder %v1861, 0.7853982
      %vm1863 = vcmp.lt.s32.totalorder %v513, 0
      %v1864 = vand.u32 %v513, 2139095040
      %v1865 = vshrl.u32 %v1864, 23
      %v1866 = vsub.s32 %v1865, 127
      %v1867 = vand.u32 2147483647, %v513
      %v1868 = vand.u32 %v1867, 8388607
      %v1869 = vor.u32 %v1868, 8388608
      %v1870 = vsub.s32 0, %v1869
      %v1871 = vadd.s32 %v1866, 1
      %vm1872 = vcmp.gt.s32.totalorder %v1871, 0
      %v1873 = vsel %vm1872, %v1871, 0
      %v1874 = vshrl.u32 %v1873, 5
      %v1875 = vand.u32 %v1873, 31
      %v1876 = vsub.s32 32, %v1875
      %v1877 = vshrl.u32 683565275, %v1876
      %v1878 = vshll.u32 683565275, %v1875
      %v1879 = vshrl.u32 2475754826, %v1876
      %v1880 = vor.u32 %v1878, %v1879
      %v1881 = vshll.u32 2475754826, %v1875
      %v1882 = vshrl.u32 2131351028, %v1876
      %v1883 = vor.u32 %v1881, %v1882
      %v1884 = vshll.u32 2131351028, %v1875
      %v1885 = vshrl.u32 2102212464, %v1876
      %v1886 = vor.u32 %v1884, %v1885
      %v1887 = vshll.u32 2102212464, %v1875
      %v1888 = vshrl.u32 920167782, %v1876
      %v1889 = vor.u32 %v1887, %v1888
      %v1890 = vshll.u32 920167782, %v1875
      %v1891 = vshrl.u32 1326507024, %v1876
      %v1892 = vor.u32 %v1890, %v1891
      %vm1893 = vcmp.lt.s32.totalorder %v1874, 1
      %vm1894 = vcmp.lt.s32.totalorder %v1874, 2
      %vm1895 = vcmp.lt.s32.totalorder %v1874, 3
      %vm1896 = vcmp.lt.s32.totalorder %v1874, 4
      %v1897 = vsel %vm1893, %v1877, %v1880
      %v1898 = vsel %vm1896, %v1886, 2102212464
      %v1899 = vsel %vm1895, %v1883, %v1898
      %v1900 = vsel %vm1894, %v1897, %v1899
      %v1901 = vsel %vm1893, %v1880, %v1883
      %v1902 = vsel %vm1896, %v1889, 920167782
      %v1903 = vsel %vm1895, %v1886, %v1902
      %v1904 = vsel %vm1894, %v1901, %v1903
      %v1905 = vsel %vm1893, %v1883, %v1886
      %v1906 = vsel %vm1896, %v1892, 1326507024
      %v1907 = vsel %vm1895, %v1889, %v1906
      %v1908 = vsel %vm1894, %v1905, %v1907
      %v1909 = vshll.u32 %v1869, 8
      %v1910 = vmul.u32.u64.compose %v1909, %v1908
      %v1911 = vextract.low.u32 %v1910
      %v1912 = vextract.high.u32 %v1910
      %v1913 = vmul.u32.u64.compose %v1909, %v1904
      %v1914 = vextract.low.u32 %v1913
      %v1915 = vextract.high.u32 %v1913
      %v1916 = vmul.u32 %v1909, %v1900
      %v1917 = vadd.s32 %v1912, %v1914
      %vm1918 = vc.u32 %v1912, %v1914
      %v1919 = vadd.s32 %v1915, 1
      %v1920 = vsel %vm1918, %v1919, %v1915
      %v1921 = vadd.s32 %v1916, %v1920
      %v1922 = vadd.s32 %v1921, 536870912
      %v1923 = vshrl.u32 %v1922, 30
      %v1924 = vshll.u32 %v1923, 30
      %v1925 = vsub.s32 %v1921, %v1924
      %vm1926 = vcmp.lt.s32.totalorder %v1925, 0
      %v1927 = vsub.s32 0, %v1925
      %v1928 = vsel %vm1926, %v1927, %v1925
      %v1929 = vclz %v1928
      %v1930 = vsub.s32 %v1929, 2
      %vm1931 = vcmp.gt.s32.totalorder 0, %v1930
      %v1932 = vsel %vm1931, 0, %v1930
      %v1933 = vsub.s32 32, %v1932
      %v1934 = vshll.u32 %v1925, %v1932
      %v1935 = vshrl.u32 %v1917, %v1933
      %v1936 = vor.u32 %v1934, %v1935
      %v1937 = vsub.s32 4294967266, %v1932
      %v1938 = vadd.s32 %v1937, 127
      %v1939 = vshll.u32 %v1938, 23
      %v1940 = vor.u32 4788187, %v1939
      %v1941 = vand.u32 2147483647, %v1940
      %v1943 = vcvt.s32.f32 %v1936
      %v1944 = vmul.f32 %v1943, %v1941
      %v1945 = vxor.u32 %v1944, 2147483648
      %v1946 = vsel %vm1863, %v1945, %v1944
      %v1947 = vsub.s32 4, %v1923
      %v1948 = vsel %vm1863, %v1947, %v1923
      %v1949 = vsel %vm1862, %v513, %v1946
      %v1950 = vsel %vm1862, 0, %v1948
      %v1951 = vcosq.f32.pop %v1949
      %v1952 = vsinq.f32.pop %v1949
      %vm1953 = vweird.f32 %v513
      %v1954 = vadd.s32 %v1950, 3
      %v1955 = vand.u32 %v1954, 3
      %vm1956 = vcmp.lt.s32.totalorder %v1955, 2
      %vm1957 = vcmp.eq.s32.totalorder %v1955, 0
      %v1958 = vxor.u32 %v1952, 2147483648
      %v1959 = vsel %vm1957, %v1951, %v1958
      %vm1960 = vcmp.eq.s32.totalorder %v1955, 2
      %v1961 = vxor.u32 %v1951, 2147483648
      %v1962 = vsel %vm1960, %v1961, %v1952
      %v1963 = vsel %vm1956, %v1959, %v1962
      %v1964 = vsel %vm1953, nan, %v1963
      %v1965 = vand.u32 2147483647, %v518
      %vm1966 = vcmp.le.f32.partialorder %v1965, 0.7853982
      %vm1967 = vcmp.lt.s32.totalorder %v518, 0
      %v1968 = vand.u32 %v518, 2139095040
      %v1969 = vshrl.u32 %v1968, 23
      %v1970 = vsub.s32 %v1969, 127
      %v1971 = vand.u32 2147483647, %v518
      %v1972 = vand.u32 %v1971, 8388607
      %v1973 = vor.u32 %v1972, 8388608
      %v1974 = vsub.s32 0, %v1973
      %v1975 = vadd.s32 %v1970, 1
      %vm1976 = vcmp.gt.s32.totalorder %v1975, 0
      %v1977 = vsel %vm1976, %v1975, 0
      %v1978 = vshrl.u32 %v1977, 5
      %v1979 = vand.u32 %v1977, 31
      %v1980 = vsub.s32 32, %v1979
      %v1981 = vshrl.u32 683565275, %v1980
      %v1982 = vshll.u32 683565275, %v1979
      %v1983 = vshrl.u32 2475754826, %v1980
      %v1984 = vor.u32 %v1982, %v1983
      %v1985 = vshll.u32 2475754826, %v1979
      %v1986 = vshrl.u32 2131351028, %v1980
      %v1987 = vor.u32 %v1985, %v1986
      %v1988 = vshll.u32 2131351028, %v1979
      %v1989 = vshrl.u32 2102212464, %v1980
      %v1990 = vor.u32 %v1988, %v1989
      %v1991 = vshll.u32 2102212464, %v1979
      %v1992 = vshrl.u32 920167782, %v1980
      %v1993 = vor.u32 %v1991, %v1992
      %v1994 = vshll.u32 920167782, %v1979
      %v1995 = vshrl.u32 1326507024, %v1980
      %v1996 = vor.u32 %v1994, %v1995
      %vm1997 = vcmp.lt.s32.totalorder %v1978, 1
      %vm1998 = vcmp.lt.s32.totalorder %v1978, 2
      %vm1999 = vcmp.lt.s32.totalorder %v1978, 3
      %vm2000 = vcmp.lt.s32.totalorder %v1978, 4
      %v2001 = vsel %vm1997, %v1981, %v1984
      %v2002 = vsel %vm2000, %v1990, 2102212464
      %v2003 = vsel %vm1999, %v1987, %v2002
      %v2004 = vsel %vm1998, %v2001, %v2003
      %v2005 = vsel %vm1997, %v1984, %v1987
      %v2006 = vsel %vm2000, %v1993, 920167782
      %v2007 = vsel %vm1999, %v1990, %v2006
      %v2008 = vsel %vm1998, %v2005, %v2007
      %v2009 = vsel %vm1997, %v1987, %v1990
      %v2010 = vsel %vm2000, %v1996, 1326507024
      %v2011 = vsel %vm1999, %v1993, %v2010
      %v2012 = vsel %vm1998, %v2009, %v2011
      %v2013 = vshll.u32 %v1973, 8
      %v2014 = vmul.u32.u64.compose %v2013, %v2012
      %v2015 = vextract.low.u32 %v2014
      %v2016 = vextract.high.u32 %v2014
      %v2017 = vmul.u32.u64.compose %v2013, %v2008
      %v2018 = vextract.low.u32 %v2017
      %v2019 = vextract.high.u32 %v2017
      %v2020 = vmul.u32 %v2013, %v2004
      %v2021 = vadd.s32 %v2016, %v2018
      %vm2022 = vc.u32 %v2016, %v2018
      %v2023 = vadd.s32 %v2019, 1
      %v2024 = vsel %vm2022, %v2023, %v2019
      %v2025 = vadd.s32 %v2020, %v2024
      %v2026 = vadd.s32 %v2025, 536870912
      %v2027 = vshrl.u32 %v2026, 30
      %v2028 = vshll.u32 %v2027, 30
      %v2029 = vsub.s32 %v2025, %v2028
      %vm2030 = vcmp.lt.s32.totalorder %v2029, 0
      %v2031 = vsub.s32 0, %v2029
      %v2032 = vsel %vm2030, %v2031, %v2029
      %v2033 = vclz %v2032
      %v2034 = vsub.s32 %v2033, 2
      %vm2035 = vcmp.gt.s32.totalorder 0, %v2034
      %v2036 = vsel %vm2035, 0, %v2034
      %v2037 = vsub.s32 32, %v2036
      %v2038 = vshll.u32 %v2029, %v2036
      %v2039 = vshrl.u32 %v2021, %v2037
      %v2040 = vor.u32 %v2038, %v2039
      %v2041 = vsub.s32 4294967266, %v2036
      %v2042 = vadd.s32 %v2041, 127
      %v2043 = vshll.u32 %v2042, 23
      %v2044 = vor.u32 4788187, %v2043
      %v2045 = vand.u32 2147483647, %v2044
      %v2047 = vcvt.s32.f32 %v2040
      %v2048 = vmul.f32 %v2047, %v2045
      %v2049 = vxor.u32 %v2048, 2147483648
      %v2050 = vsel %vm1967, %v2049, %v2048
      %v2051 = vsub.s32 4, %v2027
      %v2052 = vsel %vm1967, %v2051, %v2027
      %v2053 = vsel %vm1966, %v518, %v2050
      %v2054 = vsel %vm1966, 0, %v2052
      %v2055 = vcosq.f32.pop %v2053
      %v2056 = vsinq.f32.pop %v2053
      %vm2057 = vweird.f32 %v518
      %v2058 = vadd.s32 %v2054, 3
      %v2059 = vand.u32 %v2058, 3
      %vm2060 = vcmp.lt.s32.totalorder %v2059, 2
      %vm2061 = vcmp.eq.s32.totalorder %v2059, 0
      %v2062 = vxor.u32 %v2056, 2147483648
      %v2063 = vsel %vm2061, %v2055, %v2062
      %vm2064 = vcmp.eq.s32.totalorder %v2059, 2
      %v2065 = vxor.u32 %v2055, 2147483648
      %v2066 = vsel %vm2064, %v2065, %v2056
      %v2067 = vsel %vm2060, %v2063, %v2066
      %v2068 = vsel %vm2057, nan, %v2067
      %v2069 = vand.u32 2147483647, %v523
      %vm2070 = vcmp.le.f32.partialorder %v2069, 0.7853982
      %vm2071 = vcmp.lt.s32.totalorder %v523, 0
      %v2072 = vand.u32 %v523, 2139095040
      %v2073 = vshrl.u32 %v2072, 23
      %v2074 = vsub.s32 %v2073, 127
      %v2075 = vand.u32 2147483647, %v523
      %v2076 = vand.u32 %v2075, 8388607
      %v2077 = vor.u32 %v2076, 8388608
      %v2078 = vsub.s32 0, %v2077
      %v2079 = vadd.s32 %v2074, 1
      %vm2080 = vcmp.gt.s32.totalorder %v2079, 0
      %v2081 = vsel %vm2080, %v2079, 0
      %v2082 = vshrl.u32 %v2081, 5
      %v2083 = vand.u32 %v2081, 31
      %v2084 = vsub.s32 32, %v2083
      %v2085 = vshrl.u32 683565275, %v2084
      %v2086 = vshll.u32 683565275, %v2083
      %v2087 = vshrl.u32 2475754826, %v2084
      %v2088 = vor.u32 %v2086, %v2087
      %v2089 = vshll.u32 2475754826, %v2083
      %v2090 = vshrl.u32 2131351028, %v2084
      %v2091 = vor.u32 %v2089, %v2090
      %v2092 = vshll.u32 2131351028, %v2083
      %v2093 = vshrl.u32 2102212464, %v2084
      %v2094 = vor.u32 %v2092, %v2093
      %v2095 = vshll.u32 2102212464, %v2083
      %v2096 = vshrl.u32 920167782, %v2084
      %v2097 = vor.u32 %v2095, %v2096
      %v2098 = vshll.u32 920167782, %v2083
      %v2099 = vshrl.u32 1326507024, %v2084
      %v2100 = vor.u32 %v2098, %v2099
      %vm2101 = vcmp.lt.s32.totalorder %v2082, 1
      %vm2102 = vcmp.lt.s32.totalorder %v2082, 2
      %vm2103 = vcmp.lt.s32.totalorder %v2082, 3
      %vm2104 = vcmp.lt.s32.totalorder %v2082, 4
      %v2105 = vsel %vm2101, %v2085, %v2088
      %v2106 = vsel %vm2104, %v2094, 2102212464
      %v2107 = vsel %vm2103, %v2091, %v2106
      %v2108 = vsel %vm2102, %v2105, %v2107
      %v2109 = vsel %vm2101, %v2088, %v2091
      %v2110 = vsel %vm2104, %v2097, 920167782
      %v2111 = vsel %vm2103, %v2094, %v2110
      %v2112 = vsel %vm2102, %v2109, %v2111
      %v2113 = vsel %vm2101, %v2091, %v2094
      %v2114 = vsel %vm2104, %v2100, 1326507024
      %v2115 = vsel %vm2103, %v2097, %v2114
      %v2116 = vsel %vm2102, %v2113, %v2115
      %v2117 = vshll.u32 %v2077, 8
      %v2118 = vmul.u32.u64.compose %v2117, %v2116
      %v2119 = vextract.low.u32 %v2118
      %v2120 = vextract.high.u32 %v2118
      %v2121 = vmul.u32.u64.compose %v2117, %v2112
      %v2122 = vextract.low.u32 %v2121
      %v2123 = vextract.high.u32 %v2121
      %v2124 = vmul.u32 %v2117, %v2108
      %v2125 = vadd.s32 %v2120, %v2122
      %vm2126 = vc.u32 %v2120, %v2122
      %v2127 = vadd.s32 %v2123, 1
      %v2128 = vsel %vm2126, %v2127, %v2123
      %v2129 = vadd.s32 %v2124, %v2128
      %v2130 = vadd.s32 %v2129, 536870912
      %v2131 = vshrl.u32 %v2130, 30
      %v2132 = vshll.u32 %v2131, 30
      %v2133 = vsub.s32 %v2129, %v2132
      %vm2134 = vcmp.lt.s32.totalorder %v2133, 0
      %v2135 = vsub.s32 0, %v2133
      %v2136 = vsel %vm2134, %v2135, %v2133
      %v2137 = vclz %v2136
      %v2138 = vsub.s32 %v2137, 2
      %vm2139 = vcmp.gt.s32.totalorder 0, %v2138
      %v2140 = vsel %vm2139, 0, %v2138
      %v2141 = vsub.s32 32, %v2140
      %v2142 = vshll.u32 %v2133, %v2140
      %v2143 = vshrl.u32 %v2125, %v2141
      %v2144 = vor.u32 %v2142, %v2143
      %v2145 = vsub.s32 4294967266, %v2140
      %v2146 = vadd.s32 %v2145, 127
      %v2147 = vshll.u32 %v2146, 23
      %v2148 = vor.u32 4788187, %v2147
      %v2149 = vand.u32 2147483647, %v2148
      %v2151 = vcvt.s32.f32 %v2144
      %v2152 = vmul.f32 %v2151, %v2149
      %v2153 = vxor.u32 %v2152, 2147483648
      %v2154 = vsel %vm2071, %v2153, %v2152
      %v2155 = vsub.s32 4, %v2131
      %v2156 = vsel %vm2071, %v2155, %v2131
      %v2157 = vsel %vm2070, %v523, %v2154
      %v2158 = vsel %vm2070, 0, %v2156
      %v2159 = vcosq.f32.pop %v2157
      %v2160 = vsinq.f32.pop %v2157
      %vm2161 = vweird.f32 %v523
      %v2162 = vadd.s32 %v2158, 3
      %v2163 = vand.u32 %v2162, 3
      %vm2164 = vcmp.lt.s32.totalorder %v2163, 2
      %vm2165 = vcmp.eq.s32.totalorder %v2163, 0
      %v2166 = vxor.u32 %v2160, 2147483648
      %v2167 = vsel %vm2165, %v2159, %v2166
      %vm2168 = vcmp.eq.s32.totalorder %v2163, 2
      %v2169 = vxor.u32 %v2159, 2147483648
      %v2170 = vsel %vm2168, %v2169, %v2160
      %v2171 = vsel %vm2164, %v2167, %v2170
      %v2172 = vsel %vm2161, nan, %v2171
      %v2173 = vand.u32 2147483647, %v528
      %vm2174 = vcmp.le.f32.partialorder %v2173, 0.7853982
      %vm2175 = vcmp.lt.s32.totalorder %v528, 0
      %v2176 = vand.u32 %v528, 2139095040
      %v2177 = vshrl.u32 %v2176, 23
      %v2178 = vsub.s32 %v2177, 127
      %v2179 = vand.u32 2147483647, %v528
      %v2180 = vand.u32 %v2179, 8388607
      %v2181 = vor.u32 %v2180, 8388608
      %v2182 = vsub.s32 0, %v2181
      %v2183 = vadd.s32 %v2178, 1
      %vm2184 = vcmp.gt.s32.totalorder %v2183, 0
      %v2185 = vsel %vm2184, %v2183, 0
      %v2186 = vshrl.u32 %v2185, 5
      %v2187 = vand.u32 %v2185, 31
      %v2188 = vsub.s32 32, %v2187
      %v2189 = vshrl.u32 683565275, %v2188
      %v2190 = vshll.u32 683565275, %v2187
      %v2191 = vshrl.u32 2475754826, %v2188
      %v2192 = vor.u32 %v2190, %v2191
      %v2193 = vshll.u32 2475754826, %v2187
      %v2194 = vshrl.u32 2131351028, %v2188
      %v2195 = vor.u32 %v2193, %v2194
      %v2196 = vshll.u32 2131351028, %v2187
      %v2197 = vshrl.u32 2102212464, %v2188
      %v2198 = vor.u32 %v2196, %v2197
      %v2199 = vshll.u32 2102212464, %v2187
      %v2200 = vshrl.u32 920167782, %v2188
      %v2201 = vor.u32 %v2199, %v2200
      %v2202 = vshll.u32 920167782, %v2187
      %v2203 = vshrl.u32 1326507024, %v2188
      %v2204 = vor.u32 %v2202, %v2203
      %vm2205 = vcmp.lt.s32.totalorder %v2186, 1
      %vm2206 = vcmp.lt.s32.totalorder %v2186, 2
      %vm2207 = vcmp.lt.s32.totalorder %v2186, 3
      %vm2208 = vcmp.lt.s32.totalorder %v2186, 4
      %v2209 = vsel %vm2205, %v2189, %v2192
      %v2210 = vsel %vm2208, %v2198, 2102212464
      %v2211 = vsel %vm2207, %v2195, %v2210
      %v2212 = vsel %vm2206, %v2209, %v2211
      %v2213 = vsel %vm2205, %v2192, %v2195
      %v2214 = vsel %vm2208, %v2201, 920167782
      %v2215 = vsel %vm2207, %v2198, %v2214
      %v2216 = vsel %vm2206, %v2213, %v2215
      %v2217 = vsel %vm2205, %v2195, %v2198
      %v2218 = vsel %vm2208, %v2204, 1326507024
      %v2219 = vsel %vm2207, %v2201, %v2218
      %v2220 = vsel %vm2206, %v2217, %v2219
      %v2221 = vshll.u32 %v2181, 8
      %v2222 = vmul.u32.u64.compose %v2221, %v2220
      %v2223 = vextract.low.u32 %v2222
      %v2224 = vextract.high.u32 %v2222
      %v2225 = vmul.u32.u64.compose %v2221, %v2216
      %v2226 = vextract.low.u32 %v2225
      %v2227 = vextract.high.u32 %v2225
      %v2228 = vmul.u32 %v2221, %v2212
      %v2229 = vadd.s32 %v2224, %v2226
      %vm2230 = vc.u32 %v2224, %v2226
      %v2231 = vadd.s32 %v2227, 1
      %v2232 = vsel %vm2230, %v2231, %v2227
      %v2233 = vadd.s32 %v2228, %v2232
      %v2234 = vadd.s32 %v2233, 536870912
      %v2235 = vshrl.u32 %v2234, 30
      %v2236 = vshll.u32 %v2235, 30
      %v2237 = vsub.s32 %v2233, %v2236
      %vm2238 = vcmp.lt.s32.totalorder %v2237, 0
      %v2239 = vsub.s32 0, %v2237
      %v2240 = vsel %vm2238, %v2239, %v2237
      %v2241 = vclz %v2240
      %v2242 = vsub.s32 %v2241, 2
      %vm2243 = vcmp.gt.s32.totalorder 0, %v2242
      %v2244 = vsel %vm2243, 0, %v2242
      %v2245 = vsub.s32 32, %v2244
      %v2246 = vshll.u32 %v2237, %v2244
      %v2247 = vshrl.u32 %v2229, %v2245
      %v2248 = vor.u32 %v2246, %v2247
      %v2249 = vsub.s32 4294967266, %v2244
      %v2250 = vadd.s32 %v2249, 127
      %v2251 = vshll.u32 %v2250, 23
      %v2252 = vor.u32 4788187, %v2251
      %v2253 = vand.u32 2147483647, %v2252
      %v2255 = vcvt.s32.f32 %v2248
      %v2256 = vmul.f32 %v2255, %v2253
      %v2257 = vxor.u32 %v2256, 2147483648
      %v2258 = vsel %vm2175, %v2257, %v2256
      %v2259 = vsub.s32 4, %v2235
      %v2260 = vsel %vm2175, %v2259, %v2235
      %v2261 = vsel %vm2174, %v528, %v2258
      %v2262 = vsel %vm2174, 0, %v2260
      %v2263 = vcosq.f32.pop %v2261
      %v2264 = vsinq.f32.pop %v2261
      %vm2265 = vweird.f32 %v528
      %v2266 = vadd.s32 %v2262, 3
      %v2267 = vand.u32 %v2266, 3
      %vm2268 = vcmp.lt.s32.totalorder %v2267, 2
      %vm2269 = vcmp.eq.s32.totalorder %v2267, 0
      %v2270 = vxor.u32 %v2264, 2147483648
      %v2271 = vsel %vm2269, %v2263, %v2270
      %vm2272 = vcmp.eq.s32.totalorder %v2267, 2
      %v2273 = vxor.u32 %v2263, 2147483648
      %v2274 = vsel %vm2272, %v2273, %v2264
      %v2275 = vsel %vm2268, %v2271, %v2274
      %v2276 = vsel %vm2265, nan, %v2275
      %v2277 = vand.u32 2147483647, %v533
      %vm2278 = vcmp.le.f32.partialorder %v2277, 0.7853982
      %vm2279 = vcmp.lt.s32.totalorder %v533, 0
      %v2280 = vand.u32 %v533, 2139095040
      %v2281 = vshrl.u32 %v2280, 23
      %v2282 = vsub.s32 %v2281, 127
      %v2283 = vand.u32 2147483647, %v533
      %v2284 = vand.u32 %v2283, 8388607
      %v2285 = vor.u32 %v2284, 8388608
      %v2286 = vsub.s32 0, %v2285
      %v2287 = vadd.s32 %v2282, 1
      %vm2288 = vcmp.gt.s32.totalorder %v2287, 0
      %v2289 = vsel %vm2288, %v2287, 0
      %v2290 = vshrl.u32 %v2289, 5
      %v2291 = vand.u32 %v2289, 31
      %v2292 = vsub.s32 32, %v2291
      %v2293 = vshrl.u32 683565275, %v2292
      %v2294 = vshll.u32 683565275, %v2291
      %v2295 = vshrl.u32 2475754826, %v2292
      %v2296 = vor.u32 %v2294, %v2295
      %v2297 = vshll.u32 2475754826, %v2291
      %v2298 = vshrl.u32 2131351028, %v2292
      %v2299 = vor.u32 %v2297, %v2298
      %v2300 = vshll.u32 2131351028, %v2291
      %v2301 = vshrl.u32 2102212464, %v2292
      %v2302 = vor.u32 %v2300, %v2301
      %v2303 = vshll.u32 2102212464, %v2291
      %v2304 = vshrl.u32 920167782, %v2292
      %v2305 = vor.u32 %v2303, %v2304
      %v2306 = vshll.u32 920167782, %v2291
      %v2307 = vshrl.u32 1326507024, %v2292
      %v2308 = vor.u32 %v2306, %v2307
      %vm2309 = vcmp.lt.s32.totalorder %v2290, 1
      %vm2310 = vcmp.lt.s32.totalorder %v2290, 2
      %vm2311 = vcmp.lt.s32.totalorder %v2290, 3
      %vm2312 = vcmp.lt.s32.totalorder %v2290, 4
      %v2313 = vsel %vm2309, %v2293, %v2296
      %v2314 = vsel %vm2312, %v2302, 2102212464
      %v2315 = vsel %vm2311, %v2299, %v2314
      %v2316 = vsel %vm2310, %v2313, %v2315
      %v2317 = vsel %vm2309, %v2296, %v2299
      %v2318 = vsel %vm2312, %v2305, 920167782
      %v2319 = vsel %vm2311, %v2302, %v2318
      %v2320 = vsel %vm2310, %v2317, %v2319
      %v2321 = vsel %vm2309, %v2299, %v2302
      %v2322 = vsel %vm2312, %v2308, 1326507024
      %v2323 = vsel %vm2311, %v2305, %v2322
      %v2324 = vsel %vm2310, %v2321, %v2323
      %v2325 = vshll.u32 %v2285, 8
      %v2326 = vmul.u32.u64.compose %v2325, %v2324
      %v2327 = vextract.low.u32 %v2326
      %v2328 = vextract.high.u32 %v2326
      %v2329 = vmul.u32.u64.compose %v2325, %v2320
      %v2330 = vextract.low.u32 %v2329
      %v2331 = vextract.high.u32 %v2329
      %v2332 = vmul.u32 %v2325, %v2316
      %v2333 = vadd.s32 %v2328, %v2330
      %vm2334 = vc.u32 %v2328, %v2330
      %v2335 = vadd.s32 %v2331, 1
      %v2336 = vsel %vm2334, %v2335, %v2331
      %v2337 = vadd.s32 %v2332, %v2336
      %v2338 = vadd.s32 %v2337, 536870912
      %v2339 = vshrl.u32 %v2338, 30
      %v2340 = vshll.u32 %v2339, 30
      %v2341 = vsub.s32 %v2337, %v2340
      %vm2342 = vcmp.lt.s32.totalorder %v2341, 0
      %v2343 = vsub.s32 0, %v2341
      %v2344 = vsel %vm2342, %v2343, %v2341
      %v2345 = vclz %v2344
      %v2346 = vsub.s32 %v2345, 2
      %vm2347 = vcmp.gt.s32.totalorder 0, %v2346
      %v2348 = vsel %vm2347, 0, %v2346
      %v2349 = vsub.s32 32, %v2348
      %v2350 = vshll.u32 %v2341, %v2348
      %v2351 = vshrl.u32 %v2333, %v2349
      %v2352 = vor.u32 %v2350, %v2351
      %v2353 = vsub.s32 4294967266, %v2348
      %v2354 = vadd.s32 %v2353, 127
      %v2355 = vshll.u32 %v2354, 23
      %v2356 = vor.u32 4788187, %v2355
      %v2357 = vand.u32 2147483647, %v2356
      %v2359 = vcvt.s32.f32 %v2352
      %v2360 = vmul.f32 %v2359, %v2357
      %v2361 = vxor.u32 %v2360, 2147483648
      %v2362 = vsel %vm2279, %v2361, %v2360
      %v2363 = vsub.s32 4, %v2339
      %v2364 = vsel %vm2279, %v2363, %v2339
      %v2365 = vsel %vm2278, %v533, %v2362
      %v2366 = vsel %vm2278, 0, %v2364
      %v2367 = vcosq.f32.pop %v2365
      %v2368 = vsinq.f32.pop %v2365
      %vm2369 = vweird.f32 %v533
      %v2370 = vadd.s32 %v2366, 3
      %v2371 = vand.u32 %v2370, 3
      %vm2372 = vcmp.lt.s32.totalorder %v2371, 2
      %vm2373 = vcmp.eq.s32.totalorder %v2371, 0
      %v2374 = vxor.u32 %v2368, 2147483648
      %v2375 = vsel %vm2373, %v2367, %v2374
      %vm2376 = vcmp.eq.s32.totalorder %v2371, 2
      %v2377 = vxor.u32 %v2367, 2147483648
      %v2378 = vsel %vm2376, %v2377, %v2368
      %v2379 = vsel %vm2372, %v2375, %v2378
      %v2380 = vsel %vm2369, nan, %v2379
      %v2381 = vand.u32 2147483647, %v538
      %vm2382 = vcmp.le.f32.partialorder %v2381, 0.7853982
      %vm2383 = vcmp.lt.s32.totalorder %v538, 0
      %v2384 = vand.u32 %v538, 2139095040
      %v2385 = vshrl.u32 %v2384, 23
      %v2386 = vsub.s32 %v2385, 127
      %v2387 = vand.u32 2147483647, %v538
      %v2388 = vand.u32 %v2387, 8388607
      %v2389 = vor.u32 %v2388, 8388608
      %v2390 = vsub.s32 0, %v2389
      %v2391 = vadd.s32 %v2386, 1
      %vm2392 = vcmp.gt.s32.totalorder %v2391, 0
      %v2393 = vsel %vm2392, %v2391, 0
      %v2394 = vshrl.u32 %v2393, 5
      %v2395 = vand.u32 %v2393, 31
      %v2396 = vsub.s32 32, %v2395
      %v2397 = vshrl.u32 683565275, %v2396
      %v2398 = vshll.u32 683565275, %v2395
      %v2399 = vshrl.u32 2475754826, %v2396
      %v2400 = vor.u32 %v2398, %v2399
      %v2401 = vshll.u32 2475754826, %v2395
      %v2402 = vshrl.u32 2131351028, %v2396
      %v2403 = vor.u32 %v2401, %v2402
      %v2404 = vshll.u32 2131351028, %v2395
      %v2405 = vshrl.u32 2102212464, %v2396
      %v2406 = vor.u32 %v2404, %v2405
      %v2407 = vshll.u32 2102212464, %v2395
      %v2408 = vshrl.u32 920167782, %v2396
      %v2409 = vor.u32 %v2407, %v2408
      %v2410 = vshll.u32 920167782, %v2395
      %v2411 = vshrl.u32 1326507024, %v2396
      %v2412 = vor.u32 %v2410, %v2411
      %vm2413 = vcmp.lt.s32.totalorder %v2394, 1
      %vm2414 = vcmp.lt.s32.totalorder %v2394, 2
      %vm2415 = vcmp.lt.s32.totalorder %v2394, 3
      %vm2416 = vcmp.lt.s32.totalorder %v2394, 4
      %v2417 = vsel %vm2413, %v2397, %v2400
      %v2418 = vsel %vm2416, %v2406, 2102212464
      %v2419 = vsel %vm2415, %v2403, %v2418
      %v2420 = vsel %vm2414, %v2417, %v2419
      %v2421 = vsel %vm2413, %v2400, %v2403
      %v2422 = vsel %vm2416, %v2409, 920167782
      %v2423 = vsel %vm2415, %v2406, %v2422
      %v2424 = vsel %vm2414, %v2421, %v2423
      %v2425 = vsel %vm2413, %v2403, %v2406
      %v2426 = vsel %vm2416, %v2412, 1326507024
      %v2427 = vsel %vm2415, %v2409, %v2426
      %v2428 = vsel %vm2414, %v2425, %v2427
      %v2429 = vshll.u32 %v2389, 8
      %v2430 = vmul.u32.u64.compose %v2429, %v2428
      %v2431 = vextract.low.u32 %v2430
      %v2432 = vextract.high.u32 %v2430
      %v2433 = vmul.u32.u64.compose %v2429, %v2424
      %v2434 = vextract.low.u32 %v2433
      %v2435 = vextract.high.u32 %v2433
      %v2436 = vmul.u32 %v2429, %v2420
      %v2437 = vadd.s32 %v2432, %v2434
      %vm2438 = vc.u32 %v2432, %v2434
      %v2439 = vadd.s32 %v2435, 1
      %v2440 = vsel %vm2438, %v2439, %v2435
      %v2441 = vadd.s32 %v2436, %v2440
      %v2442 = vadd.s32 %v2441, 536870912
      %v2443 = vshrl.u32 %v2442, 30
      %v2444 = vshll.u32 %v2443, 30
      %v2445 = vsub.s32 %v2441, %v2444
      %vm2446 = vcmp.lt.s32.totalorder %v2445, 0
      %v2447 = vsub.s32 0, %v2445
      %v2448 = vsel %vm2446, %v2447, %v2445
      %v2449 = vclz %v2448
      %v2450 = vsub.s32 %v2449, 2
      %vm2451 = vcmp.gt.s32.totalorder 0, %v2450
      %v2452 = vsel %vm2451, 0, %v2450
      %v2453 = vsub.s32 32, %v2452
      %v2454 = vshll.u32 %v2445, %v2452
      %v2455 = vshrl.u32 %v2437, %v2453
      %v2456 = vor.u32 %v2454, %v2455
      %v2457 = vsub.s32 4294967266, %v2452
      %v2458 = vadd.s32 %v2457, 127
      %v2459 = vshll.u32 %v2458, 23
      %v2460 = vor.u32 4788187, %v2459
      %v2461 = vand.u32 2147483647, %v2460
      %v2463 = vcvt.s32.f32 %v2456
      %v2464 = vmul.f32 %v2463, %v2461
      %v2465 = vxor.u32 %v2464, 2147483648
      %v2466 = vsel %vm2383, %v2465, %v2464
      %v2467 = vsub.s32 4, %v2443
      %v2468 = vsel %vm2383, %v2467, %v2443
      %v2469 = vsel %vm2382, %v538, %v2466
      %v2470 = vsel %vm2382, 0, %v2468
      %v2471 = vcosq.f32.pop %v2469
      %v2472 = vsinq.f32.pop %v2469
      %vm2473 = vweird.f32 %v538
      %v2474 = vadd.s32 %v2470, 3
      %v2475 = vand.u32 %v2474, 3
      %vm2476 = vcmp.lt.s32.totalorder %v2475, 2
      %vm2477 = vcmp.eq.s32.totalorder %v2475, 0
      %v2478 = vxor.u32 %v2472, 2147483648
      %v2479 = vsel %vm2477, %v2471, %v2478
      %vm2480 = vcmp.eq.s32.totalorder %v2475, 2
      %v2481 = vxor.u32 %v2471, 2147483648
      %v2482 = vsel %vm2480, %v2481, %v2472
      %v2483 = vsel %vm2476, %v2479, %v2482
      %v2484 = vsel %vm2473, nan, %v2483
      %v2485 = vand.u32 2147483647, %v543
      %vm2486 = vcmp.le.f32.partialorder %v2485, 0.7853982
      %vm2487 = vcmp.lt.s32.totalorder %v543, 0
      %v2488 = vand.u32 %v543, 2139095040
      %v2489 = vshrl.u32 %v2488, 23
      %v2490 = vsub.s32 %v2489, 127
      %v2491 = vand.u32 2147483647, %v543
      %v2492 = vand.u32 %v2491, 8388607
      %v2493 = vor.u32 %v2492, 8388608
      %v2494 = vsub.s32 0, %v2493
      %v2495 = vadd.s32 %v2490, 1
      %vm2496 = vcmp.gt.s32.totalorder %v2495, 0
      %v2497 = vsel %vm2496, %v2495, 0
      %v2498 = vshrl.u32 %v2497, 5
      %v2499 = vand.u32 %v2497, 31
      %v2500 = vsub.s32 32, %v2499
      %v2501 = vshrl.u32 683565275, %v2500
      %v2502 = vshll.u32 683565275, %v2499
      %v2503 = vshrl.u32 2475754826, %v2500
      %v2504 = vor.u32 %v2502, %v2503
      %v2505 = vshll.u32 2475754826, %v2499
      %v2506 = vshrl.u32 2131351028, %v2500
      %v2507 = vor.u32 %v2505, %v2506
      %v2508 = vshll.u32 2131351028, %v2499
      %v2509 = vshrl.u32 2102212464, %v2500
      %v2510 = vor.u32 %v2508, %v2509
      %v2511 = vshll.u32 2102212464, %v2499
      %v2512 = vshrl.u32 920167782, %v2500
      %v2513 = vor.u32 %v2511, %v2512
      %v2514 = vshll.u32 920167782, %v2499
      %v2515 = vshrl.u32 1326507024, %v2500
      %v2516 = vor.u32 %v2514, %v2515
      %vm2517 = vcmp.lt.s32.totalorder %v2498, 1
      %vm2518 = vcmp.lt.s32.totalorder %v2498, 2
      %vm2519 = vcmp.lt.s32.totalorder %v2498, 3
      %vm2520 = vcmp.lt.s32.totalorder %v2498, 4
      %v2521 = vsel %vm2517, %v2501, %v2504
      %v2522 = vsel %vm2520, %v2510, 2102212464
      %v2523 = vsel %vm2519, %v2507, %v2522
      %v2524 = vsel %vm2518, %v2521, %v2523
      %v2525 = vsel %vm2517, %v2504, %v2507
      %v2526 = vsel %vm2520, %v2513, 920167782
      %v2527 = vsel %vm2519, %v2510, %v2526
      %v2528 = vsel %vm2518, %v2525, %v2527
      %v2529 = vsel %vm2517, %v2507, %v2510
      %v2530 = vsel %vm2520, %v2516, 1326507024
      %v2531 = vsel %vm2519, %v2513, %v2530
      %v2532 = vsel %vm2518, %v2529, %v2531
      %v2533 = vshll.u32 %v2493, 8
      %v2534 = vmul.u32.u64.compose %v2533, %v2532
      %v2535 = vextract.low.u32 %v2534
      %v2536 = vextract.high.u32 %v2534
      %v2537 = vmul.u32.u64.compose %v2533, %v2528
      %v2538 = vextract.low.u32 %v2537
      %v2539 = vextract.high.u32 %v2537
      %v2540 = vmul.u32 %v2533, %v2524
      %v2541 = vadd.s32 %v2536, %v2538
      %vm2542 = vc.u32 %v2536, %v2538
      %v2543 = vadd.s32 %v2539, 1
      %v2544 = vsel %vm2542, %v2543, %v2539
      %v2545 = vadd.s32 %v2540, %v2544
      %v2546 = vadd.s32 %v2545, 536870912
      %v2547 = vshrl.u32 %v2546, 30
      %v2548 = vshll.u32 %v2547, 30
      %v2549 = vsub.s32 %v2545, %v2548
      %vm2550 = vcmp.lt.s32.totalorder %v2549, 0
      %v2551 = vsub.s32 0, %v2549
      %v2552 = vsel %vm2550, %v2551, %v2549
      %v2553 = vclz %v2552
      %v2554 = vsub.s32 %v2553, 2
      %vm2555 = vcmp.gt.s32.totalorder 0, %v2554
      %v2556 = vsel %vm2555, 0, %v2554
      %v2557 = vsub.s32 32, %v2556
      %v2558 = vshll.u32 %v2549, %v2556
      %v2559 = vshrl.u32 %v2541, %v2557
      %v2560 = vor.u32 %v2558, %v2559
      %v2561 = vsub.s32 4294967266, %v2556
      %v2562 = vadd.s32 %v2561, 127
      %v2563 = vshll.u32 %v2562, 23
      %v2564 = vor.u32 4788187, %v2563
      %v2565 = vand.u32 2147483647, %v2564
      %v2567 = vcvt.s32.f32 %v2560
      %v2568 = vmul.f32 %v2567, %v2565
      %v2569 = vxor.u32 %v2568, 2147483648
      %v2570 = vsel %vm2487, %v2569, %v2568
      %v2571 = vsub.s32 4, %v2547
      %v2572 = vsel %vm2487, %v2571, %v2547
      %v2573 = vsel %vm2486, %v543, %v2570
      %v2574 = vsel %vm2486, 0, %v2572
      %v2575 = vcosq.f32.pop %v2573
      %v2576 = vsinq.f32.pop %v2573
      %vm2577 = vweird.f32 %v543
      %v2578 = vadd.s32 %v2574, 3
      %v2579 = vand.u32 %v2578, 3
      %vm2580 = vcmp.lt.s32.totalorder %v2579, 2
      %vm2581 = vcmp.eq.s32.totalorder %v2579, 0
      %v2582 = vxor.u32 %v2576, 2147483648
      %v2583 = vsel %vm2581, %v2575, %v2582
      %vm2584 = vcmp.eq.s32.totalorder %v2579, 2
      %v2585 = vxor.u32 %v2575, 2147483648
      %v2586 = vsel %vm2584, %v2585, %v2576
      %v2587 = vsel %vm2580, %v2583, %v2586
      %v2588 = vsel %vm2577, nan, %v2587
      %v2589 = vand.u32 2147483647, %v548
      %vm2590 = vcmp.le.f32.partialorder %v2589, 0.7853982
      %vm2591 = vcmp.lt.s32.totalorder %v548, 0
      %v2592 = vand.u32 %v548, 2139095040
      %v2593 = vshrl.u32 %v2592, 23
      %v2594 = vsub.s32 %v2593, 127
      %v2595 = vand.u32 2147483647, %v548
      %v2596 = vand.u32 %v2595, 8388607
      %v2597 = vor.u32 %v2596, 8388608
      %v2598 = vsub.s32 0, %v2597
      %v2599 = vadd.s32 %v2594, 1
      %vm2600 = vcmp.gt.s32.totalorder %v2599, 0
      %v2601 = vsel %vm2600, %v2599, 0
      %v2602 = vshrl.u32 %v2601, 5
      %v2603 = vand.u32 %v2601, 31
      %v2604 = vsub.s32 32, %v2603
      %v2605 = vshrl.u32 683565275, %v2604
      %v2606 = vshll.u32 683565275, %v2603
      %v2607 = vshrl.u32 2475754826, %v2604
      %v2608 = vor.u32 %v2606, %v2607
      %v2609 = vshll.u32 2475754826, %v2603
      %v2610 = vshrl.u32 2131351028, %v2604
      %v2611 = vor.u32 %v2609, %v2610
      %v2612 = vshll.u32 2131351028, %v2603
      %v2613 = vshrl.u32 2102212464, %v2604
      %v2614 = vor.u32 %v2612, %v2613
      %v2615 = vshll.u32 2102212464, %v2603
      %v2616 = vshrl.u32 920167782, %v2604
      %v2617 = vor.u32 %v2615, %v2616
      %v2618 = vshll.u32 920167782, %v2603
      %v2619 = vshrl.u32 1326507024, %v2604
      %v2620 = vor.u32 %v2618, %v2619
      %vm2621 = vcmp.lt.s32.totalorder %v2602, 1
      %vm2622 = vcmp.lt.s32.totalorder %v2602, 2
      %vm2623 = vcmp.lt.s32.totalorder %v2602, 3
      %vm2624 = vcmp.lt.s32.totalorder %v2602, 4
      %v2625 = vsel %vm2621, %v2605, %v2608
      %v2626 = vsel %vm2624, %v2614, 2102212464
      %v2627 = vsel %vm2623, %v2611, %v2626
      %v2628 = vsel %vm2622, %v2625, %v2627
      %v2629 = vsel %vm2621, %v2608, %v2611
      %v2630 = vsel %vm2624, %v2617, 920167782
      %v2631 = vsel %vm2623, %v2614, %v2630
      %v2632 = vsel %vm2622, %v2629, %v2631
      %v2633 = vsel %vm2621, %v2611, %v2614
      %v2634 = vsel %vm2624, %v2620, 1326507024
      %v2635 = vsel %vm2623, %v2617, %v2634
      %v2636 = vsel %vm2622, %v2633, %v2635
      %v2637 = vshll.u32 %v2597, 8
      %v2638 = vmul.u32.u64.compose %v2637, %v2636
      %v2639 = vextract.low.u32 %v2638
      %v2640 = vextract.high.u32 %v2638
      %v2641 = vmul.u32.u64.compose %v2637, %v2632
      %v2642 = vextract.low.u32 %v2641
      %v2643 = vextract.high.u32 %v2641
      %v2644 = vmul.u32 %v2637, %v2628
      %v2645 = vadd.s32 %v2640, %v2642
      %vm2646 = vc.u32 %v2640, %v2642
      %v2647 = vadd.s32 %v2643, 1
      %v2648 = vsel %vm2646, %v2647, %v2643
      %v2649 = vadd.s32 %v2644, %v2648
      %v2650 = vadd.s32 %v2649, 536870912
      %v2651 = vshrl.u32 %v2650, 30
      %v2652 = vshll.u32 %v2651, 30
      %v2653 = vsub.s32 %v2649, %v2652
      %vm2654 = vcmp.lt.s32.totalorder %v2653, 0
      %v2655 = vsub.s32 0, %v2653
      %v2656 = vsel %vm2654, %v2655, %v2653
      %v2657 = vclz %v2656
      %v2658 = vsub.s32 %v2657, 2
      %vm2659 = vcmp.gt.s32.totalorder 0, %v2658
      %v2660 = vsel %vm2659, 0, %v2658
      %v2661 = vsub.s32 32, %v2660
      %v2662 = vshll.u32 %v2653, %v2660
      %v2663 = vshrl.u32 %v2645, %v2661
      %v2664 = vor.u32 %v2662, %v2663
      %v2665 = vsub.s32 4294967266, %v2660
      %v2666 = vadd.s32 %v2665, 127
      %v2667 = vshll.u32 %v2666, 23
      %v2668 = vor.u32 4788187, %v2667
      %v2669 = vand.u32 2147483647, %v2668
      %v2671 = vcvt.s32.f32 %v2664
      %v2672 = vmul.f32 %v2671, %v2669
      %v2673 = vxor.u32 %v2672, 2147483648
      %v2674 = vsel %vm2591, %v2673, %v2672
      %v2675 = vsub.s32 4, %v2651
      %v2676 = vsel %vm2591, %v2675, %v2651
      %v2677 = vsel %vm2590, %v548, %v2674
      %v2678 = vsel %vm2590, 0, %v2676
      %v2679 = vcosq.f32.pop %v2677
      %v2680 = vsinq.f32.pop %v2677
      %vm2681 = vweird.f32 %v548
      %v2682 = vadd.s32 %v2678, 3
      %v2683 = vand.u32 %v2682, 3
      %vm2684 = vcmp.lt.s32.totalorder %v2683, 2
      %vm2685 = vcmp.eq.s32.totalorder %v2683, 0
      %v2686 = vxor.u32 %v2680, 2147483648
      %v2687 = vsel %vm2685, %v2679, %v2686
      %vm2688 = vcmp.eq.s32.totalorder %v2683, 2
      %v2689 = vxor.u32 %v2679, 2147483648
      %v2690 = vsel %vm2688, %v2689, %v2680
      %v2691 = vsel %vm2684, %v2687, %v2690
      %v2692 = vsel %vm2681, nan, %v2691
      %v2693 = vand.u32 2147483647, %v553
      %vm2694 = vcmp.le.f32.partialorder %v2693, 0.7853982
      %vm2695 = vcmp.lt.s32.totalorder %v553, 0
      %v2696 = vand.u32 %v553, 2139095040
      %v2697 = vshrl.u32 %v2696, 23
      %v2698 = vsub.s32 %v2697, 127
      %v2699 = vand.u32 2147483647, %v553
      %v2700 = vand.u32 %v2699, 8388607
      %v2701 = vor.u32 %v2700, 8388608
      %v2702 = vsub.s32 0, %v2701
      %v2703 = vadd.s32 %v2698, 1
      %vm2704 = vcmp.gt.s32.totalorder %v2703, 0
      %v2705 = vsel %vm2704, %v2703, 0
      %v2706 = vshrl.u32 %v2705, 5
      %v2707 = vand.u32 %v2705, 31
      %v2708 = vsub.s32 32, %v2707
      %v2709 = vshrl.u32 683565275, %v2708
      %v2710 = vshll.u32 683565275, %v2707
      %v2711 = vshrl.u32 2475754826, %v2708
      %v2712 = vor.u32 %v2710, %v2711
      %v2713 = vshll.u32 2475754826, %v2707
      %v2714 = vshrl.u32 2131351028, %v2708
      %v2715 = vor.u32 %v2713, %v2714
      %v2716 = vshll.u32 2131351028, %v2707
      %v2717 = vshrl.u32 2102212464, %v2708
      %v2718 = vor.u32 %v2716, %v2717
      %v2719 = vshll.u32 2102212464, %v2707
      %v2720 = vshrl.u32 920167782, %v2708
      %v2721 = vor.u32 %v2719, %v2720
      %v2722 = vshll.u32 920167782, %v2707
      %v2723 = vshrl.u32 1326507024, %v2708
      %v2724 = vor.u32 %v2722, %v2723
      %vm2725 = vcmp.lt.s32.totalorder %v2706, 1
      %vm2726 = vcmp.lt.s32.totalorder %v2706, 2
      %vm2727 = vcmp.lt.s32.totalorder %v2706, 3
      %vm2728 = vcmp.lt.s32.totalorder %v2706, 4
      %v2729 = vsel %vm2725, %v2709, %v2712
      %v2730 = vsel %vm2728, %v2718, 2102212464
      %v2731 = vsel %vm2727, %v2715, %v2730
      %v2732 = vsel %vm2726, %v2729, %v2731
      %v2733 = vsel %vm2725, %v2712, %v2715
      %v2734 = vsel %vm2728, %v2721, 920167782
      %v2735 = vsel %vm2727, %v2718, %v2734
      %v2736 = vsel %vm2726, %v2733, %v2735
      %v2737 = vsel %vm2725, %v2715, %v2718
      %v2738 = vsel %vm2728, %v2724, 1326507024
      %v2739 = vsel %vm2727, %v2721, %v2738
      %v2740 = vsel %vm2726, %v2737, %v2739
      %v2741 = vshll.u32 %v2701, 8
      %v2742 = vmul.u32.u64.compose %v2741, %v2740
      %v2743 = vextract.low.u32 %v2742
      %v2744 = vextract.high.u32 %v2742
      %v2745 = vmul.u32.u64.compose %v2741, %v2736
      %v2746 = vextract.low.u32 %v2745
      %v2747 = vextract.high.u32 %v2745
      %v2748 = vmul.u32 %v2741, %v2732
      %v2749 = vadd.s32 %v2744, %v2746
      %vm2750 = vc.u32 %v2744, %v2746
      %v2751 = vadd.s32 %v2747, 1
      %v2752 = vsel %vm2750, %v2751, %v2747
      %v2753 = vadd.s32 %v2748, %v2752
      %v2754 = vadd.s32 %v2753, 536870912
      %v2755 = vshrl.u32 %v2754, 30
      %v2756 = vshll.u32 %v2755, 30
      %v2757 = vsub.s32 %v2753, %v2756
      %vm2758 = vcmp.lt.s32.totalorder %v2757, 0
      %v2759 = vsub.s32 0, %v2757
      %v2760 = vsel %vm2758, %v2759, %v2757
      %v2761 = vclz %v2760
      %v2762 = vsub.s32 %v2761, 2
      %vm2763 = vcmp.gt.s32.totalorder 0, %v2762
      %v2764 = vsel %vm2763, 0, %v2762
      %v2765 = vsub.s32 32, %v2764
      %v2766 = vshll.u32 %v2757, %v2764
      %v2767 = vshrl.u32 %v2749, %v2765
      %v2768 = vor.u32 %v2766, %v2767
      %v2769 = vsub.s32 4294967266, %v2764
      %v2770 = vadd.s32 %v2769, 127
      %v2771 = vshll.u32 %v2770, 23
      %v2772 = vor.u32 4788187, %v2771
      %v2773 = vand.u32 2147483647, %v2772
      %v2775 = vcvt.s32.f32 %v2768
      %v2776 = vmul.f32 %v2775, %v2773
      %v2777 = vxor.u32 %v2776, 2147483648
      %v2778 = vsel %vm2695, %v2777, %v2776
      %v2779 = vsub.s32 4, %v2755
      %v2780 = vsel %vm2695, %v2779, %v2755
      %v2781 = vsel %vm2694, %v553, %v2778
      %v2782 = vsel %vm2694, 0, %v2780
      %v2783 = vcosq.f32.pop %v2781
      %v2784 = vsinq.f32.pop %v2781
      %vm2785 = vweird.f32 %v553
      %v2786 = vadd.s32 %v2782, 3
      %v2787 = vand.u32 %v2786, 3
      %vm2788 = vcmp.lt.s32.totalorder %v2787, 2
      %vm2789 = vcmp.eq.s32.totalorder %v2787, 0
      %v2790 = vxor.u32 %v2784, 2147483648
      %v2791 = vsel %vm2789, %v2783, %v2790
      %vm2792 = vcmp.eq.s32.totalorder %v2787, 2
      %v2793 = vxor.u32 %v2783, 2147483648
      %v2794 = vsel %vm2792, %v2793, %v2784
      %v2795 = vsel %vm2788, %v2791, %v2794
      %v2796 = vsel %vm2785, nan, %v2795
      %v2797 = vand.u32 2147483647, %v558
      %vm2798 = vcmp.le.f32.partialorder %v2797, 0.7853982
      %vm2799 = vcmp.lt.s32.totalorder %v558, 0
      %v2800 = vand.u32 %v558, 2139095040
      %v2801 = vshrl.u32 %v2800, 23
      %v2802 = vsub.s32 %v2801, 127
      %v2803 = vand.u32 2147483647, %v558
      %v2804 = vand.u32 %v2803, 8388607
      %v2805 = vor.u32 %v2804, 8388608
      %v2806 = vsub.s32 0, %v2805
      %v2807 = vadd.s32 %v2802, 1
      %vm2808 = vcmp.gt.s32.totalorder %v2807, 0
      %v2809 = vsel %vm2808, %v2807, 0
      %v2810 = vshrl.u32 %v2809, 5
      %v2811 = vand.u32 %v2809, 31
      %v2812 = vsub.s32 32, %v2811
      %v2813 = vshrl.u32 683565275, %v2812
      %v2814 = vshll.u32 683565275, %v2811
      %v2815 = vshrl.u32 2475754826, %v2812
      %v2816 = vor.u32 %v2814, %v2815
      %v2817 = vshll.u32 2475754826, %v2811
      %v2818 = vshrl.u32 2131351028, %v2812
      %v2819 = vor.u32 %v2817, %v2818
      %v2820 = vshll.u32 2131351028, %v2811
      %v2821 = vshrl.u32 2102212464, %v2812
      %v2822 = vor.u32 %v2820, %v2821
      %v2823 = vshll.u32 2102212464, %v2811
      %v2824 = vshrl.u32 920167782, %v2812
      %v2825 = vor.u32 %v2823, %v2824
      %v2826 = vshll.u32 920167782, %v2811
      %v2827 = vshrl.u32 1326507024, %v2812
      %v2828 = vor.u32 %v2826, %v2827
      %vm2829 = vcmp.lt.s32.totalorder %v2810, 1
      %vm2830 = vcmp.lt.s32.totalorder %v2810, 2
      %vm2831 = vcmp.lt.s32.totalorder %v2810, 3
      %vm2832 = vcmp.lt.s32.totalorder %v2810, 4
      %v2833 = vsel %vm2829, %v2813, %v2816
      %v2834 = vsel %vm2832, %v2822, 2102212464
      %v2835 = vsel %vm2831, %v2819, %v2834
      %v2836 = vsel %vm2830, %v2833, %v2835
      %v2837 = vsel %vm2829, %v2816, %v2819
      %v2838 = vsel %vm2832, %v2825, 920167782
      %v2839 = vsel %vm2831, %v2822, %v2838
      %v2840 = vsel %vm2830, %v2837, %v2839
      %v2841 = vsel %vm2829, %v2819, %v2822
      %v2842 = vsel %vm2832, %v2828, 1326507024
      %v2843 = vsel %vm2831, %v2825, %v2842
      %v2844 = vsel %vm2830, %v2841, %v2843
      %v2845 = vshll.u32 %v2805, 8
      %v2846 = vmul.u32.u64.compose %v2845, %v2844
      %v2847 = vextract.low.u32 %v2846
      %v2848 = vextract.high.u32 %v2846
      %v2849 = vmul.u32.u64.compose %v2845, %v2840
      %v2850 = vextract.low.u32 %v2849
      %v2851 = vextract.high.u32 %v2849
      %v2852 = vmul.u32 %v2845, %v2836
      %v2853 = vadd.s32 %v2848, %v2850
      %vm2854 = vc.u32 %v2848, %v2850
      %v2855 = vadd.s32 %v2851, 1
      %v2856 = vsel %vm2854, %v2855, %v2851
      %v2857 = vadd.s32 %v2852, %v2856
      %v2858 = vadd.s32 %v2857, 536870912
      %v2859 = vshrl.u32 %v2858, 30
      %v2860 = vshll.u32 %v2859, 30
      %v2861 = vsub.s32 %v2857, %v2860
      %vm2862 = vcmp.lt.s32.totalorder %v2861, 0
      %v2863 = vsub.s32 0, %v2861
      %v2864 = vsel %vm2862, %v2863, %v2861
      %v2865 = vclz %v2864
      %v2866 = vsub.s32 %v2865, 2
      %vm2867 = vcmp.gt.s32.totalorder 0, %v2866
      %v2868 = vsel %vm2867, 0, %v2866
      %v2869 = vsub.s32 32, %v2868
      %v2870 = vshll.u32 %v2861, %v2868
      %v2871 = vshrl.u32 %v2853, %v2869
      %v2872 = vor.u32 %v2870, %v2871
      %v2873 = vsub.s32 4294967266, %v2868
      %v2874 = vadd.s32 %v2873, 127
      %v2875 = vshll.u32 %v2874, 23
      %v2876 = vor.u32 4788187, %v2875
      %v2877 = vand.u32 2147483647, %v2876
      %v2879 = vcvt.s32.f32 %v2872
      %v2880 = vmul.f32 %v2879, %v2877
      %v2881 = vxor.u32 %v2880, 2147483648
      %v2882 = vsel %vm2799, %v2881, %v2880
      %v2883 = vsub.s32 4, %v2859
      %v2884 = vsel %vm2799, %v2883, %v2859
      %v2885 = vsel %vm2798, %v558, %v2882
      %v2886 = vsel %vm2798, 0, %v2884
      %v2887 = vcosq.f32.pop %v2885
      %v2888 = vsinq.f32.pop %v2885
      %vm2889 = vweird.f32 %v558
      %v2890 = vadd.s32 %v2886, 3
      %v2891 = vand.u32 %v2890, 3
      %vm2892 = vcmp.lt.s32.totalorder %v2891, 2
      %vm2893 = vcmp.eq.s32.totalorder %v2891, 0
      %v2894 = vxor.u32 %v2888, 2147483648
      %v2895 = vsel %vm2893, %v2887, %v2894
      %vm2896 = vcmp.eq.s32.totalorder %v2891, 2
      %v2897 = vxor.u32 %v2887, 2147483648
      %v2898 = vsel %vm2896, %v2897, %v2888
      %v2899 = vsel %vm2892, %v2895, %v2898
      %v2900 = vsel %vm2889, nan, %v2899
      %v2901 = vand.u32 2147483647, %v563
      %vm2902 = vcmp.le.f32.partialorder %v2901, 0.7853982
      %vm2903 = vcmp.lt.s32.totalorder %v563, 0
      %v2904 = vand.u32 %v563, 2139095040
      %v2905 = vshrl.u32 %v2904, 23
      %v2906 = vsub.s32 %v2905, 127
      %v2907 = vand.u32 2147483647, %v563
      %v2908 = vand.u32 %v2907, 8388607
      %v2909 = vor.u32 %v2908, 8388608
      %v2910 = vsub.s32 0, %v2909
      %v2911 = vadd.s32 %v2906, 1
      %vm2912 = vcmp.gt.s32.totalorder %v2911, 0
      %v2913 = vsel %vm2912, %v2911, 0
      %v2914 = vshrl.u32 %v2913, 5
      %v2915 = vand.u32 %v2913, 31
      %v2916 = vsub.s32 32, %v2915
      %v2917 = vshrl.u32 683565275, %v2916
      %v2918 = vshll.u32 683565275, %v2915
      %v2919 = vshrl.u32 2475754826, %v2916
      %v2920 = vor.u32 %v2918, %v2919
      %v2921 = vshll.u32 2475754826, %v2915
      %v2922 = vshrl.u32 2131351028, %v2916
      %v2923 = vor.u32 %v2921, %v2922
      %v2924 = vshll.u32 2131351028, %v2915
      %v2925 = vshrl.u32 2102212464, %v2916
      %v2926 = vor.u32 %v2924, %v2925
      %v2927 = vshll.u32 2102212464, %v2915
      %v2928 = vshrl.u32 920167782, %v2916
      %v2929 = vor.u32 %v2927, %v2928
      %v2930 = vshll.u32 920167782, %v2915
      %v2931 = vshrl.u32 1326507024, %v2916
      %v2932 = vor.u32 %v2930, %v2931
      %vm2933 = vcmp.lt.s32.totalorder %v2914, 1
      %vm2934 = vcmp.lt.s32.totalorder %v2914, 2
      %vm2935 = vcmp.lt.s32.totalorder %v2914, 3
      %vm2936 = vcmp.lt.s32.totalorder %v2914, 4
      %v2937 = vsel %vm2933, %v2917, %v2920
      %v2938 = vsel %vm2936, %v2926, 2102212464
      %v2939 = vsel %vm2935, %v2923, %v2938
      %v2940 = vsel %vm2934, %v2937, %v2939
      %v2941 = vsel %vm2933, %v2920, %v2923
      %v2942 = vsel %vm2936, %v2929, 920167782
      %v2943 = vsel %vm2935, %v2926, %v2942
      %v2944 = vsel %vm2934, %v2941, %v2943
      %v2945 = vsel %vm2933, %v2923, %v2926
      %v2946 = vsel %vm2936, %v2932, 1326507024
      %v2947 = vsel %vm2935, %v2929, %v2946
      %v2948 = vsel %vm2934, %v2945, %v2947
      %v2949 = vshll.u32 %v2909, 8
      %v2950 = vmul.u32.u64.compose %v2949, %v2948
      %v2951 = vextract.low.u32 %v2950
      %v2952 = vextract.high.u32 %v2950
      %v2953 = vmul.u32.u64.compose %v2949, %v2944
      %v2954 = vextract.low.u32 %v2953
      %v2955 = vextract.high.u32 %v2953
      %v2956 = vmul.u32 %v2949, %v2940
      %v2957 = vadd.s32 %v2952, %v2954
      %vm2958 = vc.u32 %v2952, %v2954
      %v2959 = vadd.s32 %v2955, 1
      %v2960 = vsel %vm2958, %v2959, %v2955
      %v2961 = vadd.s32 %v2956, %v2960
      %v2962 = vadd.s32 %v2961, 536870912
      %v2963 = vshrl.u32 %v2962, 30
      %v2964 = vshll.u32 %v2963, 30
      %v2965 = vsub.s32 %v2961, %v2964
      %vm2966 = vcmp.lt.s32.totalorder %v2965, 0
      %v2967 = vsub.s32 0, %v2965
      %v2968 = vsel %vm2966, %v2967, %v2965
      %v2969 = vclz %v2968
      %v2970 = vsub.s32 %v2969, 2
      %vm2971 = vcmp.gt.s32.totalorder 0, %v2970
      %v2972 = vsel %vm2971, 0, %v2970
      %v2973 = vsub.s32 32, %v2972
      %v2974 = vshll.u32 %v2965, %v2972
      %v2975 = vshrl.u32 %v2957, %v2973
      %v2976 = vor.u32 %v2974, %v2975
      %v2977 = vsub.s32 4294967266, %v2972
      %v2978 = vadd.s32 %v2977, 127
      %v2979 = vshll.u32 %v2978, 23
      %v2980 = vor.u32 4788187, %v2979
      %v2981 = vand.u32 2147483647, %v2980
      %v2983 = vcvt.s32.f32 %v2976
      %v2984 = vmul.f32 %v2983, %v2981
      %v2985 = vxor.u32 %v2984, 2147483648
      %v2986 = vsel %vm2903, %v2985, %v2984
      %v2987 = vsub.s32 4, %v2963
      %v2988 = vsel %vm2903, %v2987, %v2963
      %v2989 = vsel %vm2902, %v563, %v2986
      %v2990 = vsel %vm2902, 0, %v2988
      %v2991 = vcosq.f32.pop %v2989
      %v2992 = vsinq.f32.pop %v2989
      %vm2993 = vweird.f32 %v563
      %v2994 = vadd.s32 %v2990, 3
      %v2995 = vand.u32 %v2994, 3
      %vm2996 = vcmp.lt.s32.totalorder %v2995, 2
      %vm2997 = vcmp.eq.s32.totalorder %v2995, 0
      %v2998 = vxor.u32 %v2992, 2147483648
      %v2999 = vsel %vm2997, %v2991, %v2998
      %vm3000 = vcmp.eq.s32.totalorder %v2995, 2
      %v3001 = vxor.u32 %v2991, 2147483648
      %v3002 = vsel %vm3000, %v3001, %v2992
      %v3003 = vsel %vm2996, %v2999, %v3002
      %v3004 = vsel %vm2993, nan, %v3003
      %v3005 = vand.u32 2147483647, %v568
      %vm3006 = vcmp.le.f32.partialorder %v3005, 0.7853982
      %vm3007 = vcmp.lt.s32.totalorder %v568, 0
      %v3008 = vand.u32 %v568, 2139095040
      %v3009 = vshrl.u32 %v3008, 23
      %v3010 = vsub.s32 %v3009, 127
      %v3011 = vand.u32 2147483647, %v568
      %v3012 = vand.u32 %v3011, 8388607
      %v3013 = vor.u32 %v3012, 8388608
      %v3014 = vsub.s32 0, %v3013
      %v3015 = vadd.s32 %v3010, 1
      %vm3016 = vcmp.gt.s32.totalorder %v3015, 0
      %v3017 = vsel %vm3016, %v3015, 0
      %v3018 = vshrl.u32 %v3017, 5
      %v3019 = vand.u32 %v3017, 31
      %v3020 = vsub.s32 32, %v3019
      %v3021 = vshrl.u32 683565275, %v3020
      %v3022 = vshll.u32 683565275, %v3019
      %v3023 = vshrl.u32 2475754826, %v3020
      %v3024 = vor.u32 %v3022, %v3023
      %v3025 = vshll.u32 2475754826, %v3019
      %v3026 = vshrl.u32 2131351028, %v3020
      %v3027 = vor.u32 %v3025, %v3026
      %v3028 = vshll.u32 2131351028, %v3019
      %v3029 = vshrl.u32 2102212464, %v3020
      %v3030 = vor.u32 %v3028, %v3029
      %v3031 = vshll.u32 2102212464, %v3019
      %v3032 = vshrl.u32 920167782, %v3020
      %v3033 = vor.u32 %v3031, %v3032
      %v3034 = vshll.u32 920167782, %v3019
      %v3035 = vshrl.u32 1326507024, %v3020
      %v3036 = vor.u32 %v3034, %v3035
      %vm3037 = vcmp.lt.s32.totalorder %v3018, 1
      %vm3038 = vcmp.lt.s32.totalorder %v3018, 2
      %vm3039 = vcmp.lt.s32.totalorder %v3018, 3
      %vm3040 = vcmp.lt.s32.totalorder %v3018, 4
      %v3041 = vsel %vm3037, %v3021, %v3024
      %v3042 = vsel %vm3040, %v3030, 2102212464
      %v3043 = vsel %vm3039, %v3027, %v3042
      %v3044 = vsel %vm3038, %v3041, %v3043
      %v3045 = vsel %vm3037, %v3024, %v3027
      %v3046 = vsel %vm3040, %v3033, 920167782
      %v3047 = vsel %vm3039, %v3030, %v3046
      %v3048 = vsel %vm3038, %v3045, %v3047
      %v3049 = vsel %vm3037, %v3027, %v3030
      %v3050 = vsel %vm3040, %v3036, 1326507024
      %v3051 = vsel %vm3039, %v3033, %v3050
      %v3052 = vsel %vm3038, %v3049, %v3051
      %v3053 = vshll.u32 %v3013, 8
      %v3054 = vmul.u32.u64.compose %v3053, %v3052
      %v3055 = vextract.low.u32 %v3054
      %v3056 = vextract.high.u32 %v3054
      %v3057 = vmul.u32.u64.compose %v3053, %v3048
      %v3058 = vextract.low.u32 %v3057
      %v3059 = vextract.high.u32 %v3057
      %v3060 = vmul.u32 %v3053, %v3044
      %v3061 = vadd.s32 %v3056, %v3058
      %vm3062 = vc.u32 %v3056, %v3058
      %v3063 = vadd.s32 %v3059, 1
      %v3064 = vsel %vm3062, %v3063, %v3059
      %v3065 = vadd.s32 %v3060, %v3064
      %v3066 = vadd.s32 %v3065, 536870912
      %v3067 = vshrl.u32 %v3066, 30
      %v3068 = vshll.u32 %v3067, 30
      %v3069 = vsub.s32 %v3065, %v3068
      %vm3070 = vcmp.lt.s32.totalorder %v3069, 0
      %v3071 = vsub.s32 0, %v3069
      %v3072 = vsel %vm3070, %v3071, %v3069
      %v3073 = vclz %v3072
      %v3074 = vsub.s32 %v3073, 2
      %vm3075 = vcmp.gt.s32.totalorder 0, %v3074
      %v3076 = vsel %vm3075, 0, %v3074
      %v3077 = vsub.s32 32, %v3076
      %v3078 = vshll.u32 %v3069, %v3076
      %v3079 = vshrl.u32 %v3061, %v3077
      %v3080 = vor.u32 %v3078, %v3079
      %v3081 = vsub.s32 4294967266, %v3076
      %v3082 = vadd.s32 %v3081, 127
      %v3083 = vshll.u32 %v3082, 23
      %v3084 = vor.u32 4788187, %v3083
      %v3085 = vand.u32 2147483647, %v3084
      %v3087 = vcvt.s32.f32 %v3080
      %v3088 = vmul.f32 %v3087, %v3085
      %v3089 = vxor.u32 %v3088, 2147483648
      %v3090 = vsel %vm3007, %v3089, %v3088
      %v3091 = vsub.s32 4, %v3067
      %v3092 = vsel %vm3007, %v3091, %v3067
      %v3093 = vsel %vm3006, %v568, %v3090
      %v3094 = vsel %vm3006, 0, %v3092
      %v3095 = vcosq.f32.pop %v3093
      %v3096 = vsinq.f32.pop %v3093
      %vm3097 = vweird.f32 %v568
      %v3098 = vadd.s32 %v3094, 3
      %v3099 = vand.u32 %v3098, 3
      %vm3100 = vcmp.lt.s32.totalorder %v3099, 2
      %vm3101 = vcmp.eq.s32.totalorder %v3099, 0
      %v3102 = vxor.u32 %v3096, 2147483648
      %v3103 = vsel %vm3101, %v3095, %v3102
      %vm3104 = vcmp.eq.s32.totalorder %v3099, 2
      %v3105 = vxor.u32 %v3095, 2147483648
      %v3106 = vsel %vm3104, %v3105, %v3096
      %v3107 = vsel %vm3100, %v3103, %v3106
      %v3108 = vsel %vm3097, nan, %v3107
      %v3109 = vand.u32 2147483647, %v573
      %vm3110 = vcmp.le.f32.partialorder %v3109, 0.7853982
      %vm3111 = vcmp.lt.s32.totalorder %v573, 0
      %v3112 = vand.u32 %v573, 2139095040
      %v3113 = vshrl.u32 %v3112, 23
      %v3114 = vsub.s32 %v3113, 127
      %v3115 = vand.u32 2147483647, %v573
      %v3116 = vand.u32 %v3115, 8388607
      %v3117 = vor.u32 %v3116, 8388608
      %v3118 = vsub.s32 0, %v3117
      %v3119 = vadd.s32 %v3114, 1
      %vm3120 = vcmp.gt.s32.totalorder %v3119, 0
      %v3121 = vsel %vm3120, %v3119, 0
      %v3122 = vshrl.u32 %v3121, 5
      %v3123 = vand.u32 %v3121, 31
      %v3124 = vsub.s32 32, %v3123
      %v3125 = vshrl.u32 683565275, %v3124
      %v3126 = vshll.u32 683565275, %v3123
      %v3127 = vshrl.u32 2475754826, %v3124
      %v3128 = vor.u32 %v3126, %v3127
      %v3129 = vshll.u32 2475754826, %v3123
      %v3130 = vshrl.u32 2131351028, %v3124
      %v3131 = vor.u32 %v3129, %v3130
      %v3132 = vshll.u32 2131351028, %v3123
      %v3133 = vshrl.u32 2102212464, %v3124
      %v3134 = vor.u32 %v3132, %v3133
      %v3135 = vshll.u32 2102212464, %v3123
      %v3136 = vshrl.u32 920167782, %v3124
      %v3137 = vor.u32 %v3135, %v3136
      %v3138 = vshll.u32 920167782, %v3123
      %v3139 = vshrl.u32 1326507024, %v3124
      %v3140 = vor.u32 %v3138, %v3139
      %vm3141 = vcmp.lt.s32.totalorder %v3122, 1
      %vm3142 = vcmp.lt.s32.totalorder %v3122, 2
      %vm3143 = vcmp.lt.s32.totalorder %v3122, 3
      %vm3144 = vcmp.lt.s32.totalorder %v3122, 4
      %v3145 = vsel %vm3141, %v3125, %v3128
      %v3146 = vsel %vm3144, %v3134, 2102212464
      %v3147 = vsel %vm3143, %v3131, %v3146
      %v3148 = vsel %vm3142, %v3145, %v3147
      %v3149 = vsel %vm3141, %v3128, %v3131
      %v3150 = vsel %vm3144, %v3137, 920167782
      %v3151 = vsel %vm3143, %v3134, %v3150
      %v3152 = vsel %vm3142, %v3149, %v3151
      %v3153 = vsel %vm3141, %v3131, %v3134
      %v3154 = vsel %vm3144, %v3140, 1326507024
      %v3155 = vsel %vm3143, %v3137, %v3154
      %v3156 = vsel %vm3142, %v3153, %v3155
      %v3157 = vshll.u32 %v3117, 8
      %v3158 = vmul.u32.u64.compose %v3157, %v3156
      %v3159 = vextract.low.u32 %v3158
      %v3160 = vextract.high.u32 %v3158
      %v3161 = vmul.u32.u64.compose %v3157, %v3152
      %v3162 = vextract.low.u32 %v3161
      %v3163 = vextract.high.u32 %v3161
      %v3164 = vmul.u32 %v3157, %v3148
      %v3165 = vadd.s32 %v3160, %v3162
      %vm3166 = vc.u32 %v3160, %v3162
      %v3167 = vadd.s32 %v3163, 1
      %v3168 = vsel %vm3166, %v3167, %v3163
      %v3169 = vadd.s32 %v3164, %v3168
      %v3170 = vadd.s32 %v3169, 536870912
      %v3171 = vshrl.u32 %v3170, 30
      %v3172 = vshll.u32 %v3171, 30
      %v3173 = vsub.s32 %v3169, %v3172
      %vm3174 = vcmp.lt.s32.totalorder %v3173, 0
      %v3175 = vsub.s32 0, %v3173
      %v3176 = vsel %vm3174, %v3175, %v3173
      %v3177 = vclz %v3176
      %v3178 = vsub.s32 %v3177, 2
      %vm3179 = vcmp.gt.s32.totalorder 0, %v3178
      %v3180 = vsel %vm3179, 0, %v3178
      %v3181 = vsub.s32 32, %v3180
      %v3182 = vshll.u32 %v3173, %v3180
      %v3183 = vshrl.u32 %v3165, %v3181
      %v3184 = vor.u32 %v3182, %v3183
      %v3185 = vsub.s32 4294967266, %v3180
      %v3186 = vadd.s32 %v3185, 127
      %v3187 = vshll.u32 %v3186, 23
      %v3188 = vor.u32 4788187, %v3187
      %v3189 = vand.u32 2147483647, %v3188
      %v3191 = vcvt.s32.f32 %v3184
      %v3192 = vmul.f32 %v3191, %v3189
      %v3193 = vxor.u32 %v3192, 2147483648
      %v3194 = vsel %vm3111, %v3193, %v3192
      %v3195 = vsub.s32 4, %v3171
      %v3196 = vsel %vm3111, %v3195, %v3171
      %v3197 = vsel %vm3110, %v573, %v3194
      %v3198 = vsel %vm3110, 0, %v3196
      %v3199 = vcosq.f32.pop %v3197
      %v3200 = vsinq.f32.pop %v3197
      %vm3201 = vweird.f32 %v573
      %v3202 = vadd.s32 %v3198, 3
      %v3203 = vand.u32 %v3202, 3
      %vm3204 = vcmp.lt.s32.totalorder %v3203, 2
      %vm3205 = vcmp.eq.s32.totalorder %v3203, 0
      %v3206 = vxor.u32 %v3200, 2147483648
      %v3207 = vsel %vm3205, %v3199, %v3206
      %vm3208 = vcmp.eq.s32.totalorder %v3203, 2
      %v3209 = vxor.u32 %v3199, 2147483648
      %v3210 = vsel %vm3208, %v3209, %v3200
      %v3211 = vsel %vm3204, %v3207, %v3210
      %v3212 = vsel %vm3201, nan, %v3211
      %v3213 = vand.u32 2147483647, %v578
      %vm3214 = vcmp.le.f32.partialorder %v3213, 0.7853982
      %vm3215 = vcmp.lt.s32.totalorder %v578, 0
      %v3216 = vand.u32 %v578, 2139095040
      %v3217 = vshrl.u32 %v3216, 23
      %v3218 = vsub.s32 %v3217, 127
      %v3219 = vand.u32 2147483647, %v578
      %v3220 = vand.u32 %v3219, 8388607
      %v3221 = vor.u32 %v3220, 8388608
      %v3222 = vsub.s32 0, %v3221
      %v3223 = vadd.s32 %v3218, 1
      %vm3224 = vcmp.gt.s32.totalorder %v3223, 0
      %v3225 = vsel %vm3224, %v3223, 0
      %v3226 = vshrl.u32 %v3225, 5
      %v3227 = vand.u32 %v3225, 31
      %v3228 = vsub.s32 32, %v3227
      %v3229 = vshrl.u32 683565275, %v3228
      %v3230 = vshll.u32 683565275, %v3227
      %v3231 = vshrl.u32 2475754826, %v3228
      %v3232 = vor.u32 %v3230, %v3231
      %v3233 = vshll.u32 2475754826, %v3227
      %v3234 = vshrl.u32 2131351028, %v3228
      %v3235 = vor.u32 %v3233, %v3234
      %v3236 = vshll.u32 2131351028, %v3227
      %v3237 = vshrl.u32 2102212464, %v3228
      %v3238 = vor.u32 %v3236, %v3237
      %v3239 = vshll.u32 2102212464, %v3227
      %v3240 = vshrl.u32 920167782, %v3228
      %v3241 = vor.u32 %v3239, %v3240
      %v3242 = vshll.u32 920167782, %v3227
      %v3243 = vshrl.u32 1326507024, %v3228
      %v3244 = vor.u32 %v3242, %v3243
      %vm3245 = vcmp.lt.s32.totalorder %v3226, 1
      %vm3246 = vcmp.lt.s32.totalorder %v3226, 2
      %vm3247 = vcmp.lt.s32.totalorder %v3226, 3
      %vm3248 = vcmp.lt.s32.totalorder %v3226, 4
      %v3249 = vsel %vm3245, %v3229, %v3232
      %v3250 = vsel %vm3248, %v3238, 2102212464
      %v3251 = vsel %vm3247, %v3235, %v3250
      %v3252 = vsel %vm3246, %v3249, %v3251
      %v3253 = vsel %vm3245, %v3232, %v3235
      %v3254 = vsel %vm3248, %v3241, 920167782
      %v3255 = vsel %vm3247, %v3238, %v3254
      %v3256 = vsel %vm3246, %v3253, %v3255
      %v3257 = vsel %vm3245, %v3235, %v3238
      %v3258 = vsel %vm3248, %v3244, 1326507024
      %v3259 = vsel %vm3247, %v3241, %v3258
      %v3260 = vsel %vm3246, %v3257, %v3259
      %v3261 = vshll.u32 %v3221, 8
      %v3262 = vmul.u32.u64.compose %v3261, %v3260
      %v3263 = vextract.low.u32 %v3262
      %v3264 = vextract.high.u32 %v3262
      %v3265 = vmul.u32.u64.compose %v3261, %v3256
      %v3266 = vextract.low.u32 %v3265
      %v3267 = vextract.high.u32 %v3265
      %v3268 = vmul.u32 %v3261, %v3252
      %v3269 = vadd.s32 %v3264, %v3266
      %vm3270 = vc.u32 %v3264, %v3266
      %v3271 = vadd.s32 %v3267, 1
      %v3272 = vsel %vm3270, %v3271, %v3267
      %v3273 = vadd.s32 %v3268, %v3272
      %v3274 = vadd.s32 %v3273, 536870912
      %v3275 = vshrl.u32 %v3274, 30
      %v3276 = vshll.u32 %v3275, 30
      %v3277 = vsub.s32 %v3273, %v3276
      %vm3278 = vcmp.lt.s32.totalorder %v3277, 0
      %v3279 = vsub.s32 0, %v3277
      %v3280 = vsel %vm3278, %v3279, %v3277
      %v3281 = vclz %v3280
      %v3282 = vsub.s32 %v3281, 2
      %vm3283 = vcmp.gt.s32.totalorder 0, %v3282
      %v3284 = vsel %vm3283, 0, %v3282
      %v3285 = vsub.s32 32, %v3284
      %v3286 = vshll.u32 %v3277, %v3284
      %v3287 = vshrl.u32 %v3269, %v3285
      %v3288 = vor.u32 %v3286, %v3287
      %v3289 = vsub.s32 4294967266, %v3284
      %v3290 = vadd.s32 %v3289, 127
      %v3291 = vshll.u32 %v3290, 23
      %v3292 = vor.u32 4788187, %v3291
      %v3293 = vand.u32 2147483647, %v3292
      %v3295 = vcvt.s32.f32 %v3288
      %v3296 = vmul.f32 %v3295, %v3293
      %v3297 = vxor.u32 %v3296, 2147483648
      %v3298 = vsel %vm3215, %v3297, %v3296
      %v3299 = vsub.s32 4, %v3275
      %v3300 = vsel %vm3215, %v3299, %v3275
      %v3301 = vsel %vm3214, %v578, %v3298
      %v3302 = vsel %vm3214, 0, %v3300
      %v3303 = vcosq.f32.pop %v3301
      %v3304 = vsinq.f32.pop %v3301
      %vm3305 = vweird.f32 %v578
      %v3306 = vadd.s32 %v3302, 3
      %v3307 = vand.u32 %v3306, 3
      %vm3308 = vcmp.lt.s32.totalorder %v3307, 2
      %vm3309 = vcmp.eq.s32.totalorder %v3307, 0
      %v3310 = vxor.u32 %v3304, 2147483648
      %v3311 = vsel %vm3309, %v3303, %v3310
      %vm3312 = vcmp.eq.s32.totalorder %v3307, 2
      %v3313 = vxor.u32 %v3303, 2147483648
      %v3314 = vsel %vm3312, %v3313, %v3304
      %v3315 = vsel %vm3308, %v3311, %v3314
      %v3316 = vsel %vm3305, nan, %v3315
      %v3317 = vand.u32 2147483647, %v583
      %vm3318 = vcmp.le.f32.partialorder %v3317, 0.7853982
      %vm3319 = vcmp.lt.s32.totalorder %v583, 0
      %v3320 = vand.u32 %v583, 2139095040
      %v3321 = vshrl.u32 %v3320, 23
      %v3322 = vsub.s32 %v3321, 127
      %v3323 = vand.u32 2147483647, %v583
      %v3324 = vand.u32 %v3323, 8388607
      %v3325 = vor.u32 %v3324, 8388608
      %v3326 = vsub.s32 0, %v3325
      %v3327 = vadd.s32 %v3322, 1
      %vm3328 = vcmp.gt.s32.totalorder %v3327, 0
      %v3329 = vsel %vm3328, %v3327, 0
      %v3330 = vshrl.u32 %v3329, 5
      %v3331 = vand.u32 %v3329, 31
      %v3332 = vsub.s32 32, %v3331
      %v3333 = vshrl.u32 683565275, %v3332
      %v3334 = vshll.u32 683565275, %v3331
      %v3335 = vshrl.u32 2475754826, %v3332
      %v3336 = vor.u32 %v3334, %v3335
      %v3337 = vshll.u32 2475754826, %v3331
      %v3338 = vshrl.u32 2131351028, %v3332
      %v3339 = vor.u32 %v3337, %v3338
      %v3340 = vshll.u32 2131351028, %v3331
      %v3341 = vshrl.u32 2102212464, %v3332
      %v3342 = vor.u32 %v3340, %v3341
      %v3343 = vshll.u32 2102212464, %v3331
      %v3344 = vshrl.u32 920167782, %v3332
      %v3345 = vor.u32 %v3343, %v3344
      %v3346 = vshll.u32 920167782, %v3331
      %v3347 = vshrl.u32 1326507024, %v3332
      %v3348 = vor.u32 %v3346, %v3347
      %vm3349 = vcmp.lt.s32.totalorder %v3330, 1
      %vm3350 = vcmp.lt.s32.totalorder %v3330, 2
      %vm3351 = vcmp.lt.s32.totalorder %v3330, 3
      %vm3352 = vcmp.lt.s32.totalorder %v3330, 4
      %v3353 = vsel %vm3349, %v3333, %v3336
      %v3354 = vsel %vm3352, %v3342, 2102212464
      %v3355 = vsel %vm3351, %v3339, %v3354
      %v3356 = vsel %vm3350, %v3353, %v3355
      %v3357 = vsel %vm3349, %v3336, %v3339
      %v3358 = vsel %vm3352, %v3345, 920167782
      %v3359 = vsel %vm3351, %v3342, %v3358
      %v3360 = vsel %vm3350, %v3357, %v3359
      %v3361 = vsel %vm3349, %v3339, %v3342
      %v3362 = vsel %vm3352, %v3348, 1326507024
      %v3363 = vsel %vm3351, %v3345, %v3362
      %v3364 = vsel %vm3350, %v3361, %v3363
      %v3365 = vshll.u32 %v3325, 8
      %v3366 = vmul.u32.u64.compose %v3365, %v3364
      %v3367 = vextract.low.u32 %v3366
      %v3368 = vextract.high.u32 %v3366
      %v3369 = vmul.u32.u64.compose %v3365, %v3360
      %v3370 = vextract.low.u32 %v3369
      %v3371 = vextract.high.u32 %v3369
      %v3372 = vmul.u32 %v3365, %v3356
      %v3373 = vadd.s32 %v3368, %v3370
      %vm3374 = vc.u32 %v3368, %v3370
      %v3375 = vadd.s32 %v3371, 1
      %v3376 = vsel %vm3374, %v3375, %v3371
      %v3377 = vadd.s32 %v3372, %v3376
      %v3378 = vadd.s32 %v3377, 536870912
      %v3379 = vshrl.u32 %v3378, 30
      %v3380 = vshll.u32 %v3379, 30
      %v3381 = vsub.s32 %v3377, %v3380
      %vm3382 = vcmp.lt.s32.totalorder %v3381, 0
      %v3383 = vsub.s32 0, %v3381
      %v3384 = vsel %vm3382, %v3383, %v3381
      %v3385 = vclz %v3384
      %v3386 = vsub.s32 %v3385, 2
      %vm3387 = vcmp.gt.s32.totalorder 0, %v3386
      %v3388 = vsel %vm3387, 0, %v3386
      %v3389 = vsub.s32 32, %v3388
      %v3390 = vshll.u32 %v3381, %v3388
      %v3391 = vshrl.u32 %v3373, %v3389
      %v3392 = vor.u32 %v3390, %v3391
      %v3393 = vsub.s32 4294967266, %v3388
      %v3394 = vadd.s32 %v3393, 127
      %v3395 = vshll.u32 %v3394, 23
      %v3396 = vor.u32 4788187, %v3395
      %v3397 = vand.u32 2147483647, %v3396
      %v3399 = vcvt.s32.f32 %v3392
      %v3400 = vmul.f32 %v3399, %v3397
      %v3401 = vxor.u32 %v3400, 2147483648
      %v3402 = vsel %vm3319, %v3401, %v3400
      %v3403 = vsub.s32 4, %v3379
      %v3404 = vsel %vm3319, %v3403, %v3379
      %v3405 = vsel %vm3318, %v583, %v3402
      %v3406 = vsel %vm3318, 0, %v3404
      %v3407 = vcosq.f32.pop %v3405
      %v3408 = vsinq.f32.pop %v3405
      %vm3409 = vweird.f32 %v583
      %v3410 = vadd.s32 %v3406, 3
      %v3411 = vand.u32 %v3410, 3
      %vm3412 = vcmp.lt.s32.totalorder %v3411, 2
      %vm3413 = vcmp.eq.s32.totalorder %v3411, 0
      %v3414 = vxor.u32 %v3408, 2147483648
      %v3415 = vsel %vm3413, %v3407, %v3414
      %vm3416 = vcmp.eq.s32.totalorder %v3411, 2
      %v3417 = vxor.u32 %v3407, 2147483648
      %v3418 = vsel %vm3416, %v3417, %v3408
      %v3419 = vsel %vm3412, %v3415, %v3418
      %v3420 = vsel %vm3409, nan, %v3419
      %v3421 = vand.u32 2147483647, %v588
      %vm3422 = vcmp.le.f32.partialorder %v3421, 0.7853982
      %vm3423 = vcmp.lt.s32.totalorder %v588, 0
      %v3424 = vand.u32 %v588, 2139095040
      %v3425 = vshrl.u32 %v3424, 23
      %v3426 = vsub.s32 %v3425, 127
      %v3427 = vand.u32 2147483647, %v588
      %v3428 = vand.u32 %v3427, 8388607
      %v3429 = vor.u32 %v3428, 8388608
      %v3430 = vsub.s32 0, %v3429
      %v3431 = vadd.s32 %v3426, 1
      %vm3432 = vcmp.gt.s32.totalorder %v3431, 0
      %v3433 = vsel %vm3432, %v3431, 0
      %v3434 = vshrl.u32 %v3433, 5
      %v3435 = vand.u32 %v3433, 31
      %v3436 = vsub.s32 32, %v3435
      %v3437 = vshrl.u32 683565275, %v3436
      %v3438 = vshll.u32 683565275, %v3435
      %v3439 = vshrl.u32 2475754826, %v3436
      %v3440 = vor.u32 %v3438, %v3439
      %v3441 = vshll.u32 2475754826, %v3435
      %v3442 = vshrl.u32 2131351028, %v3436
      %v3443 = vor.u32 %v3441, %v3442
      %v3444 = vshll.u32 2131351028, %v3435
      %v3445 = vshrl.u32 2102212464, %v3436
      %v3446 = vor.u32 %v3444, %v3445
      %v3447 = vshll.u32 2102212464, %v3435
      %v3448 = vshrl.u32 920167782, %v3436
      %v3449 = vor.u32 %v3447, %v3448
      %v3450 = vshll.u32 920167782, %v3435
      %v3451 = vshrl.u32 1326507024, %v3436
      %v3452 = vor.u32 %v3450, %v3451
      %vm3453 = vcmp.lt.s32.totalorder %v3434, 1
      %vm3454 = vcmp.lt.s32.totalorder %v3434, 2
      %vm3455 = vcmp.lt.s32.totalorder %v3434, 3
      %vm3456 = vcmp.lt.s32.totalorder %v3434, 4
      %v3457 = vsel %vm3453, %v3437, %v3440
      %v3458 = vsel %vm3456, %v3446, 2102212464
      %v3459 = vsel %vm3455, %v3443, %v3458
      %v3460 = vsel %vm3454, %v3457, %v3459
      %v3461 = vsel %vm3453, %v3440, %v3443
      %v3462 = vsel %vm3456, %v3449, 920167782
      %v3463 = vsel %vm3455, %v3446, %v3462
      %v3464 = vsel %vm3454, %v3461, %v3463
      %v3465 = vsel %vm3453, %v3443, %v3446
      %v3466 = vsel %vm3456, %v3452, 1326507024
      %v3467 = vsel %vm3455, %v3449, %v3466
      %v3468 = vsel %vm3454, %v3465, %v3467
      %v3469 = vshll.u32 %v3429, 8
      %v3470 = vmul.u32.u64.compose %v3469, %v3468
      %v3471 = vextract.low.u32 %v3470
      %v3472 = vextract.high.u32 %v3470
      %v3473 = vmul.u32.u64.compose %v3469, %v3464
      %v3474 = vextract.low.u32 %v3473
      %v3475 = vextract.high.u32 %v3473
      %v3476 = vmul.u32 %v3469, %v3460
      %v3477 = vadd.s32 %v3472, %v3474
      %vm3478 = vc.u32 %v3472, %v3474
      %v3479 = vadd.s32 %v3475, 1
      %v3480 = vsel %vm3478, %v3479, %v3475
      %v3481 = vadd.s32 %v3476, %v3480
      %v3482 = vadd.s32 %v3481, 536870912
      %v3483 = vshrl.u32 %v3482, 30
      %v3484 = vshll.u32 %v3483, 30
      %v3485 = vsub.s32 %v3481, %v3484
      %vm3486 = vcmp.lt.s32.totalorder %v3485, 0
      %v3487 = vsub.s32 0, %v3485
      %v3488 = vsel %vm3486, %v3487, %v3485
      %v3489 = vclz %v3488
      %v3490 = vsub.s32 %v3489, 2
      %vm3491 = vcmp.gt.s32.totalorder 0, %v3490
      %v3492 = vsel %vm3491, 0, %v3490
      %v3493 = vsub.s32 32, %v3492
      %v3494 = vshll.u32 %v3485, %v3492
      %v3495 = vshrl.u32 %v3477, %v3493
      %v3496 = vor.u32 %v3494, %v3495
      %v3497 = vsub.s32 4294967266, %v3492
      %v3498 = vadd.s32 %v3497, 127
      %v3499 = vshll.u32 %v3498, 23
      %v3500 = vor.u32 4788187, %v3499
      %v3501 = vand.u32 2147483647, %v3500
      %v3503 = vcvt.s32.f32 %v3496
      %v3504 = vmul.f32 %v3503, %v3501
      %v3505 = vxor.u32 %v3504, 2147483648
      %v3506 = vsel %vm3423, %v3505, %v3504
      %v3507 = vsub.s32 4, %v3483
      %v3508 = vsel %vm3423, %v3507, %v3483
      %v3509 = vsel %vm3422, %v588, %v3506
      %v3510 = vsel %vm3422, 0, %v3508
      %v3511 = vcosq.f32.pop %v3509
      %v3512 = vsinq.f32.pop %v3509
      %vm3513 = vweird.f32 %v588
      %v3514 = vadd.s32 %v3510, 3
      %v3515 = vand.u32 %v3514, 3
      %vm3516 = vcmp.lt.s32.totalorder %v3515, 2
      %vm3517 = vcmp.eq.s32.totalorder %v3515, 0
      %v3518 = vxor.u32 %v3512, 2147483648
      %v3519 = vsel %vm3517, %v3511, %v3518
      %vm3520 = vcmp.eq.s32.totalorder %v3515, 2
      %v3521 = vxor.u32 %v3511, 2147483648
      %v3522 = vsel %vm3520, %v3521, %v3512
      %v3523 = vsel %vm3516, %v3519, %v3522
      %v3524 = vsel %vm3513, nan, %v3523
      %v3525 = vand.u32 2147483647, %v593
      %vm3526 = vcmp.le.f32.partialorder %v3525, 0.7853982
      %vm3527 = vcmp.lt.s32.totalorder %v593, 0
      %v3528 = vand.u32 %v593, 2139095040
      %v3529 = vshrl.u32 %v3528, 23
      %v3530 = vsub.s32 %v3529, 127
      %v3531 = vand.u32 2147483647, %v593
      %v3532 = vand.u32 %v3531, 8388607
      %v3533 = vor.u32 %v3532, 8388608
      %v3534 = vsub.s32 0, %v3533
      %v3535 = vadd.s32 %v3530, 1
      %vm3536 = vcmp.gt.s32.totalorder %v3535, 0
      %v3537 = vsel %vm3536, %v3535, 0
      %v3538 = vshrl.u32 %v3537, 5
      %v3539 = vand.u32 %v3537, 31
      %v3540 = vsub.s32 32, %v3539
      %v3541 = vshrl.u32 683565275, %v3540
      %v3542 = vshll.u32 683565275, %v3539
      %v3543 = vshrl.u32 2475754826, %v3540
      %v3544 = vor.u32 %v3542, %v3543
      %v3545 = vshll.u32 2475754826, %v3539
      %v3546 = vshrl.u32 2131351028, %v3540
      %v3547 = vor.u32 %v3545, %v3546
      %v3548 = vshll.u32 2131351028, %v3539
      %v3549 = vshrl.u32 2102212464, %v3540
      %v3550 = vor.u32 %v3548, %v3549
      %v3551 = vshll.u32 2102212464, %v3539
      %v3552 = vshrl.u32 920167782, %v3540
      %v3553 = vor.u32 %v3551, %v3552
      %v3554 = vshll.u32 920167782, %v3539
      %v3555 = vshrl.u32 1326507024, %v3540
      %v3556 = vor.u32 %v3554, %v3555
      %vm3557 = vcmp.lt.s32.totalorder %v3538, 1
      %vm3558 = vcmp.lt.s32.totalorder %v3538, 2
      %vm3559 = vcmp.lt.s32.totalorder %v3538, 3
      %vm3560 = vcmp.lt.s32.totalorder %v3538, 4
      %v3561 = vsel %vm3557, %v3541, %v3544
      %v3562 = vsel %vm3560, %v3550, 2102212464
      %v3563 = vsel %vm3559, %v3547, %v3562
      %v3564 = vsel %vm3558, %v3561, %v3563
      %v3565 = vsel %vm3557, %v3544, %v3547
      %v3566 = vsel %vm3560, %v3553, 920167782
      %v3567 = vsel %vm3559, %v3550, %v3566
      %v3568 = vsel %vm3558, %v3565, %v3567
      %v3569 = vsel %vm3557, %v3547, %v3550
      %v3570 = vsel %vm3560, %v3556, 1326507024
      %v3571 = vsel %vm3559, %v3553, %v3570
      %v3572 = vsel %vm3558, %v3569, %v3571
      %v3573 = vshll.u32 %v3533, 8
      %v3574 = vmul.u32.u64.compose %v3573, %v3572
      %v3575 = vextract.low.u32 %v3574
      %v3576 = vextract.high.u32 %v3574
      %v3577 = vmul.u32.u64.compose %v3573, %v3568
      %v3578 = vextract.low.u32 %v3577
      %v3579 = vextract.high.u32 %v3577
      %v3580 = vmul.u32 %v3573, %v3564
      %v3581 = vadd.s32 %v3576, %v3578
      %vm3582 = vc.u32 %v3576, %v3578
      %v3583 = vadd.s32 %v3579, 1
      %v3584 = vsel %vm3582, %v3583, %v3579
      %v3585 = vadd.s32 %v3580, %v3584
      %v3586 = vadd.s32 %v3585, 536870912
      %v3587 = vshrl.u32 %v3586, 30
      %v3588 = vshll.u32 %v3587, 30
      %v3589 = vsub.s32 %v3585, %v3588
      %vm3590 = vcmp.lt.s32.totalorder %v3589, 0
      %v3591 = vsub.s32 0, %v3589
      %v3592 = vsel %vm3590, %v3591, %v3589
      %v3593 = vclz %v3592
      %v3594 = vsub.s32 %v3593, 2
      %vm3595 = vcmp.gt.s32.totalorder 0, %v3594
      %v3596 = vsel %vm3595, 0, %v3594
      %v3597 = vsub.s32 32, %v3596
      %v3598 = vshll.u32 %v3589, %v3596
      %v3599 = vshrl.u32 %v3581, %v3597
      %v3600 = vor.u32 %v3598, %v3599
      %v3601 = vsub.s32 4294967266, %v3596
      %v3602 = vadd.s32 %v3601, 127
      %v3603 = vshll.u32 %v3602, 23
      %v3604 = vor.u32 4788187, %v3603
      %v3605 = vand.u32 2147483647, %v3604
      %v3607 = vcvt.s32.f32 %v3600
      %v3608 = vmul.f32 %v3607, %v3605
      %v3609 = vxor.u32 %v3608, 2147483648
      %v3610 = vsel %vm3527, %v3609, %v3608
      %v3611 = vsub.s32 4, %v3587
      %v3612 = vsel %vm3527, %v3611, %v3587
      %v3613 = vsel %vm3526, %v593, %v3610
      %v3614 = vsel %vm3526, 0, %v3612
      %v3615 = vcosq.f32.pop %v3613
      %v3616 = vsinq.f32.pop %v3613
      %vm3617 = vweird.f32 %v593
      %v3618 = vadd.s32 %v3614, 3
      %v3619 = vand.u32 %v3618, 3
      %vm3620 = vcmp.lt.s32.totalorder %v3619, 2
      %vm3621 = vcmp.eq.s32.totalorder %v3619, 0
      %v3622 = vxor.u32 %v3616, 2147483648
      %v3623 = vsel %vm3621, %v3615, %v3622
      %vm3624 = vcmp.eq.s32.totalorder %v3619, 2
      %v3625 = vxor.u32 %v3615, 2147483648
      %v3626 = vsel %vm3624, %v3625, %v3616
      %v3627 = vsel %vm3620, %v3623, %v3626
      %v3628 = vsel %vm3617, nan, %v3627
      %v3629 = vand.u32 2147483647, %v598
      %vm3630 = vcmp.le.f32.partialorder %v3629, 0.7853982
      %vm3631 = vcmp.lt.s32.totalorder %v598, 0
      %v3632 = vand.u32 %v598, 2139095040
      %v3633 = vshrl.u32 %v3632, 23
      %v3634 = vsub.s32 %v3633, 127
      %v3635 = vand.u32 2147483647, %v598
      %v3636 = vand.u32 %v3635, 8388607
      %v3637 = vor.u32 %v3636, 8388608
      %v3638 = vsub.s32 0, %v3637
      %v3639 = vadd.s32 %v3634, 1
      %vm3640 = vcmp.gt.s32.totalorder %v3639, 0
      %v3641 = vsel %vm3640, %v3639, 0
      %v3642 = vshrl.u32 %v3641, 5
      %v3643 = vand.u32 %v3641, 31
      %v3644 = vsub.s32 32, %v3643
      %v3645 = vshrl.u32 683565275, %v3644
      %v3646 = vshll.u32 683565275, %v3643
      %v3647 = vshrl.u32 2475754826, %v3644
      %v3648 = vor.u32 %v3646, %v3647
      %v3649 = vshll.u32 2475754826, %v3643
      %v3650 = vshrl.u32 2131351028, %v3644
      %v3651 = vor.u32 %v3649, %v3650
      %v3652 = vshll.u32 2131351028, %v3643
      %v3653 = vshrl.u32 2102212464, %v3644
      %v3654 = vor.u32 %v3652, %v3653
      %v3655 = vshll.u32 2102212464, %v3643
      %v3656 = vshrl.u32 920167782, %v3644
      %v3657 = vor.u32 %v3655, %v3656
      %v3658 = vshll.u32 920167782, %v3643
      %v3659 = vshrl.u32 1326507024, %v3644
      %v3660 = vor.u32 %v3658, %v3659
      %vm3661 = vcmp.lt.s32.totalorder %v3642, 1
      %vm3662 = vcmp.lt.s32.totalorder %v3642, 2
      %vm3663 = vcmp.lt.s32.totalorder %v3642, 3
      %vm3664 = vcmp.lt.s32.totalorder %v3642, 4
      %v3665 = vsel %vm3661, %v3645, %v3648
      %v3666 = vsel %vm3664, %v3654, 2102212464
      %v3667 = vsel %vm3663, %v3651, %v3666
      %v3668 = vsel %vm3662, %v3665, %v3667
      %v3669 = vsel %vm3661, %v3648, %v3651
      %v3670 = vsel %vm3664, %v3657, 920167782
      %v3671 = vsel %vm3663, %v3654, %v3670
      %v3672 = vsel %vm3662, %v3669, %v3671
      %v3673 = vsel %vm3661, %v3651, %v3654
      %v3674 = vsel %vm3664, %v3660, 1326507024
      %v3675 = vsel %vm3663, %v3657, %v3674
      %v3676 = vsel %vm3662, %v3673, %v3675
      %v3677 = vshll.u32 %v3637, 8
      %v3678 = vmul.u32.u64.compose %v3677, %v3676
      %v3679 = vextract.low.u32 %v3678
      %v3680 = vextract.high.u32 %v3678
      %v3681 = vmul.u32.u64.compose %v3677, %v3672
      %v3682 = vextract.low.u32 %v3681
      %v3683 = vextract.high.u32 %v3681
      %v3684 = vmul.u32 %v3677, %v3668
      %v3685 = vadd.s32 %v3680, %v3682
      %vm3686 = vc.u32 %v3680, %v3682
      %v3687 = vadd.s32 %v3683, 1
      %v3688 = vsel %vm3686, %v3687, %v3683
      %v3689 = vadd.s32 %v3684, %v3688
      %v3690 = vadd.s32 %v3689, 536870912
      %v3691 = vshrl.u32 %v3690, 30
      %v3692 = vshll.u32 %v3691, 30
      %v3693 = vsub.s32 %v3689, %v3692
      %vm3694 = vcmp.lt.s32.totalorder %v3693, 0
      %v3695 = vsub.s32 0, %v3693
      %v3696 = vsel %vm3694, %v3695, %v3693
      %v3697 = vclz %v3696
      %v3698 = vsub.s32 %v3697, 2
      %vm3699 = vcmp.gt.s32.totalorder 0, %v3698
      %v3700 = vsel %vm3699, 0, %v3698
      %v3701 = vsub.s32 32, %v3700
      %v3702 = vshll.u32 %v3693, %v3700
      %v3703 = vshrl.u32 %v3685, %v3701
      %v3704 = vor.u32 %v3702, %v3703
      %v3705 = vsub.s32 4294967266, %v3700
      %v3706 = vadd.s32 %v3705, 127
      %v3707 = vshll.u32 %v3706, 23
      %v3708 = vor.u32 4788187, %v3707
      %v3709 = vand.u32 2147483647, %v3708
      %v3711 = vcvt.s32.f32 %v3704
      %v3712 = vmul.f32 %v3711, %v3709
      %v3713 = vxor.u32 %v3712, 2147483648
      %v3714 = vsel %vm3631, %v3713, %v3712
      %v3715 = vsub.s32 4, %v3691
      %v3716 = vsel %vm3631, %v3715, %v3691
      %v3717 = vsel %vm3630, %v598, %v3714
      %v3718 = vsel %vm3630, 0, %v3716
      %v3719 = vcosq.f32.pop %v3717
      %v3720 = vsinq.f32.pop %v3717
      %vm3721 = vweird.f32 %v598
      %v3722 = vadd.s32 %v3718, 3
      %v3723 = vand.u32 %v3722, 3
      %vm3724 = vcmp.lt.s32.totalorder %v3723, 2
      %vm3725 = vcmp.eq.s32.totalorder %v3723, 0
      %v3726 = vxor.u32 %v3720, 2147483648
      %v3727 = vsel %vm3725, %v3719, %v3726
      %vm3728 = vcmp.eq.s32.totalorder %v3723, 2
      %v3729 = vxor.u32 %v3719, 2147483648
      %v3730 = vsel %vm3728, %v3729, %v3720
      %v3731 = vsel %vm3724, %v3727, %v3730
      %v3732 = vsel %vm3721, nan, %v3731
      %v3733 = vand.u32 2147483647, %v603
      %vm3734 = vcmp.le.f32.partialorder %v3733, 0.7853982
      %vm3735 = vcmp.lt.s32.totalorder %v603, 0
      %v3736 = vand.u32 %v603, 2139095040
      %v3737 = vshrl.u32 %v3736, 23
      %v3738 = vsub.s32 %v3737, 127
      %v3739 = vand.u32 2147483647, %v603
      %v3740 = vand.u32 %v3739, 8388607
      %v3741 = vor.u32 %v3740, 8388608
      %v3742 = vsub.s32 0, %v3741
      %v3743 = vadd.s32 %v3738, 1
      %vm3744 = vcmp.gt.s32.totalorder %v3743, 0
      %v3745 = vsel %vm3744, %v3743, 0
      %v3746 = vshrl.u32 %v3745, 5
      %v3747 = vand.u32 %v3745, 31
      %v3748 = vsub.s32 32, %v3747
      %v3749 = vshrl.u32 683565275, %v3748
      %v3750 = vshll.u32 683565275, %v3747
      %v3751 = vshrl.u32 2475754826, %v3748
      %v3752 = vor.u32 %v3750, %v3751
      %v3753 = vshll.u32 2475754826, %v3747
      %v3754 = vshrl.u32 2131351028, %v3748
      %v3755 = vor.u32 %v3753, %v3754
      %v3756 = vshll.u32 2131351028, %v3747
      %v3757 = vshrl.u32 2102212464, %v3748
      %v3758 = vor.u32 %v3756, %v3757
      %v3759 = vshll.u32 2102212464, %v3747
      %v3760 = vshrl.u32 920167782, %v3748
      %v3761 = vor.u32 %v3759, %v3760
      %v3762 = vshll.u32 920167782, %v3747
      %v3763 = vshrl.u32 1326507024, %v3748
      %v3764 = vor.u32 %v3762, %v3763
      %vm3765 = vcmp.lt.s32.totalorder %v3746, 1
      %vm3766 = vcmp.lt.s32.totalorder %v3746, 2
      %vm3767 = vcmp.lt.s32.totalorder %v3746, 3
      %vm3768 = vcmp.lt.s32.totalorder %v3746, 4
      %v3769 = vsel %vm3765, %v3749, %v3752
      %v3770 = vsel %vm3768, %v3758, 2102212464
      %v3771 = vsel %vm3767, %v3755, %v3770
      %v3772 = vsel %vm3766, %v3769, %v3771
      %v3773 = vsel %vm3765, %v3752, %v3755
      %v3774 = vsel %vm3768, %v3761, 920167782
      %v3775 = vsel %vm3767, %v3758, %v3774
      %v3776 = vsel %vm3766, %v3773, %v3775
      %v3777 = vsel %vm3765, %v3755, %v3758
      %v3778 = vsel %vm3768, %v3764, 1326507024
      %v3779 = vsel %vm3767, %v3761, %v3778
      %v3780 = vsel %vm3766, %v3777, %v3779
      %v3781 = vshll.u32 %v3741, 8
      %v3782 = vmul.u32.u64.compose %v3781, %v3780
      %v3783 = vextract.low.u32 %v3782
      %v3784 = vextract.high.u32 %v3782
      %v3785 = vmul.u32.u64.compose %v3781, %v3776
      %v3786 = vextract.low.u32 %v3785
      %v3787 = vextract.high.u32 %v3785
      %v3788 = vmul.u32 %v3781, %v3772
      %v3789 = vadd.s32 %v3784, %v3786
      %vm3790 = vc.u32 %v3784, %v3786
      %v3791 = vadd.s32 %v3787, 1
      %v3792 = vsel %vm3790, %v3791, %v3787
      %v3793 = vadd.s32 %v3788, %v3792
      %v3794 = vadd.s32 %v3793, 536870912
      %v3795 = vshrl.u32 %v3794, 30
      %v3796 = vshll.u32 %v3795, 30
      %v3797 = vsub.s32 %v3793, %v3796
      %vm3798 = vcmp.lt.s32.totalorder %v3797, 0
      %v3799 = vsub.s32 0, %v3797
      %v3800 = vsel %vm3798, %v3799, %v3797
      %v3801 = vclz %v3800
      %v3802 = vsub.s32 %v3801, 2
      %vm3803 = vcmp.gt.s32.totalorder 0, %v3802
      %v3804 = vsel %vm3803, 0, %v3802
      %v3805 = vsub.s32 32, %v3804
      %v3806 = vshll.u32 %v3797, %v3804
      %v3807 = vshrl.u32 %v3789, %v3805
      %v3808 = vor.u32 %v3806, %v3807
      %v3809 = vsub.s32 4294967266, %v3804
      %v3810 = vadd.s32 %v3809, 127
      %v3811 = vshll.u32 %v3810, 23
      %v3812 = vor.u32 4788187, %v3811
      %v3813 = vand.u32 2147483647, %v3812
      %v3815 = vcvt.s32.f32 %v3808
      %v3816 = vmul.f32 %v3815, %v3813
      %v3817 = vxor.u32 %v3816, 2147483648
      %v3818 = vsel %vm3735, %v3817, %v3816
      %v3819 = vsub.s32 4, %v3795
      %v3820 = vsel %vm3735, %v3819, %v3795
      %v3821 = vsel %vm3734, %v603, %v3818
      %v3822 = vsel %vm3734, 0, %v3820
      %v3823 = vcosq.f32.pop %v3821
      %v3824 = vsinq.f32.pop %v3821
      %vm3825 = vweird.f32 %v603
      %v3826 = vadd.s32 %v3822, 3
      %v3827 = vand.u32 %v3826, 3
      %vm3828 = vcmp.lt.s32.totalorder %v3827, 2
      %vm3829 = vcmp.eq.s32.totalorder %v3827, 0
      %v3830 = vxor.u32 %v3824, 2147483648
      %v3831 = vsel %vm3829, %v3823, %v3830
      %vm3832 = vcmp.eq.s32.totalorder %v3827, 2
      %v3833 = vxor.u32 %v3823, 2147483648
      %v3834 = vsel %vm3832, %v3833, %v3824
      %v3835 = vsel %vm3828, %v3831, %v3834
      %v3836 = vsel %vm3825, nan, %v3835
      %v3837 = vand.u32 2147483647, %v608
      %vm3838 = vcmp.le.f32.partialorder %v3837, 0.7853982
      %vm3839 = vcmp.lt.s32.totalorder %v608, 0
      %v3840 = vand.u32 %v608, 2139095040
      %v3841 = vshrl.u32 %v3840, 23
      %v3842 = vsub.s32 %v3841, 127
      %v3843 = vand.u32 2147483647, %v608
      %v3844 = vand.u32 %v3843, 8388607
      %v3845 = vor.u32 %v3844, 8388608
      %v3846 = vsub.s32 0, %v3845
      %v3847 = vadd.s32 %v3842, 1
      %vm3848 = vcmp.gt.s32.totalorder %v3847, 0
      %v3849 = vsel %vm3848, %v3847, 0
      %v3850 = vshrl.u32 %v3849, 5
      %v3851 = vand.u32 %v3849, 31
      %v3852 = vsub.s32 32, %v3851
      %v3853 = vshrl.u32 683565275, %v3852
      %v3854 = vshll.u32 683565275, %v3851
      %v3855 = vshrl.u32 2475754826, %v3852
      %v3856 = vor.u32 %v3854, %v3855
      %v3857 = vshll.u32 2475754826, %v3851
      %v3858 = vshrl.u32 2131351028, %v3852
      %v3859 = vor.u32 %v3857, %v3858
      %v3860 = vshll.u32 2131351028, %v3851
      %v3861 = vshrl.u32 2102212464, %v3852
      %v3862 = vor.u32 %v3860, %v3861
      %v3863 = vshll.u32 2102212464, %v3851
      %v3864 = vshrl.u32 920167782, %v3852
      %v3865 = vor.u32 %v3863, %v3864
      %v3866 = vshll.u32 920167782, %v3851
      %v3867 = vshrl.u32 1326507024, %v3852
      %v3868 = vor.u32 %v3866, %v3867
      %vm3869 = vcmp.lt.s32.totalorder %v3850, 1
      %vm3870 = vcmp.lt.s32.totalorder %v3850, 2
      %vm3871 = vcmp.lt.s32.totalorder %v3850, 3
      %vm3872 = vcmp.lt.s32.totalorder %v3850, 4
      %v3873 = vsel %vm3869, %v3853, %v3856
      %v3874 = vsel %vm3872, %v3862, 2102212464
      %v3875 = vsel %vm3871, %v3859, %v3874
      %v3876 = vsel %vm3870, %v3873, %v3875
      %v3877 = vsel %vm3869, %v3856, %v3859
      %v3878 = vsel %vm3872, %v3865, 920167782
      %v3879 = vsel %vm3871, %v3862, %v3878
      %v3880 = vsel %vm3870, %v3877, %v3879
      %v3881 = vsel %vm3869, %v3859, %v3862
      %v3882 = vsel %vm3872, %v3868, 1326507024
      %v3883 = vsel %vm3871, %v3865, %v3882
      %v3884 = vsel %vm3870, %v3881, %v3883
      %v3885 = vshll.u32 %v3845, 8
      %v3886 = vmul.u32.u64.compose %v3885, %v3884
      %v3887 = vextract.low.u32 %v3886
      %v3888 = vextract.high.u32 %v3886
      %v3889 = vmul.u32.u64.compose %v3885, %v3880
      %v3890 = vextract.low.u32 %v3889
      %v3891 = vextract.high.u32 %v3889
      %v3892 = vmul.u32 %v3885, %v3876
      %v3893 = vadd.s32 %v3888, %v3890
      %vm3894 = vc.u32 %v3888, %v3890
      %v3895 = vadd.s32 %v3891, 1
      %v3896 = vsel %vm3894, %v3895, %v3891
      %v3897 = vadd.s32 %v3892, %v3896
      %v3898 = vadd.s32 %v3897, 536870912
      %v3899 = vshrl.u32 %v3898, 30
      %v3900 = vshll.u32 %v3899, 30
      %v3901 = vsub.s32 %v3897, %v3900
      %vm3902 = vcmp.lt.s32.totalorder %v3901, 0
      %v3903 = vsub.s32 0, %v3901
      %v3904 = vsel %vm3902, %v3903, %v3901
      %v3905 = vclz %v3904
      %v3906 = vsub.s32 %v3905, 2
      %vm3907 = vcmp.gt.s32.totalorder 0, %v3906
      %v3908 = vsel %vm3907, 0, %v3906
      %v3909 = vsub.s32 32, %v3908
      %v3910 = vshll.u32 %v3901, %v3908
      %v3911 = vshrl.u32 %v3893, %v3909
      %v3912 = vor.u32 %v3910, %v3911
      %v3913 = vsub.s32 4294967266, %v3908
      %v3914 = vadd.s32 %v3913, 127
      %v3915 = vshll.u32 %v3914, 23
      %v3916 = vor.u32 4788187, %v3915
      %v3917 = vand.u32 2147483647, %v3916
      %v3919 = vcvt.s32.f32 %v3912
      %v3920 = vmul.f32 %v3919, %v3917
      %v3921 = vxor.u32 %v3920, 2147483648
      %v3922 = vsel %vm3839, %v3921, %v3920
      %v3923 = vsub.s32 4, %v3899
      %v3924 = vsel %vm3839, %v3923, %v3899
      %v3925 = vsel %vm3838, %v608, %v3922
      %v3926 = vsel %vm3838, 0, %v3924
      %v3927 = vcosq.f32.pop %v3925
      %v3928 = vsinq.f32.pop %v3925
      %vm3929 = vweird.f32 %v608
      %v3930 = vadd.s32 %v3926, 3
      %v3931 = vand.u32 %v3930, 3
      %vm3932 = vcmp.lt.s32.totalorder %v3931, 2
      %vm3933 = vcmp.eq.s32.totalorder %v3931, 0
      %v3934 = vxor.u32 %v3928, 2147483648
      %v3935 = vsel %vm3933, %v3927, %v3934
      %vm3936 = vcmp.eq.s32.totalorder %v3931, 2
      %v3937 = vxor.u32 %v3927, 2147483648
      %v3938 = vsel %vm3936, %v3937, %v3928
      %v3939 = vsel %vm3932, %v3935, %v3938
      %v3940 = vsel %vm3929, nan, %v3939
      %v3941 = vsel %vm612, 1, 0
      %v3942 = vlaneseq
      %v3943 = vshrl.u32 %v3942, 7
      %v3944 = vsub.s32 0, %v3943
      %v3945 = vrot.slane %v3941, %v3944
      %vm3946 = vcmp.eq.s32.totalorder %v3945, 1
      %v3947 = vsel %vm3946, %v716, %v453
      %v3948 = vsel %vm3946, %v820, %v458
      %v3949 = vsel %vm3946, %v924, %v463
      %v3950 = vsel %vm3946, %v1028, %v468
      %v3951 = vsel %vm3946, %v1132, %v473
      %v3952 = vsel %vm3946, %v1236, %v478
      %v3953 = vsel %vm3946, %v1340, %v483
      %v3954 = vsel %vm3946, %v1444, %v488
      %v3955 = vsel %vm3946, %v1548, %v493
      %v3956 = vsel %vm3946, %v1652, %v498
      %v3957 = vsel %vm3946, %v1756, %v503
      %v3958 = vsel %vm3946, %v1860, %v508
      %v3959 = vsel %vm3946, %v1964, %v513
      %v3960 = vsel %vm3946, %v2068, %v518
      %v3961 = vsel %vm3946, %v2172, %v523
      %v3962 = vsel %vm3946, %v2276, %v528
      %v3963 = vsel %vm3946, %v2380, %v533
      %v3964 = vsel %vm3946, %v2484, %v538
      %v3965 = vsel %vm3946, %v2588, %v543
      %v3966 = vsel %vm3946, %v2692, %v548
      %v3967 = vsel %vm3946, %v2796, %v553
      %v3968 = vsel %vm3946, %v2900, %v558
      %v3969 = vsel %vm3946, %v3004, %v563
      %v3970 = vsel %vm3946, %v3108, %v568
      %v3971 = vsel %vm3946, %v3212, %v573
      %v3972 = vsel %vm3946, %v3316, %v578
      %v3973 = vsel %vm3946, %v3420, %v583
      %v3974 = vsel %vm3946, %v3524, %v588
      %v3975 = vsel %vm3946, %v3628, %v593
      %v3976 = vsel %vm3946, %v3732, %v598
      %v3977 = vsel %vm3946, %v3836, %v603
      %v3978 = vsel %vm3946, %v3940, %v608
      %v3979 = vld [vmem:[%s2 + $0x1] sm:$0x1]
      %v3980 = vld [vmem:[%s2 + $0x2] sm:$0x1]
      %v3981 = vpack.c.bf16 %v3948, %v3947
      %v3982 = vpack.c.bf16 %v3950, %v3949
      %v3983 = vpack.c.bf16 %v3952, %v3951
      %v3984 = vpack.c.bf16 %v3954, %v3953
      %v3985 = vpack.c.bf16 %v3956, %v3955
      %v3986 = vpack.c.bf16 %v3958, %v3957
      %v3987 = vpack.c.bf16 %v3960, %v3959
      %v3988 = vpack.c.bf16 %v3962, %v3961
      %v3989 = vpack.c.bf16 %v3964, %v3963
      %v3990 = vpack.c.bf16 %v3966, %v3965
      %v3991 = vpack.c.bf16 %v3968, %v3967
      %v3992 = vpack.c.bf16 %v3970, %v3969
      %v3993 = vpack.c.bf16 %v3972, %v3971
      %v3994 = vpack.c.bf16 %v3974, %v3973
      %v3995 = vpack.c.bf16 %v3976, %v3975
      %v3996 = vpack.c.bf16 %v3978, %v3977
      %v3997 = vld [vmem:[%s3] sm:$0xf]
      %v3998 = vld [vmem:[%s3 + $0x4] sm:$0xf]
      %v3999 = vld [vmem:[%s3 + $0x8] sm:$0xf]
      %v4000 = vld [vmem:[%s3 + $0xc] sm:$0xf]
      %v4001 = vld [vmem:[%s3 + $0x10] sm:$0xf]
      %v4002 = vld [vmem:[%s3 + $0x14] sm:$0xf]
      %v4003 = vld [vmem:[%s3 + $0x18] sm:$0xf]
      %v4004 = vld [vmem:[%s3 + $0x1c] sm:$0xf]
      %v4005 = vld [vmem:[%s3 + $0x20] sm:$0xf]
      %v4006 = vld [vmem:[%s3 + $0x24] sm:$0xf]
      %v4007 = vld [vmem:[%s3 + $0x28] sm:$0xf]
      %v4008 = vld [vmem:[%s3 + $0x2c] sm:$0xf]
      %v4009 = vld [vmem:[%s3 + $0x30] sm:$0xf]
      %v4010 = vld [vmem:[%s3 + $0x34] sm:$0xf]
      %v4011 = vld [vmem:[%s3 + $0x38] sm:$0xf]
      %v4012 = vld [vmem:[%s3 + $0x3c] sm:$0xf]
      %v4013 = vlaneseq
      %v4014 = vshrl.u32 %v4013, 7
      %v4015 = vsub.s32 0, %v4014
      %v4016 = vrot.slane %v3979, %v4015
      %v4033 = vunpack.c.l.b16 %v3997
      %v4034 = vunpack.c.l.b16 %v3998
      %v4035 = vunpack.c.l.b16 %v3999
      %v4036 = vunpack.c.l.b16 %v4000
      %v4037 = vunpack.c.l.b16 %v4001
      %v4038 = vunpack.c.l.b16 %v4002
      %v4039 = vunpack.c.l.b16 %v4003
      %v4040 = vunpack.c.l.b16 %v4004
      %v4041 = vunpack.c.l.b16 %v4005
      %v4042 = vunpack.c.l.b16 %v4006
      %v4043 = vunpack.c.l.b16 %v4007
      %v4044 = vunpack.c.l.b16 %v4008
      %v4045 = vunpack.c.l.b16 %v4009
      %v4046 = vunpack.c.l.b16 %v4010
      %v4047 = vunpack.c.l.b16 %v4011
      %v4048 = vunpack.c.l.b16 %v4012
      %v4049 = vpack.c.b16 %v4034, %v4033
      %v4050 = vpack.c.b16 %v4036, %v4035
      %v4051 = vpack.c.b16 %v4038, %v4037
      %v4052 = vpack.c.b16 %v4040, %v4039
      %v4053 = vpack.c.b16 %v4042, %v4041
      %v4054 = vpack.c.b16 %v4044, %v4043
      %v4055 = vpack.c.b16 %v4046, %v4045
      %v4056 = vpack.c.b16 %v4048, %v4047
      %4065 = vmatprep.subr.bf16.mxu0 0
      %4066 = vmatpush1.bf16.msra.mxu0 %v4056
      %4067 = vmatprep.subr.bf16.mxu0 0
      %4068 = vmatpush1.bf16.msra.mxu0 %v4055
      %4069 = vmatprep.subr.bf16.mxu0 0
      %4070 = vmatpush1.bf16.msra.mxu0 %v4054
      %4071 = vmatprep.subr.bf16.mxu0 0
      %4072 = vmatpush1.bf16.msra.mxu0 %v4053
      %4073 = vmatprep.subr.bf16.mxu0 0
      %4074 = vmatpush1.bf16.msra.mxu0 %v4052
      %4075 = vmatprep.subr.bf16.mxu0 0
      %4076 = vmatpush1.bf16.msra.mxu0 %v4051
      %4077 = vmatprep.subr.bf16.mxu0 0
      %4078 = vmatpush1.bf16.msra.mxu0 %v4050
      %4079 = vmatprep.subr.bf16.mxu0 0
      %4080 = vmatpush1.bf16.msra.mxu0 %v4049
      %4081 = vmatprep.subr.bf16.mxu0 0
      %4082 = vmatpush2.bf16.msra.mxu0 0
      %4083 = vmatprep.subr.bf16.mxu0 0
      %4084 = vmatpush2.bf16.msra.mxu0 0
      %4085 = vmatprep.subr.bf16.mxu0 0
      %4086 = vmatpush2.bf16.msra.mxu0 0
      %4087 = vmatprep.subr.bf16.mxu0 0
      %4088 = vmatpush2.bf16.msra.mxu0 0
      %4089 = vmatprep.subr.bf16.mxu0 0
      %4090 = vmatpush2.bf16.msra.mxu0 0
      %4091 = vmatprep.subr.bf16.mxu0 0
      %4092 = vmatpush2.bf16.msra.mxu0 0
      %4093 = vmatprep.subr.bf16.mxu0 0
      %4094 = vmatpush2.bf16.msra.mxu0 0
      %4095 = vmatprep.subr.bf16.mxu0 0
      %4096 = vmatpush2.bf16.msra.mxu0 0
      %4097 = vmatprep.mubr.bf16.mxu0 0
      %4098 = vmatmul.mubr.bf16.gmra.mxu0 %v3981
      %v4099 = vpop.f32.mrf.mxu0
      %v4100 = vadd.f32 %v4016, %v4099
      %v4101 = vpop.f32.mrf.mxu0
      %v4102 = vpop.f32.mrf.mxu0
      %v4103 = vadd.f32 %v4016, %v4102
      %v4104 = vpop.f32.mrf.mxu0
      %4105 = vmatprep.mubr.bf16.mxu0 0
      %4106 = vmatmul.mubr.bf16.gmra.mxu0 %v3982
      %v4107 = vpop.f32.mrf.mxu0
      %v4108 = vadd.f32 %v4016, %v4107
      %v4109 = vpop.f32.mrf.mxu0
      %v4110 = vpop.f32.mrf.mxu0
      %v4111 = vadd.f32 %v4016, %v4110
      %v4112 = vpop.f32.mrf.mxu0
      %4113 = vmatprep.mubr.bf16.mxu0 0
      %4114 = vmatmul.mubr.bf16.gmra.mxu0 %v3983
      %v4115 = vpop.f32.mrf.mxu0
      %v4116 = vadd.f32 %v4016, %v4115
      %v4117 = vpop.f32.mrf.mxu0
      %v4118 = vpop.f32.mrf.mxu0
      %v4119 = vadd.f32 %v4016, %v4118
      %v4120 = vpop.f32.mrf.mxu0
      %4121 = vmatprep.mubr.bf16.mxu0 0
      %4122 = vmatmul.mubr.bf16.gmra.mxu0 %v3984
      %v4123 = vpop.f32.mrf.mxu0
      %v4124 = vadd.f32 %v4016, %v4123
      %v4125 = vpop.f32.mrf.mxu0
      %v4126 = vpop.f32.mrf.mxu0
      %v4127 = vadd.f32 %v4016, %v4126
      %v4128 = vpop.f32.mrf.mxu0
      %4129 = vmatprep.mubr.bf16.mxu0 0
      %4130 = vmatmul.mubr.bf16.gmra.mxu0 %v3985
      %v4131 = vpop.f32.mrf.mxu0
      %v4132 = vadd.f32 %v4016, %v4131
      %v4133 = vpop.f32.mrf.mxu0
      %v4134 = vpop.f32.mrf.mxu0
      %v4135 = vadd.f32 %v4016, %v4134
      %v4136 = vpop.f32.mrf.mxu0
      %4137 = vmatprep.mubr.bf16.mxu0 0
      %4138 = vmatmul.mubr.bf16.gmra.mxu0 %v3986
      %v4139 = vpop.f32.mrf.mxu0
      %v4140 = vadd.f32 %v4016, %v4139
      %v4141 = vpop.f32.mrf.mxu0
      %v4142 = vpop.f32.mrf.mxu0
      %v4143 = vadd.f32 %v4016, %v4142
      %v4144 = vpop.f32.mrf.mxu0
      %4145 = vmatprep.mubr.bf16.mxu0 0
      %4146 = vmatmul.mubr.bf16.gmra.mxu0 %v3987
      %v4147 = vpop.f32.mrf.mxu0
      %v4148 = vadd.f32 %v4016, %v4147
      %v4149 = vpop.f32.mrf.mxu0
      %v4150 = vpop.f32.mrf.mxu0
      %v4151 = vadd.f32 %v4016, %v4150
      %v4152 = vpop.f32.mrf.mxu0
      %4153 = vmatprep.mubr.bf16.mxu0 0
      %4154 = vmatmul.mubr.bf16.gmra.mxu0 %v3988
      %v4155 = vpop.f32.mrf.mxu0
      %v4156 = vadd.f32 %v4016, %v4155
      %v4157 = vpop.f32.mrf.mxu0
      %v4158 = vpop.f32.mrf.mxu0
      %v4159 = vadd.f32 %v4016, %v4158
      %v4160 = vpop.f32.mrf.mxu0
      %4161 = vmatprep.mubr.bf16.mxu0 0
      %4162 = vmatmul.mubr.bf16.gmra.mxu0 %v3989
      %v4163 = vpop.f32.mrf.mxu0
      %v4164 = vadd.f32 %v4016, %v4163
      %v4165 = vpop.f32.mrf.mxu0
      %v4166 = vpop.f32.mrf.mxu0
      %v4167 = vadd.f32 %v4016, %v4166
      %v4168 = vpop.f32.mrf.mxu0
      %4169 = vmatprep.mubr.bf16.mxu0 0
      %4170 = vmatmul.mubr.bf16.gmra.mxu0 %v3990
      %v4171 = vpop.f32.mrf.mxu0
      %v4172 = vadd.f32 %v4016, %v4171
      %v4173 = vpop.f32.mrf.mxu0
      %v4174 = vpop.f32.mrf.mxu0
      %v4175 = vadd.f32 %v4016, %v4174
      %v4176 = vpop.f32.mrf.mxu0
      %4177 = vmatprep.mubr.bf16.mxu0 0
      %4178 = vmatmul.mubr.bf16.gmra.mxu0 %v3991
      %v4179 = vpop.f32.mrf.mxu0
      %v4180 = vadd.f32 %v4016, %v4179
      %v4181 = vpop.f32.mrf.mxu0
      %v4182 = vpop.f32.mrf.mxu0
      %v4183 = vadd.f32 %v4016, %v4182
      %v4184 = vpop.f32.mrf.mxu0
      %4185 = vmatprep.mubr.bf16.mxu0 0
      %4186 = vmatmul.mubr.bf16.gmra.mxu0 %v3992
      %v4187 = vpop.f32.mrf.mxu0
      %v4188 = vadd.f32 %v4016, %v4187
      %v4189 = vpop.f32.mrf.mxu0
      %v4190 = vpop.f32.mrf.mxu0
      %v4191 = vadd.f32 %v4016, %v4190
      %v4192 = vpop.f32.mrf.mxu0
      %4193 = vmatprep.mubr.bf16.mxu0 0
      %4194 = vmatmul.mubr.bf16.gmra.mxu0 %v3993
      %v4195 = vpop.f32.mrf.mxu0
      %v4196 = vadd.f32 %v4016, %v4195
      %v4197 = vpop.f32.mrf.mxu0
      %v4198 = vpop.f32.mrf.mxu0
      %v4199 = vadd.f32 %v4016, %v4198
      %v4200 = vpop.f32.mrf.mxu0
      %4201 = vmatprep.mubr.bf16.mxu0 0
      %4202 = vmatmul.mubr.bf16.gmra.mxu0 %v3994
      %v4203 = vpop.f32.mrf.mxu0
      %v4204 = vadd.f32 %v4016, %v4203
      %v4205 = vpop.f32.mrf.mxu0
      %v4206 = vpop.f32.mrf.mxu0
      %v4207 = vadd.f32 %v4016, %v4206
      %v4208 = vpop.f32.mrf.mxu0
      %4209 = vmatprep.mubr.bf16.mxu0 0
      %4210 = vmatmul.mubr.bf16.gmra.mxu0 %v3995
      %v4211 = vpop.f32.mrf.mxu0
      %v4212 = vadd.f32 %v4016, %v4211
      %v4213 = vpop.f32.mrf.mxu0
      %v4214 = vpop.f32.mrf.mxu0
      %v4215 = vadd.f32 %v4016, %v4214
      %v4216 = vpop.f32.mrf.mxu0
      %4217 = vmatprep.mubr.bf16.mxu0 0
      %4218 = vmatmul.mubr.bf16.gmra.mxu0 %v3996
      %v4219 = vpop.f32.mrf.mxu0
      %v4220 = vadd.f32 %v4016, %v4219
      %v4221 = vpop.f32.mrf.mxu0
      %v4222 = vpop.f32.mrf.mxu0
      %v4223 = vadd.f32 %v4016, %v4222
      %v4224 = vpop.f32.mrf.mxu0
      %4225 = vdwg.mxu0
      %v4226 = vmax.f32 %v4100, 0.0
      %v4227 = vmax.f32 %v4103, 0.0
      %v4228 = vmax.f32 %v4108, 0.0
      %v4229 = vmax.f32 %v4111, 0.0
      %v4230 = vmax.f32 %v4116, 0.0
      %v4231 = vmax.f32 %v4119, 0.0
      %v4232 = vmax.f32 %v4124, 0.0
      %v4233 = vmax.f32 %v4127, 0.0
      %v4234 = vmax.f32 %v4132, 0.0
      %v4235 = vmax.f32 %v4135, 0.0
      %v4236 = vmax.f32 %v4140, 0.0
      %v4237 = vmax.f32 %v4143, 0.0
      %v4238 = vmax.f32 %v4148, 0.0
      %v4239 = vmax.f32 %v4151, 0.0
      %v4240 = vmax.f32 %v4156, 0.0
      %v4241 = vmax.f32 %v4159, 0.0
      %v4242 = vmax.f32 %v4164, 0.0
      %v4243 = vmax.f32 %v4167, 0.0
      %v4244 = vmax.f32 %v4172, 0.0
      %v4245 = vmax.f32 %v4175, 0.0
      %v4246 = vmax.f32 %v4180, 0.0
      %v4247 = vmax.f32 %v4183, 0.0
      %v4248 = vmax.f32 %v4188, 0.0
      %v4249 = vmax.f32 %v4191, 0.0
      %v4250 = vmax.f32 %v4196, 0.0
      %v4251 = vmax.f32 %v4199, 0.0
      %v4252 = vmax.f32 %v4204, 0.0
      %v4253 = vmax.f32 %v4207, 0.0
      %v4254 = vmax.f32 %v4212, 0.0
      %v4255 = vmax.f32 %v4215, 0.0
      %v4256 = vmax.f32 %v4220, 0.0
      %v4257 = vmax.f32 %v4223, 0.0
      %v4258 = vpack.c.bf16 %v4227, %v4226
      %v4259 = vpack.c.bf16 %v4229, %v4228
      %v4260 = vpack.c.bf16 %v4231, %v4230
      %v4261 = vpack.c.bf16 %v4233, %v4232
      %v4262 = vpack.c.bf16 %v4235, %v4234
      %v4263 = vpack.c.bf16 %v4237, %v4236
      %v4264 = vpack.c.bf16 %v4239, %v4238
      %v4265 = vpack.c.bf16 %v4241, %v4240
      %v4266 = vpack.c.bf16 %v4243, %v4242
      %v4267 = vpack.c.bf16 %v4245, %v4244
      %v4268 = vpack.c.bf16 %v4247, %v4246
      %v4269 = vpack.c.bf16 %v4249, %v4248
      %v4270 = vpack.c.bf16 %v4251, %v4250
      %v4271 = vpack.c.bf16 %v4253, %v4252
      %v4272 = vpack.c.bf16 %v4255, %v4254
      %v4273 = vpack.c.bf16 %v4257, %v4256
      %v4274 = vld [vmem:[%s4] sm:$0xf]
      %v4275 = vld [vmem:[%s4 + $0x4] sm:$0xf]
      %v4276 = vld [vmem:[%s4 + $0x8] sm:$0xf]
      %v4277 = vld [vmem:[%s4 + $0xc] sm:$0xf]
      %v4278 = vld [vmem:[%s4 + $0x10] sm:$0xf]
      %v4279 = vld [vmem:[%s4 + $0x14] sm:$0xf]
      %v4280 = vld [vmem:[%s4 + $0x18] sm:$0xf]
      %v4281 = vld [vmem:[%s4 + $0x1c] sm:$0xf]
      %v4282 = vld [vmem:[%s4 + $0x20] sm:$0xf]
      %v4283 = vld [vmem:[%s4 + $0x24] sm:$0xf]
      %v4284 = vld [vmem:[%s4 + $0x28] sm:$0xf]
      %v4285 = vld [vmem:[%s4 + $0x2c] sm:$0xf]
      %v4286 = vld [vmem:[%s4 + $0x30] sm:$0xf]
      %v4287 = vld [vmem:[%s4 + $0x34] sm:$0xf]
      %v4288 = vld [vmem:[%s4 + $0x38] sm:$0xf]
      %v4289 = vld [vmem:[%s4 + $0x3c] sm:$0xf]
      %v4290 = vlaneseq
      %v4291 = vshrl.u32 %v4290, 7
      %v4292 = vsub.s32 0, %v4291
      %v4293 = vrot.slane %v3980, %v4292
      %v4310 = vunpack.c.l.b16 %v4274
      %v4311 = vunpack.c.l.b16 %v4275
      %v4312 = vunpack.c.l.b16 %v4276
      %v4313 = vunpack.c.l.b16 %v4277
      %v4314 = vunpack.c.l.b16 %v4278
      %v4315 = vunpack.c.l.b16 %v4279
      %v4316 = vunpack.c.l.b16 %v4280
      %v4317 = vunpack.c.l.b16 %v4281
      %v4318 = vunpack.c.l.b16 %v4282
      %v4319 = vunpack.c.l.b16 %v4283
      %v4320 = vunpack.c.l.b16 %v4284
      %v4321 = vunpack.c.l.b16 %v4285
      %v4322 = vunpack.c.l.b16 %v4286
      %v4323 = vunpack.c.l.b16 %v4287
      %v4324 = vunpack.c.l.b16 %v4288
      %v4325 = vunpack.c.l.b16 %v4289
      %v4326 = vpack.c.b16 %v4311, %v4310
      %v4327 = vpack.c.b16 %v4313, %v4312
      %v4328 = vpack.c.b16 %v4315, %v4314
      %v4329 = vpack.c.b16 %v4317, %v4316
      %v4330 = vpack.c.b16 %v4319, %v4318
      %v4331 = vpack.c.b16 %v4321, %v4320
      %v4332 = vpack.c.b16 %v4323, %v4322
      %v4333 = vpack.c.b16 %v4325, %v4324
      %4342 = vmatprep.subr.bf16.mxu0 0
      %4343 = vmatpush1.bf16.msra.mxu0 %v4333
      %4344 = vmatprep.subr.bf16.mxu0 0
      %4345 = vmatpush1.bf16.msra.mxu0 %v4332
      %4346 = vmatprep.subr.bf16.mxu0 0
      %4347 = vmatpush1.bf16.msra.mxu0 %v4331
      %4348 = vmatprep.subr.bf16.mxu0 0
      %4349 = vmatpush1.bf16.msra.mxu0 %v4330
      %4350 = vmatprep.subr.bf16.mxu0 0
      %4351 = vmatpush1.bf16.msra.mxu0 %v4329
      %4352 = vmatprep.subr.bf16.mxu0 0
      %4353 = vmatpush1.bf16.msra.mxu0 %v4328
      %4354 = vmatprep.subr.bf16.mxu0 0
      %4355 = vmatpush1.bf16.msra.mxu0 %v4327
      %4356 = vmatprep.subr.bf16.mxu0 0
      %4357 = vmatpush1.bf16.msra.mxu0 %v4326
      %4358 = vmatprep.subr.bf16.mxu0 0
      %4359 = vmatpush2.bf16.msra.mxu0 0
      %4360 = vmatprep.subr.bf16.mxu0 0
      %4361 = vmatpush2.bf16.msra.mxu0 0
      %4362 = vmatprep.subr.bf16.mxu0 0
      %4363 = vmatpush2.bf16.msra.mxu0 0
      %4364 = vmatprep.subr.bf16.mxu0 0
      %4365 = vmatpush2.bf16.msra.mxu0 0
      %4366 = vmatprep.subr.bf16.mxu0 0
      %4367 = vmatpush2.bf16.msra.mxu0 0
      %4368 = vmatprep.subr.bf16.mxu0 0
      %4369 = vmatpush2.bf16.msra.mxu0 0
      %4370 = vmatprep.subr.bf16.mxu0 0
      %4371 = vmatpush2.bf16.msra.mxu0 0
      %4372 = vmatprep.subr.bf16.mxu0 0
      %4373 = vmatpush2.bf16.msra.mxu0 0
      %4374 = vmatprep.mubr.bf16.mxu0 0
      %4375 = vmatmul.mubr.bf16.gmra.mxu0 %v4258
      %v4376 = vpop.f32.mrf.mxu0
      %v4377 = vadd.f32 %v4293, %v4376
      %v4378 = vpop.f32.mrf.mxu0
      %v4379 = vpop.f32.mrf.mxu0
      %v4380 = vadd.f32 %v4293, %v4379
      %v4381 = vpop.f32.mrf.mxu0
      %4382 = vmatprep.mubr.bf16.mxu0 0
      %4383 = vmatmul.mubr.bf16.gmra.mxu0 %v4259
      %v4384 = vpop.f32.mrf.mxu0
      %v4385 = vadd.f32 %v4293, %v4384
      %v4386 = vpop.f32.mrf.mxu0
      %v4387 = vpop.f32.mrf.mxu0
      %v4388 = vadd.f32 %v4293, %v4387
      %v4389 = vpop.f32.mrf.mxu0
      %4390 = vmatprep.mubr.bf16.mxu0 0
      %4391 = vmatmul.mubr.bf16.gmra.mxu0 %v4260
      %v4392 = vpop.f32.mrf.mxu0
      %v4393 = vadd.f32 %v4293, %v4392
      %v4394 = vpop.f32.mrf.mxu0
      %v4395 = vpop.f32.mrf.mxu0
      %v4396 = vadd.f32 %v4293, %v4395
      %v4397 = vpop.f32.mrf.mxu0
      %4398 = vmatprep.mubr.bf16.mxu0 0
      %4399 = vmatmul.mubr.bf16.gmra.mxu0 %v4261
      %v4400 = vpop.f32.mrf.mxu0
      %v4401 = vadd.f32 %v4293, %v4400
      %v4402 = vpop.f32.mrf.mxu0
      %v4403 = vpop.f32.mrf.mxu0
      %v4404 = vadd.f32 %v4293, %v4403
      %v4405 = vpop.f32.mrf.mxu0
      %4406 = vmatprep.mubr.bf16.mxu0 0
      %4407 = vmatmul.mubr.bf16.gmra.mxu0 %v4262
      %v4408 = vpop.f32.mrf.mxu0
      %v4409 = vadd.f32 %v4293, %v4408
      %v4410 = vpop.f32.mrf.mxu0
      %v4411 = vpop.f32.mrf.mxu0
      %v4412 = vadd.f32 %v4293, %v4411
      %v4413 = vpop.f32.mrf.mxu0
      %4414 = vmatprep.mubr.bf16.mxu0 0
      %4415 = vmatmul.mubr.bf16.gmra.mxu0 %v4263
      %v4416 = vpop.f32.mrf.mxu0
      %v4417 = vadd.f32 %v4293, %v4416
      %v4418 = vpop.f32.mrf.mxu0
      %v4419 = vpop.f32.mrf.mxu0
      %v4420 = vadd.f32 %v4293, %v4419
      %v4421 = vpop.f32.mrf.mxu0
      %4422 = vmatprep.mubr.bf16.mxu0 0
      %4423 = vmatmul.mubr.bf16.gmra.mxu0 %v4264
      %v4424 = vpop.f32.mrf.mxu0
      %v4425 = vadd.f32 %v4293, %v4424
      %v4426 = vpop.f32.mrf.mxu0
      %v4427 = vpop.f32.mrf.mxu0
      %v4428 = vadd.f32 %v4293, %v4427
      %v4429 = vpop.f32.mrf.mxu0
      %4430 = vmatprep.mubr.bf16.mxu0 0
      %4431 = vmatmul.mubr.bf16.gmra.mxu0 %v4265
      %v4432 = vpop.f32.mrf.mxu0
      %v4433 = vadd.f32 %v4293, %v4432
      %v4434 = vpop.f32.mrf.mxu0
      %v4435 = vpop.f32.mrf.mxu0
      %v4436 = vadd.f32 %v4293, %v4435
      %v4437 = vpop.f32.mrf.mxu0
      %4438 = vmatprep.mubr.bf16.mxu0 0
      %4439 = vmatmul.mubr.bf16.gmra.mxu0 %v4266
      %v4440 = vpop.f32.mrf.mxu0
      %v4441 = vadd.f32 %v4293, %v4440
      %v4442 = vpop.f32.mrf.mxu0
      %v4443 = vpop.f32.mrf.mxu0
      %v4444 = vadd.f32 %v4293, %v4443
      %v4445 = vpop.f32.mrf.mxu0
      %4446 = vmatprep.mubr.bf16.mxu0 0
      %4447 = vmatmul.mubr.bf16.gmra.mxu0 %v4267
      %v4448 = vpop.f32.mrf.mxu0
      %v4449 = vadd.f32 %v4293, %v4448
      %v4450 = vpop.f32.mrf.mxu0
      %v4451 = vpop.f32.mrf.mxu0
      %v4452 = vadd.f32 %v4293, %v4451
      %v4453 = vpop.f32.mrf.mxu0
      %4454 = vmatprep.mubr.bf16.mxu0 0
      %4455 = vmatmul.mubr.bf16.gmra.mxu0 %v4268
      %v4456 = vpop.f32.mrf.mxu0
      %v4457 = vadd.f32 %v4293, %v4456
      %v4458 = vpop.f32.mrf.mxu0
      %v4459 = vpop.f32.mrf.mxu0
      %v4460 = vadd.f32 %v4293, %v4459
      %v4461 = vpop.f32.mrf.mxu0
      %4462 = vmatprep.mubr.bf16.mxu0 0
      %4463 = vmatmul.mubr.bf16.gmra.mxu0 %v4269
      %v4464 = vpop.f32.mrf.mxu0
      %v4465 = vadd.f32 %v4293, %v4464
      %v4466 = vpop.f32.mrf.mxu0
      %v4467 = vpop.f32.mrf.mxu0
      %v4468 = vadd.f32 %v4293, %v4467
      %v4469 = vpop.f32.mrf.mxu0
      %4470 = vmatprep.mubr.bf16.mxu0 0
      %4471 = vmatmul.mubr.bf16.gmra.mxu0 %v4270
      %v4472 = vpop.f32.mrf.mxu0
      %v4473 = vadd.f32 %v4293, %v4472
      %v4474 = vpop.f32.mrf.mxu0
      %v4475 = vpop.f32.mrf.mxu0
      %v4476 = vadd.f32 %v4293, %v4475
      %v4477 = vpop.f32.mrf.mxu0
      %4478 = vmatprep.mubr.bf16.mxu0 0
      %4479 = vmatmul.mubr.bf16.gmra.mxu0 %v4271
      %v4480 = vpop.f32.mrf.mxu0
      %v4481 = vadd.f32 %v4293, %v4480
      %v4482 = vpop.f32.mrf.mxu0
      %v4483 = vpop.f32.mrf.mxu0
      %v4484 = vadd.f32 %v4293, %v4483
      %v4485 = vpop.f32.mrf.mxu0
      %4486 = vmatprep.mubr.bf16.mxu0 0
      %4487 = vmatmul.mubr.bf16.gmra.mxu0 %v4272
      %v4488 = vpop.f32.mrf.mxu0
      %v4489 = vadd.f32 %v4293, %v4488
      %v4490 = vpop.f32.mrf.mxu0
      %v4491 = vpop.f32.mrf.mxu0
      %v4492 = vadd.f32 %v4293, %v4491
      %v4493 = vpop.f32.mrf.mxu0
      %4494 = vmatprep.mubr.bf16.mxu0 0
      %4495 = vmatmul.mubr.bf16.gmra.mxu0 %v4273
      %v4496 = vpop.f32.mrf.mxu0
      %v4497 = vadd.f32 %v4293, %v4496
      %v4498 = vpop.f32.mrf.mxu0
      %v4499 = vpop.f32.mrf.mxu0
      %v4500 = vadd.f32 %v4293, %v4499
      %v4501 = vpop.f32.mrf.mxu0
      %4502 = vdwg.mxu0
      %v4503 = vmax.f32 %v4377, 0.0
      %v4504 = vmax.f32 %v4380, 0.0
      %v4505 = vmax.f32 %v4385, 0.0
      %v4506 = vmax.f32 %v4388, 0.0
      %v4507 = vmax.f32 %v4393, 0.0
      %v4508 = vmax.f32 %v4396, 0.0
      %v4509 = vmax.f32 %v4401, 0.0
      %v4510 = vmax.f32 %v4404, 0.0
      %v4511 = vmax.f32 %v4409, 0.0
      %v4512 = vmax.f32 %v4412, 0.0
      %v4513 = vmax.f32 %v4417, 0.0
      %v4514 = vmax.f32 %v4420, 0.0
      %v4515 = vmax.f32 %v4425, 0.0
      %v4516 = vmax.f32 %v4428, 0.0
      %v4517 = vmax.f32 %v4433, 0.0
      %v4518 = vmax.f32 %v4436, 0.0
      %v4519 = vmax.f32 %v4441, 0.0
      %v4520 = vmax.f32 %v4444, 0.0
      %v4521 = vmax.f32 %v4449, 0.0
      %v4522 = vmax.f32 %v4452, 0.0
      %v4523 = vmax.f32 %v4457, 0.0
      %v4524 = vmax.f32 %v4460, 0.0
      %v4525 = vmax.f32 %v4465, 0.0
      %v4526 = vmax.f32 %v4468, 0.0
      %v4527 = vmax.f32 %v4473, 0.0
      %v4528 = vmax.f32 %v4476, 0.0
      %v4529 = vmax.f32 %v4481, 0.0
      %v4530 = vmax.f32 %v4484, 0.0
      %v4531 = vmax.f32 %v4489, 0.0
      %v4532 = vmax.f32 %v4492, 0.0
      %v4533 = vmax.f32 %v4497, 0.0
      %v4534 = vmax.f32 %v4500, 0.0
      %v4535 = vld [vmem:[%s5] sm:$0xff]
      %v4536 = vld [vmem:[%s5 + $0x8] sm:$0xff]
      %v4537 = vld [vmem:[%s5 + $0x10] sm:$0xff]
      %v4538 = vld [vmem:[%s5 + $0x18] sm:$0xff]
      %v4539 = vld [vmem:[%s5 + $0x20] sm:$0xff]
      %v4540 = vld [vmem:[%s5 + $0x28] sm:$0xff]
      %v4541 = vld [vmem:[%s5 + $0x30] sm:$0xff]
      %v4542 = vld [vmem:[%s5 + $0x38] sm:$0xff]
      %v4543 = vld [vmem:[%s5 + $0x40] sm:$0xff]
      %v4544 = vld [vmem:[%s5 + $0x48] sm:$0xff]
      %v4545 = vld [vmem:[%s5 + $0x50] sm:$0xff]
      %v4546 = vld [vmem:[%s5 + $0x58] sm:$0xff]
      %v4547 = vld [vmem:[%s5 + $0x60] sm:$0xff]
      %v4548 = vld [vmem:[%s5 + $0x68] sm:$0xff]
      %v4549 = vld [vmem:[%s5 + $0x70] sm:$0xff]
      %v4550 = vld [vmem:[%s5 + $0x78] sm:$0xff]
      %4551 = vmatprep.subr.mxu0 0.0
      %4552 = vmatpush1.msra.mxu0 %v4550
      %4553 = vmatprep.subr.mxu0 0.0
      %4554 = vmatpush1.msra.mxu0 %v4549
      %4555 = vmatprep.subr.mxu0 0.0
      %4556 = vmatpush1.msra.mxu0 %v4548
      %4557 = vmatprep.subr.mxu0 0.0
      %4558 = vmatpush1.msra.mxu0 %v4547
      %4559 = vmatprep.subr.mxu0 0.0
      %4560 = vmatpush1.msra.mxu0 %v4546
      %4561 = vmatprep.subr.mxu0 0.0
      %4562 = vmatpush1.msra.mxu0 %v4545
      %4563 = vmatprep.subr.mxu0 0.0
      %4564 = vmatpush1.msra.mxu0 %v4544
      %4565 = vmatprep.subr.mxu0 0.0
      %4566 = vmatpush1.msra.mxu0 %v4543
      %4567 = vmatprep.subr.mxu0 0.0
      %4568 = vmatpush1.msra.mxu0 %v4542
      %4569 = vmatprep.subr.mxu0 0.0
      %4570 = vmatpush1.msra.mxu0 %v4541
      %4571 = vmatprep.subr.mxu0 0.0
      %4572 = vmatpush1.msra.mxu0 %v4540
      %4573 = vmatprep.subr.mxu0 0.0
      %4574 = vmatpush1.msra.mxu0 %v4539
      %4575 = vmatprep.subr.mxu0 0.0
      %4576 = vmatpush1.msra.mxu0 %v4538
      %4577 = vmatprep.subr.mxu0 0.0
      %4578 = vmatpush1.msra.mxu0 %v4537
      %4579 = vmatprep.subr.mxu0 0.0
      %4580 = vmatpush1.msra.mxu0 %v4536
      %4581 = vmatprep.subr.mxu0 0.0
      %4582 = vmatpush1.msra.mxu0 %v4535
      %4583 = vmatprep.subr.mxu0 0.0
      %4584 = vmatpush2.msra.mxu0 0.0
      %4585 = vmatprep.subr.mxu0 0.0
      %4586 = vmatpush2.msra.mxu0 0.0
      %4587 = vmatprep.subr.mxu0 0.0
      %4588 = vmatpush2.msra.mxu0 0.0
      %4589 = vmatprep.subr.mxu0 0.0
      %4590 = vmatpush2.msra.mxu0 0.0
      %4591 = vmatprep.subr.mxu0 0.0
      %4592 = vmatpush2.msra.mxu0 0.0
      %4593 = vmatprep.subr.mxu0 0.0
      %4594 = vmatpush2.msra.mxu0 0.0
      %4595 = vmatprep.subr.mxu0 0.0
      %4596 = vmatpush2.msra.mxu0 0.0
      %4597 = vmatprep.subr.mxu0 0.0
      %4598 = vmatpush2.msra.mxu0 0.0
      %4599 = vmatprep.subr.mxu0 0.0
      %4600 = vmatpush2.msra.mxu0 0.0
      %4601 = vmatprep.subr.mxu0 0.0
      %4602 = vmatpush2.msra.mxu0 0.0
      %4603 = vmatprep.subr.mxu0 0.0
      %4604 = vmatpush2.msra.mxu0 0.0
      %4605 = vmatprep.subr.mxu0 0.0
      %4606 = vmatpush2.msra.mxu0 0.0
      %4607 = vmatprep.subr.mxu0 0.0
      %4608 = vmatpush2.msra.mxu0 0.0
      %4609 = vmatprep.subr.mxu0 0.0
      %4610 = vmatpush2.msra.mxu0 0.0
      %4611 = vmatprep.subr.mxu0 0.0
      %4612 = vmatpush2.msra.mxu0 0.0
      %4613 = vmatprep.subr.mxu0 0.0
      %4614 = vmatpush2.msra.mxu0 0.0
      %4615 = vmatprep.mubr.f32.mxu0 0.0
      %4616 = vmatmul.mubr.f32.gmra.mxu0 %v4503
      %v4617 = vpop.f32.mrf.mxu0
      %v4618 = vadd.f32 0.0, %v4617
      %v4619 = vpop.f32.mrf.mxu0
      %4620 = vmatprep.mubr.f32.mxu0 0.0
      %4621 = vmatmul.mubr.f32.gmra.mxu0 %v4504
      %v4622 = vpop.f32.mrf.mxu0
      %v4623 = vadd.f32 0.0, %v4622
      %v4624 = vpop.f32.mrf.mxu0
      %4625 = vmatprep.mubr.f32.mxu0 0.0
      %4626 = vmatmul.mubr.f32.gmra.mxu0 %v4505
      %v4627 = vpop.f32.mrf.mxu0
      %v4628 = vadd.f32 0.0, %v4627
      %v4629 = vpop.f32.mrf.mxu0
      %4630 = vmatprep.mubr.f32.mxu0 0.0
      %4631 = vmatmul.mubr.f32.gmra.mxu0 %v4506
      %v4632 = vpop.f32.mrf.mxu0
      %v4633 = vadd.f32 0.0, %v4632
      %v4634 = vpop.f32.mrf.mxu0
      %4635 = vmatprep.mubr.f32.mxu0 0.0
      %4636 = vmatmul.mubr.f32.gmra.mxu0 %v4507
      %v4637 = vpop.f32.mrf.mxu0
      %v4638 = vadd.f32 0.0, %v4637
      %v4639 = vpop.f32.mrf.mxu0
      %4640 = vmatprep.mubr.f32.mxu0 0.0
      %4641 = vmatmul.mubr.f32.gmra.mxu0 %v4508
      %v4642 = vpop.f32.mrf.mxu0
      %v4643 = vadd.f32 0.0, %v4642
      %v4644 = vpop.f32.mrf.mxu0
      %4645 = vmatprep.mubr.f32.mxu0 0.0
      %4646 = vmatmul.mubr.f32.gmra.mxu0 %v4509
      %v4647 = vpop.f32.mrf.mxu0
      %v4648 = vadd.f32 0.0, %v4647
      %v4649 = vpop.f32.mrf.mxu0
      %4650 = vmatprep.mubr.f32.mxu0 0.0
      %4651 = vmatmul.mubr.f32.gmra.mxu0 %v4510
      %v4652 = vpop.f32.mrf.mxu0
      %v4653 = vadd.f32 0.0, %v4652
      %v4654 = vpop.f32.mrf.mxu0
      %4655 = vmatprep.mubr.f32.mxu0 0.0
      %4656 = vmatmul.mubr.f32.gmra.mxu0 %v4511
      %v4657 = vpop.f32.mrf.mxu0
      %v4658 = vadd.f32 0.0, %v4657
      %v4659 = vpop.f32.mrf.mxu0
      %4660 = vmatprep.mubr.f32.mxu0 0.0
      %4661 = vmatmul.mubr.f32.gmra.mxu0 %v4512
      %v4662 = vpop.f32.mrf.mxu0
      %v4663 = vadd.f32 0.0, %v4662
      %v4664 = vpop.f32.mrf.mxu0
      %4665 = vmatprep.mubr.f32.mxu0 0.0
      %4666 = vmatmul.mubr.f32.gmra.mxu0 %v4513
      %v4667 = vpop.f32.mrf.mxu0
      %v4668 = vadd.f32 0.0, %v4667
      %v4669 = vpop.f32.mrf.mxu0
      %4670 = vmatprep.mubr.f32.mxu0 0.0
      %4671 = vmatmul.mubr.f32.gmra.mxu0 %v4514
      %v4672 = vpop.f32.mrf.mxu0
      %v4673 = vadd.f32 0.0, %v4672
      %v4674 = vpop.f32.mrf.mxu0
      %4675 = vmatprep.mubr.f32.mxu0 0.0
      %4676 = vmatmul.mubr.f32.gmra.mxu0 %v4515
      %v4677 = vpop.f32.mrf.mxu0
      %v4678 = vadd.f32 0.0, %v4677
      %v4679 = vpop.f32.mrf.mxu0
      %4680 = vmatprep.mubr.f32.mxu0 0.0
      %4681 = vmatmul.mubr.f32.gmra.mxu0 %v4516
      %v4682 = vpop.f32.mrf.mxu0
      %v4683 = vadd.f32 0.0, %v4682
      %v4684 = vpop.f32.mrf.mxu0
      %4685 = vmatprep.mubr.f32.mxu0 0.0
      %4686 = vmatmul.mubr.f32.gmra.mxu0 %v4517
      %v4687 = vpop.f32.mrf.mxu0
      %v4688 = vadd.f32 0.0, %v4687
      %v4689 = vpop.f32.mrf.mxu0
      %4690 = vmatprep.mubr.f32.mxu0 0.0
      %4691 = vmatmul.mubr.f32.gmra.mxu0 %v4518
      %v4692 = vpop.f32.mrf.mxu0
      %v4693 = vadd.f32 0.0, %v4692
      %v4694 = vpop.f32.mrf.mxu0
      %4695 = vmatprep.mubr.f32.mxu0 0.0
      %4696 = vmatmul.mubr.f32.gmra.mxu0 %v4519
      %v4697 = vpop.f32.mrf.mxu0
      %v4698 = vadd.f32 0.0, %v4697
      %v4699 = vpop.f32.mrf.mxu0
      %4700 = vmatprep.mubr.f32.mxu0 0.0
      %4701 = vmatmul.mubr.f32.gmra.mxu0 %v4520
      %v4702 = vpop.f32.mrf.mxu0
      %v4703 = vadd.f32 0.0, %v4702
      %v4704 = vpop.f32.mrf.mxu0
      %4705 = vmatprep.mubr.f32.mxu0 0.0
      %4706 = vmatmul.mubr.f32.gmra.mxu0 %v4521
      %v4707 = vpop.f32.mrf.mxu0
      %v4708 = vadd.f32 0.0, %v4707
      %v4709 = vpop.f32.mrf.mxu0
      %4710 = vmatprep.mubr.f32.mxu0 0.0
      %4711 = vmatmul.mubr.f32.gmra.mxu0 %v4522
      %v4712 = vpop.f32.mrf.mxu0
      %v4713 = vadd.f32 0.0, %v4712
      %v4714 = vpop.f32.mrf.mxu0
      %4715 = vmatprep.mubr.f32.mxu0 0.0
      %4716 = vmatmul.mubr.f32.gmra.mxu0 %v4523
      %v4717 = vpop.f32.mrf.mxu0
      %v4718 = vadd.f32 0.0, %v4717
      %v4719 = vpop.f32.mrf.mxu0
      %4720 = vmatprep.mubr.f32.mxu0 0.0
      %4721 = vmatmul.mubr.f32.gmra.mxu0 %v4524
      %v4722 = vpop.f32.mrf.mxu0
      %v4723 = vadd.f32 0.0, %v4722
      %v4724 = vpop.f32.mrf.mxu0
      %4725 = vmatprep.mubr.f32.mxu0 0.0
      %4726 = vmatmul.mubr.f32.gmra.mxu0 %v4525
      %v4727 = vpop.f32.mrf.mxu0
      %v4728 = vadd.f32 0.0, %v4727
      %v4729 = vpop.f32.mrf.mxu0
      %4730 = vmatprep.mubr.f32.mxu0 0.0
      %4731 = vmatmul.mubr.f32.gmra.mxu0 %v4526
      %v4732 = vpop.f32.mrf.mxu0
      %v4733 = vadd.f32 0.0, %v4732
      %v4734 = vpop.f32.mrf.mxu0
      %4735 = vmatprep.mubr.f32.mxu0 0.0
      %4736 = vmatmul.mubr.f32.gmra.mxu0 %v4527
      %v4737 = vpop.f32.mrf.mxu0
      %v4738 = vadd.f32 0.0, %v4737
      %v4739 = vpop.f32.mrf.mxu0
      %4740 = vmatprep.mubr.f32.mxu0 0.0
      %4741 = vmatmul.mubr.f32.gmra.mxu0 %v4528
      %v4742 = vpop.f32.mrf.mxu0
      %v4743 = vadd.f32 0.0, %v4742
      %v4744 = vpop.f32.mrf.mxu0
      %4745 = vmatprep.mubr.f32.mxu0 0.0
      %4746 = vmatmul.mubr.f32.gmra.mxu0 %v4529
      %v4747 = vpop.f32.mrf.mxu0
      %v4748 = vadd.f32 0.0, %v4747
      %v4749 = vpop.f32.mrf.mxu0
      %4750 = vmatprep.mubr.f32.mxu0 0.0
      %4751 = vmatmul.mubr.f32.gmra.mxu0 %v4530
      %v4752 = vpop.f32.mrf.mxu0
      %v4753 = vadd.f32 0.0, %v4752
      %v4754 = vpop.f32.mrf.mxu0
      %4755 = vmatprep.mubr.f32.mxu0 0.0
      %4756 = vmatmul.mubr.f32.gmra.mxu0 %v4531
      %v4757 = vpop.f32.mrf.mxu0
      %v4758 = vadd.f32 0.0, %v4757
      %v4759 = vpop.f32.mrf.mxu0
      %4760 = vmatprep.mubr.f32.mxu0 0.0
      %4761 = vmatmul.mubr.f32.gmra.mxu0 %v4532
      %v4762 = vpop.f32.mrf.mxu0
      %v4763 = vadd.f32 0.0, %v4762
      %v4764 = vpop.f32.mrf.mxu0
      %4765 = vmatprep.mubr.f32.mxu0 0.0
      %4766 = vmatmul.mubr.f32.gmra.mxu0 %v4533
      %v4767 = vpop.f32.mrf.mxu0
      %v4768 = vadd.f32 0.0, %v4767
      %v4769 = vpop.f32.mrf.mxu0
      %4770 = vmatprep.mubr.f32.mxu0 0.0
      %4771 = vmatmul.mubr.f32.gmra.mxu0 %v4534
      %v4772 = vpop.f32.mrf.mxu0
      %v4773 = vadd.f32 0.0, %v4772
      %v4774 = vpop.f32.mrf.mxu0
      %4775 = vdwg.mxu0
      %vm4776 = vcmask 130048
      %4777 = vst.msk [vmem:[%s253] sm:$0xff] %vm4776, %v4618
      %4778 = vst.msk [vmem:[%s253 + $0x8] sm:$0xff] %vm4776, %v4623
      %4779 = vst.msk [vmem:[%s253 + $0x10] sm:$0xff] %vm4776, %v4628
      %4780 = vst.msk [vmem:[%s253 + $0x18] sm:$0xff] %vm4776, %v4633
      %4781 = vst.msk [vmem:[%s253 + $0x20] sm:$0xff] %vm4776, %v4638
      %4782 = vst.msk [vmem:[%s253 + $0x28] sm:$0xff] %vm4776, %v4643
      %4783 = vst.msk [vmem:[%s253 + $0x30] sm:$0xff] %vm4776, %v4648
      %4784 = vst.msk [vmem:[%s253 + $0x38] sm:$0xff] %vm4776, %v4653
      %4785 = vst.msk [vmem:[%s253 + $0x40] sm:$0xff] %vm4776, %v4658
      %4786 = vst.msk [vmem:[%s253 + $0x48] sm:$0xff] %vm4776, %v4663
      %4787 = vst.msk [vmem:[%s253 + $0x50] sm:$0xff] %vm4776, %v4668
      %4788 = vst.msk [vmem:[%s253 + $0x58] sm:$0xff] %vm4776, %v4673
      %4789 = vst.msk [vmem:[%s253 + $0x60] sm:$0xff] %vm4776, %v4678
      %4790 = vst.msk [vmem:[%s253 + $0x68] sm:$0xff] %vm4776, %v4683
      %4791 = vst.msk [vmem:[%s253 + $0x70] sm:$0xff] %vm4776, %v4688
      %4792 = vst.msk [vmem:[%s253 + $0x78] sm:$0xff] %vm4776, %v4693
      %4793 = vst.msk [vmem:[%s253 + $0x80] sm:$0xff] %vm4776, %v4698
      %4794 = vst.msk [vmem:[%s253 + $0x88] sm:$0xff] %vm4776, %v4703
      %4795 = vst.msk [vmem:[%s253 + $0x90] sm:$0xff] %vm4776, %v4708
      %4796 = vst.msk [vmem:[%s253 + $0x98] sm:$0xff] %vm4776, %v4713
      %4797 = vst.msk [vmem:[%s253 + $0xa0] sm:$0xff] %vm4776, %v4718
      %4798 = vst.msk [vmem:[%s253 + $0xa8] sm:$0xff] %vm4776, %v4723
      %4799 = vst.msk [vmem:[%s253 + $0xb0] sm:$0xff] %vm4776, %v4728
      %4800 = vst.msk [vmem:[%s253 + $0xb8] sm:$0xff] %vm4776, %v4733
      %4801 = vst.msk [vmem:[%s253 + $0xc0] sm:$0xff] %vm4776, %v4738
      %4802 = vst.msk [vmem:[%s253 + $0xc8] sm:$0xff] %vm4776, %v4743
      %4803 = vst.msk [vmem:[%s253 + $0xd0] sm:$0xff] %vm4776, %v4748
      %4804 = vst.msk [vmem:[%s253 + $0xd8] sm:$0xff] %vm4776, %v4753
      %4805 = vst.msk [vmem:[%s253 + $0xe0] sm:$0xff] %vm4776, %v4758
      %4806 = vst.msk [vmem:[%s253 + $0xe8] sm:$0xff] %vm4776, %v4763
      %4807 = vst.msk [vmem:[%s253 + $0xf0] sm:$0xff] %vm4776, %v4768
      %4808 = vst.msk [vmem:[%s253 + $0xf8] sm:$0xff] %vm4776, %v4773
      %s4809 = smul.u32 32, %s17
      %p4810 = scmp.lt.s32.totalorder %s4809, 63
      %s4811 = scalar_select %p4810, %s4809, 63
      %s4812 = smul.addr %s4811, 8
      %s4813 = scalar_lea.vmem %s6, %s4812
      // Predicated region
      $region45: #{tpu_custom_call.1} parent=43 // pred_check
        %p4814 = pneg %p166
      $region46: #{tpu_custom_call.1} parent=43 // pred_check_branch
        %4816 = sbr.rel (%p4814) target = $region48
      $region47: #{tpu_custom_call.1} parent=43 // pred_region
        %s4817 = smul.u32 32, %s17
      $region48: #{tpu_custom_call.1} parent=43 // pred_fallthru
        _
    $region44: #{tpu_custom_call.1} parent=5 // pred_fallthru
      _
    %p4818 = scmp.le.s32.totalorder 2, %s12
    // Predicated region
    $region49: #{tpu_custom_call.1} parent=5 // pred_check
      %p4819 = pneg %p4818
    $region50: #{tpu_custom_call.1} parent=5 // pred_check_branch
      %4821 = sbr.rel (%p4819) target = $region52
    $region51: #{tpu_custom_call.1} parent=5 // pred_region
      %s4822 = ssub.s32 %s12, 2
      // Predicated region
      $region53: #{tpu_custom_call.1} parent=51 // pred_check
        %p4823 = pneg %p172
      $region54: #{tpu_custom_call.1} parent=51 // pred_check_branch
        %4825 = sbr.rel (%p4823) target = $region56
      $region55: #{tpu_custom_call.1} parent=51 // pred_region
        %s4826 = smul.u32 32, %s18
        %p4827 = scmp.lt.s32.totalorder %s4826, 63
        %s4828 = scalar_select %p4827, %s4826, 63
        %s4829 = smul.addr %s4828, 8
        %s4830 = scalar_lea.vmem %s6, %s4829
      $region56: #{tpu_custom_call.1} parent=51 // pred_fallthru
        _
    $region52: #{tpu_custom_call.1} parent=5 // pred_fallthru
      _
  $region6: #{tpu_custom_call.1} parent=0 // loop_footer
    %s16 = sadd.s32 1, %s12
  $region7: #{tpu_custom_call.1} parent=0 // loop_footer_branch
    %11 = sbr.rel target = $region3
  $region8: #{tpu_custom_call.1} parent=0 // loop_exit
    _

</llo_original>
